<compile_context>
chip_gen: v5e
topology: v5e:2x2
jax: 0.10.0
libtpu: 0.0.40
codegen_flags: <defaults>
</compile_context>

<pallas_src>
import functools

import jax
import jax.numpy as jnp
from jax import lax
from jax.experimental import pallas as pl
from jax.experimental.pallas import tpu as pltpu

BN_EPS = 1e-5


def _round_up(x, m):
    return (x + m - 1) // m * m


# ---------------------------------------------------------------------------
# Fused (prev-layer BN+ReLU) -> conv(3x3x3, pad=1) -> BN partial-stats kernel
# ---------------------------------------------------------------------------
def _make_conv_kernel(D, Cin, Cout, Wp, Qv_pad, apply_relu):
    Dp = D + 2                    # zero-padded depth extent handled in-kernel
    pad_side = Wp + 1             # canonical offset of the valid strip
    Q_pad = Qv_pad + 2 * pad_side # in-VMEM canonical plane width
    offs = [b * Wp + c for b in range(3) for c in range(3)]   # 9 H/W shifts

    def kernel(x_ref, mv_ref, w_ref, mask_ref, y_ref, s_ref):
        mask = mask_ref[...]                  # (1, Qv_pad) valid-position mask
        mu = mv_ref[:, 0:1]                   # (Cin, 1) input batch mean
        rs = mv_ref[:, 1:2]                   # (Cin, 1) input batch rstd
        zpad = jnp.zeros((Cin, pad_side), jnp.bfloat16)

        def taps(p):
            # Canonical zero-padded plane p (previous layer's BN + ReLU fused
            # into the load), expanded once into the 9 shifted windows stacked
            # along the contraction (sublane) axis: one (9*Cin, Qv_pad) bf16
            # MXU operand per input plane.
            if p == 0 or p == Dp - 1:
                plane = jnp.zeros((Cin, Q_pad), jnp.bfloat16)
            else:
                y = x_ref[p - 1].astype(jnp.float32)          # (Cin, Qv_pad)
                y = (y - mu) * rs
                if apply_relu:
                    y = jnp.maximum(y, 0.0)
                y = (y * mask).astype(jnp.bfloat16)           # zero pad cols
                plane = jnp.concatenate([zpad, y, zpad], axis=1)
            return jnp.concatenate([plane[:, o:o + Qv_pad] for o in offs],
                                   axis=0)

        ssum = jnp.zeros((Cout, 1), jnp.float32)
        ssq = jnp.zeros((Cout, 1), jnp.float32)

        # Rolling 3-plane window over depth: each expanded plane is built once
        # and reused by the (up to) 3 output planes that consume it.
        t_a = taps(0)
        t_b = taps(1)
        for d in range(D):
            t_c = taps(d + 2)
            acc = jnp.dot(w_ref[0], t_a, preferred_element_type=jnp.float32)
            acc += jnp.dot(w_ref[1], t_b, preferred_element_type=jnp.float32)
            acc += jnp.dot(w_ref[2], t_c, preferred_element_type=jnp.float32)
            masked = acc * mask                               # drop pad cols
            ssum += jnp.sum(masked, axis=1, keepdims=True)
            ssq += jnp.sum(masked * acc, axis=1, keepdims=True)
            y_ref[d] = acc.astype(y_ref.dtype)                # bf16 strip
            t_a, t_b = t_b, t_c

        s_ref[...] = jnp.concatenate([ssum, ssq], axis=1)     # once per n

    return kernel


def _conv_bn_layer(strips, mv, w_dhwio, mask, *, Wp, n_valid, apply_relu):
    """strips: (N, D, Cin, Qv_pad) bf16 valid-strip activation of the previous
    layer (or the input).  mv: (Cin, 2) [mean, rstd] of that activation
    (identity for the raw input).  Returns (y_strips bf16, mv_next)."""
    N, D, Cin, Qv_pad = strips.shape
    kd, kh, kw, cin_w, Cout = w_dhwio.shape
    if (kd, kh, kw) != (3, 3, 3) or cin_w != Cin:
        raise NotImplementedError("specialised to 3x3x3 convolutions")

    # taps folded into the contraction dim: (3, Cout, 9*Cin), bf16 on the MXU
    w3 = jnp.transpose(w_dhwio, (0, 4, 1, 2, 3)).reshape(3, Cout, 9 * Cin)
    w3 = w3.astype(jnp.bfloat16)

    kernel = _make_conv_kernel(D, Cin, Cout, Wp, Qv_pad, apply_relu)
    y, s = pl.pallas_call(
        kernel,
        out_shape=(jax.ShapeDtypeStruct((N, D, Cout, Qv_pad), jnp.bfloat16),
                   jax.ShapeDtypeStruct((N, Cout, 2), jnp.float32)),
        grid=(N,),
        in_specs=[pl.BlockSpec((None, D, Cin, Qv_pad), lambda n: (n, 0, 0, 0)),
                  pl.BlockSpec((Cin, 2), lambda n: (0, 0)),
                  pl.BlockSpec((3, Cout, 9 * Cin), lambda n: (0, 0, 0)),
                  pl.BlockSpec((1, Qv_pad), lambda n: (0, 0))],
        out_specs=(pl.BlockSpec((None, D, Cout, Qv_pad),
                                lambda n: (n, 0, 0, 0)),
                   pl.BlockSpec((None, Cout, 2), lambda n: (n, 0, 0))),
        compiler_params=pltpu.CompilerParams(
            dimension_semantics=("parallel",)),
    )(strips, mv, w3, mask)

    # tiny JAX reduction of per-sample partials -> per-channel mean / rstd
    # TODO(synk): E[x^2]-mean^2 in f32 can cancel at very large batch sizes;
    # use a Welford-style combine for production scales.
    count = N * D * n_valid
    tot = jnp.sum(s, axis=0)                     # (Cout, 2)
    mean = tot[:, 0] / count
    var = tot[:, 1] / count - mean * mean        # biased var (training BN)
    rstd = lax.rsqrt(var + BN_EPS)
    mv_next = jnp.stack([mean, rstd], axis=1).astype(jnp.float32)
    return y, mv_next


# ---------------------------------------------------------------------------
# Double conv wrapper
# ---------------------------------------------------------------------------
def unit_cell_double_conv(x, params, padding, cell_vectors=None, transforms=None):
    """x: (N, D, H, W, Cin) f32 -> (N, D, H, W, Cout) f32."""
    if padding != 1:
        # TODO(synk): support general conv padding / kernel sizes; the module
        # as built uses 3x3x3 convolutions with padding=1.
        raise NotImplementedError("specialised to kernel=3, padding=1")
    N, D, H, W, Cin = x.shape
    Hp, Wp = H + 2, W + 2
    Q_log = Hp * Wp                      # logical padded-plane size
    Qv = Q_log - 2 * Wp - 2              # contiguous valid strip length
    Qv_pad = _round_up(Qv, 128)          # lane-dense strip width

    # channels-first, zero-padded in H/W, flattened valid strip, bf16
    a = jnp.transpose(x, (0, 1, 4, 2, 3))                      # (N,D,Cin,H,W)
    a = jnp.pad(a, ((0, 0), (0, 0), (0, 0), (1, 1), (1, 1)))
    a = a.reshape(N, D, Cin, Q_log)[..., Wp + 1:Wp + 1 + Qv]
    a = jnp.pad(a, ((0, 0), (0, 0), (0, 0), (0, Qv_pad - Qv)))
    a = a.astype(jnp.bfloat16)

    # valid-position mask over the lane-padded strip (zeros on W-pad columns
    # and on the lane-padding tail)
    q = jnp.arange(Qv_pad, dtype=jnp.int32)
    col = (q + Wp + 1) % Wp
    mask = ((q < Qv) & (col >= 1) & (col <= Wp - 2))
    mask = mask.astype(jnp.float32)[None, :]

    c_out = params['w2'].shape[-1]
    n_valid = H * W

    # layer-1 input is the raw activation: identity "BN" (mean 0, rstd 1)
    mv0 = jnp.stack([jnp.zeros((Cin,), jnp.float32),
                     jnp.ones((Cin,), jnp.float32)], axis=1)

    # conv biases are omitted on purpose: BatchNorm(affine=False, training)
    # subtracts the batch mean, which cancels a per-channel bias exactly.
    y1, mv1 = _conv_bn_layer(a, mv0, params['w1'], mask, Wp=Wp,
                             n_valid=n_valid, apply_relu=False)
    y2, mv2 = _conv_bn_layer(y1, mv1, params['w2'], mask, Wp=Wp,
                             n_valid=n_valid, apply_relu=True)

    # final BN + ReLU + strip -> NDHWC extraction (cheap elementwise epilogue;
    # the garbage W-pad columns / lane tail are dropped by the slices below)
    mean2 = mv2[:, 0][None, None, :, None]
    rstd2 = mv2[:, 1][None, None, :, None]
    y = y2[..., :Qv].astype(jnp.float32)
    y = jnp.maximum((y - mean2) * rstd2, 0.0)
    y = jnp.pad(y, ((0, 0), (0, 0), (0, 0), (Wp + 1, Wp + 1)))
    y = y.reshape(N, D, c_out, Hp, Wp)[:, :, :, 1:1 + H, 1:1 + W]
    return jnp.transpose(y, (0, 1, 3, 4, 2))                   # (N,D,H,W,Cout)


# ---------------------------------------------------------------------------
# pure-JAX f32 reference (includes the bias, to show it is a no-op under BN)
# ---------------------------------------------------------------------------
def _reference(x, params, padding):
    def conv(x, w, b):
        y = lax.conv_general_dilated(
            x, w, window_strides=(1, 1, 1),
            padding=[(padding, padding)] * 3,
            dimension_numbers=('NDHWC', 'DHWIO', 'NDHWC'))
        return y + b

    def bnr(y):
        mean = jnp.mean(y, axis=(0, 1, 2, 3), keepdims=True)
        var = jnp.mean(jnp.square(y - mean), axis=(0, 1, 2, 3), keepdims=True)
        return jnp.maximum((y - mean) * lax.rsqrt(var + BN_EPS), 0.0)

    y = bnr(conv(x, params['w1'], params['b1']))
    y = bnr(conv(y, params['w2'], params['b2']))
    return y


# ---------------------------------------------------------------------------
# demo
# ---------------------------------------------------------------------------
if __name__ == "__main__":
    key = jax.random.PRNGKey(0)
    k1, k2, k3, k4, k5 = jax.random.split(key, 5)

    N, D, H, W = 2, 8, 8, 8
    c_in, c_mid, c_out = 4, 8, 8
    padding = 1

    # PyTorch-layout input (NCDHW), transposed to NDHWC at the boundary.
    x_ncdhw = jax.random.normal(k1, (N, c_in, D, H, W), jnp.float32)
    x = jnp.transpose(x_ncdhw, (0, 2, 3, 4, 1))

    params = {
        'w1': 0.1 * jax.random.normal(k2, (3, 3, 3, c_in, c_mid), jnp.float32),
        'b1': 0.1 * jax.random.normal(k3, (c_mid,), jnp.float32),
        'w2': 0.1 * jax.random.normal(k4, (3, 3, 3, c_mid, c_out), jnp.float32),
        'b2': 0.1 * jax.random.normal(k5, (c_out,), jnp.float32),
    }

    # Unused by this configuration (pad=0, symmetrize=False); kept for parity.
    cell_vectors = jnp.eye(3, dtype=jnp.float32)
    transforms = jnp.eye(4, dtype=jnp.float32)[None]

    fwd = jax.jit(functools.partial(unit_cell_double_conv, padding=padding,
                                    cell_vectors=cell_vectors,
                                    transforms=transforms))
    out = jax.block_until_ready(fwd(x, params))
    ref = _reference(x, params, padding)

    assert out.shape == (N, D, H, W, c_out)
    max_err = float(jnp.max(jnp.abs(out - ref)))
    # bf16 MXU inputs + bf16 inter-layer activation -> tolerance loosened.
    assert jnp.allclose(out, ref, atol=5e-2, rtol=5e-2), f"max|diff|={max_err}"
    print("KERNEL_OK")
</pallas_src>

<mosaic_0001>
module attributes {stable_mosaic.version = 11 : i64} {
  func.func @kernel(%arg0: i32, %arg1: memref<1x8x4x128xbf16, #tpu.memory_space<vmem>>, %arg2: memref<4x2xf32, #tpu.memory_space<vmem>>, %arg3: memref<3x8x36xbf16, #tpu.memory_space<vmem>>, %arg4: memref<1x128xf32, #tpu.memory_space<vmem>>, %arg5: memref<1x8x8x128xbf16, #tpu.memory_space<vmem>>, %arg6: memref<1x8x2xf32, #tpu.memory_space<vmem>>) attributes {dimension_semantics = [#tpu.dimension_semantics<parallel>], iteration_bounds = array<i64: 2>, scalar_prefetch = 0 : i64, scratch_operands = 0 : i64, tpu.core_type = #tpu.core_type<tc>, window_params = [{transform_indices = @transform_0, window_bounds = array<i64: 1, 8, 4, 128>}, {pipeline_mode = #tpu.pipeline_mode<synchronous>, transform_indices = @transform_1, window_bounds = array<i64: 4, 2>}, {pipeline_mode = #tpu.pipeline_mode<synchronous>, transform_indices = @transform_2, window_bounds = array<i64: 3, 8, 36>}, {pipeline_mode = #tpu.pipeline_mode<synchronous>, transform_indices = @transform_3, window_bounds = array<i64: 1, 128>}, {transform_indices = @transform_4, window_bounds = array<i64: 1, 8, 8, 128>}, {transform_indices = @transform_5, window_bounds = array<i64: 1, 8, 2>}]} {
    %c0 = arith.constant 0 : index
    %c0_0 = arith.constant 0 : index
    %0 = vector.load %arg4[%c0, %c0_0] : memref<1x128xf32, #tpu.memory_space<vmem>>, vector<1x128xf32>
    %c0_1 = arith.constant 0 : index
    %c0_2 = arith.constant 0 : index
    %1 = vector.load %arg2[%c0_1, %c0_2] : memref<4x2xf32, #tpu.memory_space<vmem>>, vector<4x1xf32>
    %c0_3 = arith.constant 0 : index
    %c1 = arith.constant 1 : index
    %2 = vector.load %arg2[%c0_3, %c1] : memref<4x2xf32, #tpu.memory_space<vmem>>, vector<4x1xf32>
    %cst = arith.constant 0.000000e+00 : bf16
    %3 = vector.broadcast %cst : bf16 to vector<4x11xbf16>
    %cst_4 = arith.constant 0.000000e+00 : f32
    %4 = vector.broadcast %cst_4 : f32 to vector<8x1xf32>
    %cst_5 = arith.constant 0.000000e+00 : f32
    %5 = vector.broadcast %cst_5 : f32 to vector<8x1xf32>
    %cst_6 = arith.constant 0.000000e+00 : bf16
    %6 = vector.broadcast %cst_6 : bf16 to vector<4x150xbf16>
    %7 = vector.extract_strided_slice %6 {offsets = [0, 0], sizes = [4, 128], strides = [1, 1]} : vector<4x150xbf16> to vector<4x128xbf16>
    %8 = vector.extract_strided_slice %6 {offsets = [0, 1], sizes = [4, 128], strides = [1, 1]} : vector<4x150xbf16> to vector<4x128xbf16>
    %9 = vector.extract_strided_slice %6 {offsets = [0, 2], sizes = [4, 128], strides = [1, 1]} : vector<4x150xbf16> to vector<4x128xbf16>
    %10 = vector.extract_strided_slice %6 {offsets = [0, 10], sizes = [4, 128], strides = [1, 1]} : vector<4x150xbf16> to vector<4x128xbf16>
    %11 = vector.extract_strided_slice %6 {offsets = [0, 11], sizes = [4, 128], strides = [1, 1]} : vector<4x150xbf16> to vector<4x128xbf16>
    %12 = vector.extract_strided_slice %6 {offsets = [0, 12], sizes = [4, 128], strides = [1, 1]} : vector<4x150xbf16> to vector<4x128xbf16>
    %13 = vector.extract_strided_slice %6 {offsets = [0, 20], sizes = [4, 128], strides = [1, 1]} : vector<4x150xbf16> to vector<4x128xbf16>
    %14 = vector.extract_strided_slice %6 {offsets = [0, 21], sizes = [4, 128], strides = [1, 1]} : vector<4x150xbf16> to vector<4x128xbf16>
    %15 = vector.extract_strided_slice %6 {offsets = [0, 22], sizes = [4, 128], strides = [1, 1]} : vector<4x150xbf16> to vector<4x128xbf16>
    %16 = tpu.concatenate %7, %8, %9, %10, %11, %12, %13, %14, %15 in 0 : vector<4x128xbf16>, vector<4x128xbf16>, vector<4x128xbf16>, vector<4x128xbf16>, vector<4x128xbf16>, vector<4x128xbf16>, vector<4x128xbf16>, vector<4x128xbf16>, vector<4x128xbf16> -> vector<36x128xbf16>
    %c0_7 = arith.constant 0 : index
    %c0_8 = arith.constant 0 : index
    %c0_9 = arith.constant 0 : index
    %c0_10 = arith.constant 0 : index
    %17 = vector.load %arg1[%c0_7, %c0_8, %c0_9, %c0_10] : memref<1x8x4x128xbf16, #tpu.memory_space<vmem>>, vector<1x1x4x128xbf16>
    %18 = vector.shape_cast %17 : vector<1x1x4x128xbf16> to vector<4x128xbf16>
    %19 = arith.extf %18 : vector<4x128xbf16> to vector<4x128xf32>
    %20 = vector.broadcast %1 : vector<4x1xf32> to vector<4x128xf32>
    %21 = arith.subf %19, %20 : vector<4x128xf32>
    %22 = vector.broadcast %2 : vector<4x1xf32> to vector<4x128xf32>
    %23 = arith.mulf %21, %22 : vector<4x128xf32>
    %24 = vector.broadcast %0 : vector<1x128xf32> to vector<4x128xf32>
    %25 = arith.mulf %23, %24 : vector<4x128xf32>
    %26 = arith.truncf %25 : vector<4x128xf32> to vector<4x128xbf16>
    %27 = tpu.concatenate %3, %26, %3 in 1 : vector<4x11xbf16>, vector<4x128xbf16>, vector<4x11xbf16> -> vector<4x150xbf16>
    %28 = vector.extract_strided_slice %27 {offsets = [0, 0], sizes = [4, 128], strides = [1, 1]} : vector<4x150xbf16> to vector<4x128xbf16>
    %29 = vector.extract_strided_slice %27 {offsets = [0, 1], sizes = [4, 128], strides = [1, 1]} : vector<4x150xbf16> to vector<4x128xbf16>
    %30 = vector.extract_strided_slice %27 {offsets = [0, 2], sizes = [4, 128], strides = [1, 1]} : vector<4x150xbf16> to vector<4x128xbf16>
    %31 = vector.extract_strided_slice %27 {offsets = [0, 10], sizes = [4, 128], strides = [1, 1]} : vector<4x150xbf16> to vector<4x128xbf16>
    %32 = vector.extract_strided_slice %27 {offsets = [0, 11], sizes = [4, 128], strides = [1, 1]} : vector<4x150xbf16> to vector<4x128xbf16>
    %33 = vector.extract_strided_slice %27 {offsets = [0, 12], sizes = [4, 128], strides = [1, 1]} : vector<4x150xbf16> to vector<4x128xbf16>
    %34 = vector.extract_strided_slice %27 {offsets = [0, 20], sizes = [4, 128], strides = [1, 1]} : vector<4x150xbf16> to vector<4x128xbf16>
    %35 = vector.extract_strided_slice %27 {offsets = [0, 21], sizes = [4, 128], strides = [1, 1]} : vector<4x150xbf16> to vector<4x128xbf16>
    %36 = vector.extract_strided_slice %27 {offsets = [0, 22], sizes = [4, 128], strides = [1, 1]} : vector<4x150xbf16> to vector<4x128xbf16>
    %37 = tpu.concatenate %28, %29, %30, %31, %32, %33, %34, %35, %36 in 0 : vector<4x128xbf16>, vector<4x128xbf16>, vector<4x128xbf16>, vector<4x128xbf16>, vector<4x128xbf16>, vector<4x128xbf16>, vector<4x128xbf16>, vector<4x128xbf16>, vector<4x128xbf16> -> vector<36x128xbf16>
    %c0_11 = arith.constant 0 : index
    %c1_12 = arith.constant 1 : index
    %c0_13 = arith.constant 0 : index
    %c0_14 = arith.constant 0 : index
    %38 = vector.load %arg1[%c0_11, %c1_12, %c0_13, %c0_14] : memref<1x8x4x128xbf16, #tpu.memory_space<vmem>>, vector<1x1x4x128xbf16>
    %39 = vector.shape_cast %38 : vector<1x1x4x128xbf16> to vector<4x128xbf16>
    %40 = arith.extf %39 : vector<4x128xbf16> to vector<4x128xf32>
    %41 = vector.broadcast %1 : vector<4x1xf32> to vector<4x128xf32>
    %42 = arith.subf %40, %41 : vector<4x128xf32>
    %43 = vector.broadcast %2 : vector<4x1xf32> to vector<4x128xf32>
    %44 = arith.mulf %42, %43 : vector<4x128xf32>
    %45 = vector.broadcast %0 : vector<1x128xf32> to vector<4x128xf32>
    %46 = arith.mulf %44, %45 : vector<4x128xf32>
    %47 = arith.truncf %46 : vector<4x128xf32> to vector<4x128xbf16>
    %48 = tpu.concatenate %3, %47, %3 in 1 : vector<4x11xbf16>, vector<4x128xbf16>, vector<4x11xbf16> -> vector<4x150xbf16>
    %49 = vector.extract_strided_slice %48 {offsets = [0, 0], sizes = [4, 128], strides = [1, 1]} : vector<4x150xbf16> to vector<4x128xbf16>
    %50 = vector.extract_strided_slice %48 {offsets = [0, 1], sizes = [4, 128], strides = [1, 1]} : vector<4x150xbf16> to vector<4x128xbf16>
    %51 = vector.extract_strided_slice %48 {offsets = [0, 2], sizes = [4, 128], strides = [1, 1]} : vector<4x150xbf16> to vector<4x128xbf16>
    %52 = vector.extract_strided_slice %48 {offsets = [0, 10], sizes = [4, 128], strides = [1, 1]} : vector<4x150xbf16> to vector<4x128xbf16>
    %53 = vector.extract_strided_slice %48 {offsets = [0, 11], sizes = [4, 128], strides = [1, 1]} : vector<4x150xbf16> to vector<4x128xbf16>
    %54 = vector.extract_strided_slice %48 {offsets = [0, 12], sizes = [4, 128], strides = [1, 1]} : vector<4x150xbf16> to vector<4x128xbf16>
    %55 = vector.extract_strided_slice %48 {offsets = [0, 20], sizes = [4, 128], strides = [1, 1]} : vector<4x150xbf16> to vector<4x128xbf16>
    %56 = vector.extract_strided_slice %48 {offsets = [0, 21], sizes = [4, 128], strides = [1, 1]} : vector<4x150xbf16> to vector<4x128xbf16>
    %57 = vector.extract_strided_slice %48 {offsets = [0, 22], sizes = [4, 128], strides = [1, 1]} : vector<4x150xbf16> to vector<4x128xbf16>
    %58 = tpu.concatenate %49, %50, %51, %52, %53, %54, %55, %56, %57 in 0 : vector<4x128xbf16>, vector<4x128xbf16>, vector<4x128xbf16>, vector<4x128xbf16>, vector<4x128xbf16>, vector<4x128xbf16>, vector<4x128xbf16>, vector<4x128xbf16>, vector<4x128xbf16> -> vector<36x128xbf16>
    %c0_15 = arith.constant 0 : index
    %c0_16 = arith.constant 0 : index
    %c0_17 = arith.constant 0 : index
    %59 = vector.load %arg3[%c0_15, %c0_16, %c0_17] : memref<3x8x36xbf16, #tpu.memory_space<vmem>>, vector<1x8x36xbf16>
    %60 = vector.shape_cast %59 : vector<1x8x36xbf16> to vector<8x36xbf16>
    %cst_18 = arith.constant dense<0.000000e+00> : vector<8x128xf32>
    %61 = tpu.matmul %60, %16, %cst_18 {dimension_numbers = #tpu.dot_dimension_numbers<[1], [0], [0], [1], [0, 0, 1, 1], [], []>} : vector<8x36xbf16>, vector<36x128xbf16>, vector<8x128xf32> -> vector<8x128xf32>
    %c1_19 = arith.constant 1 : index
    %c0_20 = arith.constant 0 : index
    %c0_21 = arith.constant 0 : index
    %62 = vector.load %arg3[%c1_19, %c0_20, %c0_21] : memref<3x8x36xbf16, #tpu.memory_space<vmem>>, vector<1x8x36xbf16>
    %63 = vector.shape_cast %62 : vector<1x8x36xbf16> to vector<8x36xbf16>
    %cst_22 = arith.constant dense<0.000000e+00> : vector<8x128xf32>
    %64 = tpu.matmul %63, %37, %cst_22 {dimension_numbers = #tpu.dot_dimension_numbers<[1], [0], [0], [1], [0, 0, 1, 1], [], []>} : vector<8x36xbf16>, vector<36x128xbf16>, vector<8x128xf32> -> vector<8x128xf32>
    %65 = arith.addf %61, %64 : vector<8x128xf32>
    %c2 = arith.constant 2 : index
    %c0_23 = arith.constant 0 : index
    %c0_24 = arith.constant 0 : index
    %66 = vector.load %arg3[%c2, %c0_23, %c0_24] : memref<3x8x36xbf16, #tpu.memory_space<vmem>>, vector<1x8x36xbf16>
    %67 = vector.shape_cast %66 : vector<1x8x36xbf16> to vector<8x36xbf16>
    %cst_25 = arith.constant dense<0.000000e+00> : vector<8x128xf32>
    %68 = tpu.matmul %67, %58, %cst_25 {dimension_numbers = #tpu.dot_dimension_numbers<[1], [0], [0], [1], [0, 0, 1, 1], [], []>} : vector<8x36xbf16>, vector<36x128xbf16>, vector<8x128xf32> -> vector<8x128xf32>
    %69 = arith.addf %65, %68 : vector<8x128xf32>
    %70 = vector.broadcast %0 : vector<1x128xf32> to vector<8x128xf32>
    %71 = arith.mulf %69, %70 : vector<8x128xf32>
    %cst_26 = arith.constant dense<0.000000e+00> : vector<8xf32>
    %72 = vector.multi_reduction <add>, %71, %cst_26 [1] : vector<8x128xf32> to vector<8xf32>
    %73 = vector.shape_cast %72 : vector<8xf32> to vector<8x1xf32>
    %74 = arith.addf %4, %73 : vector<8x1xf32>
    %75 = arith.mulf %71, %69 : vector<8x128xf32>
    %cst_27 = arith.constant dense<0.000000e+00> : vector<8xf32>
    %76 = vector.multi_reduction <add>, %75, %cst_27 [1] : vector<8x128xf32> to vector<8xf32>
    %77 = vector.shape_cast %76 : vector<8xf32> to vector<8x1xf32>
    %78 = arith.addf %5, %77 : vector<8x1xf32>
    %79 = arith.truncf %69 : vector<8x128xf32> to vector<8x128xbf16>
    %c0_28 = arith.constant 0 : index
    %c0_29 = arith.constant 0 : index
    %c0_30 = arith.constant 0 : index
    %c0_31 = arith.constant 0 : index
    %80 = vector.load %arg5[%c0_28, %c0_29, %c0_30, %c0_31] : memref<1x8x8x128xbf16, #tpu.memory_space<vmem>>, vector<1x1x8x128xbf16>
    %81 = vector.shape_cast %80 : vector<1x1x8x128xbf16> to vector<8x128xbf16>
    %82 = vector.shape_cast %79 : vector<8x128xbf16> to vector<1x1x8x128xbf16>
    tpu.vector_store %arg5[%c0_28, %c0_29, %c0_30, %c0_31], %82 {strides = array<i32>} : memref<1x8x8x128xbf16, #tpu.memory_space<vmem>>, vector<1x1x8x128xbf16>,
    %c0_32 = arith.constant 0 : index
    %c2_33 = arith.constant 2 : index
    %c0_34 = arith.constant 0 : index
    %c0_35 = arith.constant 0 : index
    %83 = vector.load %arg1[%c0_32, %c2_33, %c0_34, %c0_35] : memref<1x8x4x128xbf16, #tpu.memory_space<vmem>>, vector<1x1x4x128xbf16>
    %84 = vector.shape_cast %83 : vector<1x1x4x128xbf16> to vector<4x128xbf16>
    %85 = arith.extf %84 : vector<4x128xbf16> to vector<4x128xf32>
    %86 = vector.broadcast %1 : vector<4x1xf32> to vector<4x128xf32>
    %87 = arith.subf %85, %86 : vector<4x128xf32>
    %88 = vector.broadcast %2 : vector<4x1xf32> to vector<4x128xf32>
    %89 = arith.mulf %87, %88 : vector<4x128xf32>
    %90 = vector.broadcast %0 : vector<1x128xf32> to vector<4x128xf32>
    %91 = arith.mulf %89, %90 : vector<4x128xf32>
    %92 = arith.truncf %91 : vector<4x128xf32> to vector<4x128xbf16>
    %93 = tpu.concatenate %3, %92, %3 in 1 : vector<4x11xbf16>, vector<4x128xbf16>, vector<4x11xbf16> -> vector<4x150xbf16>
    %94 = vector.extract_strided_slice %93 {offsets = [0, 0], sizes = [4, 128], strides = [1, 1]} : vector<4x150xbf16> to vector<4x128xbf16>
    %95 = vector.extract_strided_slice %93 {offsets = [0, 1], sizes = [4, 128], strides = [1, 1]} : vector<4x150xbf16> to vector<4x128xbf16>
    %96 = vector.extract_strided_slice %93 {offsets = [0, 2], sizes = [4, 128], strides = [1, 1]} : vector<4x150xbf16> to vector<4x128xbf16>
    %97 = vector.extract_strided_slice %93 {offsets = [0, 10], sizes = [4, 128], strides = [1, 1]} : vector<4x150xbf16> to vector<4x128xbf16>
    %98 = vector.extract_strided_slice %93 {offsets = [0, 11], sizes = [4, 128], strides = [1, 1]} : vector<4x150xbf16> to vector<4x128xbf16>
    %99 = vector.extract_strided_slice %93 {offsets = [0, 12], sizes = [4, 128], strides = [1, 1]} : vector<4x150xbf16> to vector<4x128xbf16>
    %100 = vector.extract_strided_slice %93 {offsets = [0, 20], sizes = [4, 128], strides = [1, 1]} : vector<4x150xbf16> to vector<4x128xbf16>
    %101 = vector.extract_strided_slice %93 {offsets = [0, 21], sizes = [4, 128], strides = [1, 1]} : vector<4x150xbf16> to vector<4x128xbf16>
    %102 = vector.extract_strided_slice %93 {offsets = [0, 22], sizes = [4, 128], strides = [1, 1]} : vector<4x150xbf16> to vector<4x128xbf16>
    %103 = tpu.concatenate %94, %95, %96, %97, %98, %99, %100, %101, %102 in 0 : vector<4x128xbf16>, vector<4x128xbf16>, vector<4x128xbf16>, vector<4x128xbf16>, vector<4x128xbf16>, vector<4x128xbf16>, vector<4x128xbf16>, vector<4x128xbf16>, vector<4x128xbf16> -> vector<36x128xbf16>
    %c0_36 = arith.constant 0 : index
    %c0_37 = arith.constant 0 : index
    %c0_38 = arith.constant 0 : index
    %104 = vector.load %arg3[%c0_36, %c0_37, %c0_38] : memref<3x8x36xbf16, #tpu.memory_space<vmem>>, vector<1x8x36xbf16>
    %105 = vector.shape_cast %104 : vector<1x8x36xbf16> to vector<8x36xbf16>
    %cst_39 = arith.constant dense<0.000000e+00> : vector<8x128xf32>
    %106 = tpu.matmul %105, %37, %cst_39 {dimension_numbers = #tpu.dot_dimension_numbers<[1], [0], [0], [1], [0, 0, 1, 1], [], []>} : vector<8x36xbf16>, vector<36x128xbf16>, vector<8x128xf32> -> vector<8x128xf32>
    %c1_40 = arith.constant 1 : index
    %c0_41 = arith.constant 0 : index
    %c0_42 = arith.constant 0 : index
    %107 = vector.load %arg3[%c1_40, %c0_41, %c0_42] : memref<3x8x36xbf16, #tpu.memory_space<vmem>>, vector<1x8x36xbf16>
    %108 = vector.shape_cast %107 : vector<1x8x36xbf16> to vector<8x36xbf16>
    %cst_43 = arith.constant dense<0.000000e+00> : vector<8x128xf32>
    %109 = tpu.matmul %108, %58, %cst_43 {dimension_numbers = #tpu.dot_dimension_numbers<[1], [0], [0], [1], [0, 0, 1, 1], [], []>} : vector<8x36xbf16>, vector<36x128xbf16>, vector<8x128xf32> -> vector<8x128xf32>
    %110 = arith.addf %106, %109 : vector<8x128xf32>
    %c2_44 = arith.constant 2 : index
    %c0_45 = arith.constant 0 : index
    %c0_46 = arith.constant 0 : index
    %111 = vector.load %arg3[%c2_44, %c0_45, %c0_46] : memref<3x8x36xbf16, #tpu.memory_space<vmem>>, vector<1x8x36xbf16>
    %112 = vector.shape_cast %111 : vector<1x8x36xbf16> to vector<8x36xbf16>
    %cst_47 = arith.constant dense<0.000000e+00> : vector<8x128xf32>
    %113 = tpu.matmul %112, %103, %cst_47 {dimension_numbers = #tpu.dot_dimension_numbers<[1], [0], [0], [1], [0, 0, 1, 1], [], []>} : vector<8x36xbf16>, vector<36x128xbf16>, vector<8x128xf32> -> vector<8x128xf32>
    %114 = arith.addf %110, %113 : vector<8x128xf32>
    %115 = vector.broadcast %0 : vector<1x128xf32> to vector<8x128xf32>
    %116 = arith.mulf %114, %115 : vector<8x128xf32>
    %cst_48 = arith.constant dense<0.000000e+00> : vector<8xf32>
    %117 = vector.multi_reduction <add>, %116, %cst_48 [1] : vector<8x128xf32> to vector<8xf32>
    %118 = vector.shape_cast %117 : vector<8xf32> to vector<8x1xf32>
    %119 = arith.addf %74, %118 : vector<8x1xf32>
    %120 = arith.mulf %116, %114 : vector<8x128xf32>
    %cst_49 = arith.constant dense<0.000000e+00> : vector<8xf32>
    %121 = vector.multi_reduction <add>, %120, %cst_49 [1] : vector<8x128xf32> to vector<8xf32>
    %122 = vector.shape_cast %121 : vector<8xf32> to vector<8x1xf32>
    %123 = arith.addf %78, %122 : vector<8x1xf32>
    %124 = arith.truncf %114 : vector<8x128xf32> to vector<8x128xbf16>
    %c0_50 = arith.constant 0 : index
    %c1_51 = arith.constant 1 : index
    %c0_52 = arith.constant 0 : index
    %c0_53 = arith.constant 0 : index
    %125 = vector.load %arg5[%c0_50, %c1_51, %c0_52, %c0_53] : memref<1x8x8x128xbf16, #tpu.memory_space<vmem>>, vector<1x1x8x128xbf16>
    %126 = vector.shape_cast %125 : vector<1x1x8x128xbf16> to vector<8x128xbf16>
    %127 = vector.shape_cast %124 : vector<8x128xbf16> to vector<1x1x8x128xbf16>
    tpu.vector_store %arg5[%c0_50, %c1_51, %c0_52, %c0_53], %127 {strides = array<i32>} : memref<1x8x8x128xbf16, #tpu.memory_space<vmem>>, vector<1x1x8x128xbf16>,
    %c0_54 = arith.constant 0 : index
    %c3 = arith.constant 3 : index
    %c0_55 = arith.constant 0 : index
    %c0_56 = arith.constant 0 : index
    %128 = vector.load %arg1[%c0_54, %c3, %c0_55, %c0_56] : memref<1x8x4x128xbf16, #tpu.memory_space<vmem>>, vector<1x1x4x128xbf16>
    %129 = vector.shape_cast %128 : vector<1x1x4x128xbf16> to vector<4x128xbf16>
    %130 = arith.extf %129 : vector<4x128xbf16> to vector<4x128xf32>
    %131 = vector.broadcast %1 : vector<4x1xf32> to vector<4x128xf32>
    %132 = arith.subf %130, %131 : vector<4x128xf32>
    %133 = vector.broadcast %2 : vector<4x1xf32> to vector<4x128xf32>
    %134 = arith.mulf %132, %133 : vector<4x128xf32>
    %135 = vector.broadcast %0 : vector<1x128xf32> to vector<4x128xf32>
    %136 = arith.mulf %134, %135 : vector<4x128xf32>
    %137 = arith.truncf %136 : vector<4x128xf32> to vector<4x128xbf16>
    %138 = tpu.concatenate %3, %137, %3 in 1 : vector<4x11xbf16>, vector<4x128xbf16>, vector<4x11xbf16> -> vector<4x150xbf16>
    %139 = vector.extract_strided_slice %138 {offsets = [0, 0], sizes = [4, 128], strides = [1, 1]} : vector<4x150xbf16> to vector<4x128xbf16>
    %140 = vector.extract_strided_slice %138 {offsets = [0, 1], sizes = [4, 128], strides = [1, 1]} : vector<4x150xbf16> to vector<4x128xbf16>
    %141 = vector.extract_strided_slice %138 {offsets = [0, 2], sizes = [4, 128], strides = [1, 1]} : vector<4x150xbf16> to vector<4x128xbf16>
    %142 = vector.extract_strided_slice %138 {offsets = [0, 10], sizes = [4, 128], strides = [1, 1]} : vector<4x150xbf16> to vector<4x128xbf16>
    %143 = vector.extract_strided_slice %138 {offsets = [0, 11], sizes = [4, 128], strides = [1, 1]} : vector<4x150xbf16> to vector<4x128xbf16>
    %144 = vector.extract_strided_slice %138 {offsets = [0, 12], sizes = [4, 128], strides = [1, 1]} : vector<4x150xbf16> to vector<4x128xbf16>
    %145 = vector.extract_strided_slice %138 {offsets = [0, 20], sizes = [4, 128], strides = [1, 1]} : vector<4x150xbf16> to vector<4x128xbf16>
    %146 = vector.extract_strided_slice %138 {offsets = [0, 21], sizes = [4, 128], strides = [1, 1]} : vector<4x150xbf16> to vector<4x128xbf16>
    %147 = vector.extract_strided_slice %138 {offsets = [0, 22], sizes = [4, 128], strides = [1, 1]} : vector<4x150xbf16> to vector<4x128xbf16>
    %148 = tpu.concatenate %139, %140, %141, %142, %143, %144, %145, %146, %147 in 0 : vector<4x128xbf16>, vector<4x128xbf16>, vector<4x128xbf16>, vector<4x128xbf16>, vector<4x128xbf16>, vector<4x128xbf16>, vector<4x128xbf16>, vector<4x128xbf16>, vector<4x128xbf16> -> vector<36x128xbf16>
    %c0_57 = arith.constant 0 : index
    %c0_58 = arith.constant 0 : index
    %c0_59 = arith.constant 0 : index
    %149 = vector.load %arg3[%c0_57, %c0_58, %c0_59] : memref<3x8x36xbf16, #tpu.memory_space<vmem>>, vector<1x8x36xbf16>
    %150 = vector.shape_cast %149 : vector<1x8x36xbf16> to vector<8x36xbf16>
    %cst_60 = arith.constant dense<0.000000e+00> : vector<8x128xf32>
    %151 = tpu.matmul %150, %58, %cst_60 {dimension_numbers = #tpu.dot_dimension_numbers<[1], [0], [0], [1], [0, 0, 1, 1], [], []>} : vector<8x36xbf16>, vector<36x128xbf16>, vector<8x128xf32> -> vector<8x128xf32>
    %c1_61 = arith.constant 1 : index
    %c0_62 = arith.constant 0 : index
    %c0_63 = arith.constant 0 : index
    %152 = vector.load %arg3[%c1_61, %c0_62, %c0_63] : memref<3x8x36xbf16, #tpu.memory_space<vmem>>, vector<1x8x36xbf16>
    %153 = vector.shape_cast %152 : vector<1x8x36xbf16> to vector<8x36xbf16>
    %cst_64 = arith.constant dense<0.000000e+00> : vector<8x128xf32>
    %154 = tpu.matmul %153, %103, %cst_64 {dimension_numbers = #tpu.dot_dimension_numbers<[1], [0], [0], [1], [0, 0, 1, 1], [], []>} : vector<8x36xbf16>, vector<36x128xbf16>, vector<8x128xf32> -> vector<8x128xf32>
    %155 = arith.addf %151, %154 : vector<8x128xf32>
    %c2_65 = arith.constant 2 : index
    %c0_66 = arith.constant 0 : index
    %c0_67 = arith.constant 0 : index
    %156 = vector.load %arg3[%c2_65, %c0_66, %c0_67] : memref<3x8x36xbf16, #tpu.memory_space<vmem>>, vector<1x8x36xbf16>
    %157 = vector.shape_cast %156 : vector<1x8x36xbf16> to vector<8x36xbf16>
    %cst_68 = arith.constant dense<0.000000e+00> : vector<8x128xf32>
    %158 = tpu.matmul %157, %148, %cst_68 {dimension_numbers = #tpu.dot_dimension_numbers<[1], [0], [0], [1], [0, 0, 1, 1], [], []>} : vector<8x36xbf16>, vector<36x128xbf16>, vector<8x128xf32> -> vector<8x128xf32>
    %159 = arith.addf %155, %158 : vector<8x128xf32>
    %160 = vector.broadcast %0 : vector<1x128xf32> to vector<8x128xf32>
    %161 = arith.mulf %159, %160 : vector<8x128xf32>
    %cst_69 = arith.constant dense<0.000000e+00> : vector<8xf32>
    %162 = vector.multi_reduction <add>, %161, %cst_69 [1] : vector<8x128xf32> to vector<8xf32>
    %163 = vector.shape_cast %162 : vector<8xf32> to vector<8x1xf32>
    %164 = arith.addf %119, %163 : vector<8x1xf32>
    %165 = arith.mulf %161, %159 : vector<8x128xf32>
    %cst_70 = arith.constant dense<0.000000e+00> : vector<8xf32>
    %166 = vector.multi_reduction <add>, %165, %cst_70 [1] : vector<8x128xf32> to vector<8xf32>
    %167 = vector.shape_cast %166 : vector<8xf32> to vector<8x1xf32>
    %168 = arith.addf %123, %167 : vector<8x1xf32>
    %169 = arith.truncf %159 : vector<8x128xf32> to vector<8x128xbf16>
    %c0_71 = arith.constant 0 : index
    %c2_72 = arith.constant 2 : index
    %c0_73 = arith.constant 0 : index
    %c0_74 = arith.constant 0 : index
    %170 = vector.load %arg5[%c0_71, %c2_72, %c0_73, %c0_74] : memref<1x8x8x128xbf16, #tpu.memory_space<vmem>>, vector<1x1x8x128xbf16>
    %171 = vector.shape_cast %170 : vector<1x1x8x128xbf16> to vector<8x128xbf16>
    %172 = vector.shape_cast %169 : vector<8x128xbf16> to vector<1x1x8x128xbf16>
    tpu.vector_store %arg5[%c0_71, %c2_72, %c0_73, %c0_74], %172 {strides = array<i32>} : memref<1x8x8x128xbf16, #tpu.memory_space<vmem>>, vector<1x1x8x128xbf16>,
    %c0_75 = arith.constant 0 : index
    %c4 = arith.constant 4 : index
    %c0_76 = arith.constant 0 : index
    %c0_77 = arith.constant 0 : index
    %173 = vector.load %arg1[%c0_75, %c4, %c0_76, %c0_77] : memref<1x8x4x128xbf16, #tpu.memory_space<vmem>>, vector<1x1x4x128xbf16>
    %174 = vector.shape_cast %173 : vector<1x1x4x128xbf16> to vector<4x128xbf16>
    %175 = arith.extf %174 : vector<4x128xbf16> to vector<4x128xf32>
    %176 = vector.broadcast %1 : vector<4x1xf32> to vector<4x128xf32>
    %177 = arith.subf %175, %176 : vector<4x128xf32>
    %178 = vector.broadcast %2 : vector<4x1xf32> to vector<4x128xf32>
    %179 = arith.mulf %177, %178 : vector<4x128xf32>
    %180 = vector.broadcast %0 : vector<1x128xf32> to vector<4x128xf32>
    %181 = arith.mulf %179, %180 : vector<4x128xf32>
    %182 = arith.truncf %181 : vector<4x128xf32> to vector<4x128xbf16>
    %183 = tpu.concatenate %3, %182, %3 in 1 : vector<4x11xbf16>, vector<4x128xbf16>, vector<4x11xbf16> -> vector<4x150xbf16>
    %184 = vector.extract_strided_slice %183 {offsets = [0, 0], sizes = [4, 128], strides = [1, 1]} : vector<4x150xbf16> to vector<4x128xbf16>
    %185 = vector.extract_strided_slice %183 {offsets = [0, 1], sizes = [4, 128], strides = [1, 1]} : vector<4x150xbf16> to vector<4x128xbf16>
    %186 = vector.extract_strided_slice %183 {offsets = [0, 2], sizes = [4, 128], strides = [1, 1]} : vector<4x150xbf16> to vector<4x128xbf16>
    %187 = vector.extract_strided_slice %183 {offsets = [0, 10], sizes = [4, 128], strides = [1, 1]} : vector<4x150xbf16> to vector<4x128xbf16>
    %188 = vector.extract_strided_slice %183 {offsets = [0, 11], sizes = [4, 128], strides = [1, 1]} : vector<4x150xbf16> to vector<4x128xbf16>
    %189 = vector.extract_strided_slice %183 {offsets = [0, 12], sizes = [4, 128], strides = [1, 1]} : vector<4x150xbf16> to vector<4x128xbf16>
    %190 = vector.extract_strided_slice %183 {offsets = [0, 20], sizes = [4, 128], strides = [1, 1]} : vector<4x150xbf16> to vector<4x128xbf16>
    %191 = vector.extract_strided_slice %183 {offsets = [0, 21], sizes = [4, 128], strides = [1, 1]} : vector<4x150xbf16> to vector<4x128xbf16>
    %192 = vector.extract_strided_slice %183 {offsets = [0, 22], sizes = [4, 128], strides = [1, 1]} : vector<4x150xbf16> to vector<4x128xbf16>
    %193 = tpu.concatenate %184, %185, %186, %187, %188, %189, %190, %191, %192 in 0 : vector<4x128xbf16>, vector<4x128xbf16>, vector<4x128xbf16>, vector<4x128xbf16>, vector<4x128xbf16>, vector<4x128xbf16>, vector<4x128xbf16>, vector<4x128xbf16>, vector<4x128xbf16> -> vector<36x128xbf16>
    %c0_78 = arith.constant 0 : index
    %c0_79 = arith.constant 0 : index
    %c0_80 = arith.constant 0 : index
    %194 = vector.load %arg3[%c0_78, %c0_79, %c0_80] : memref<3x8x36xbf16, #tpu.memory_space<vmem>>, vector<1x8x36xbf16>
    %195 = vector.shape_cast %194 : vector<1x8x36xbf16> to vector<8x36xbf16>
    %cst_81 = arith.constant dense<0.000000e+00> : vector<8x128xf32>
    %196 = tpu.matmul %195, %103, %cst_81 {dimension_numbers = #tpu.dot_dimension_numbers<[1], [0], [0], [1], [0, 0, 1, 1], [], []>} : vector<8x36xbf16>, vector<36x128xbf16>, vector<8x128xf32> -> vector<8x128xf32>
    %c1_82 = arith.constant 1 : index
    %c0_83 = arith.constant 0 : index
    %c0_84 = arith.constant 0 : index
    %197 = vector.load %arg3[%c1_82, %c0_83, %c0_84] : memref<3x8x36xbf16, #tpu.memory_space<vmem>>, vector<1x8x36xbf16>
    %198 = vector.shape_cast %197 : vector<1x8x36xbf16> to vector<8x36xbf16>
    %cst_85 = arith.constant dense<0.000000e+00> : vector<8x128xf32>
    %199 = tpu.matmul %198, %148, %cst_85 {dimension_numbers = #tpu.dot_dimension_numbers<[1], [0], [0], [1], [0, 0, 1, 1], [], []>} : vector<8x36xbf16>, vector<36x128xbf16>, vector<8x128xf32> -> vector<8x128xf32>
    %200 = arith.addf %196, %199 : vector<8x128xf32>
    %c2_86 = arith.constant 2 : index
    %c0_87 = arith.constant 0 : index
    %c0_88 = arith.constant 0 : index
    %201 = vector.load %arg3[%c2_86, %c0_87, %c0_88] : memref<3x8x36xbf16, #tpu.memory_space<vmem>>, vector<1x8x36xbf16>
    %202 = vector.shape_cast %201 : vector<1x8x36xbf16> to vector<8x36xbf16>
    %cst_89 = arith.constant dense<0.000000e+00> : vector<8x128xf32>
    %203 = tpu.matmul %202, %193, %cst_89 {dimension_numbers = #tpu.dot_dimension_numbers<[1], [0], [0], [1], [0, 0, 1, 1], [], []>} : vector<8x36xbf16>, vector<36x128xbf16>, vector<8x128xf32> -> vector<8x128xf32>
    %204 = arith.addf %200, %203 : vector<8x128xf32>
    %205 = vector.broadcast %0 : vector<1x128xf32> to vector<8x128xf32>
    %206 = arith.mulf %204, %205 : vector<8x128xf32>
    %cst_90 = arith.constant dense<0.000000e+00> : vector<8xf32>
    %207 = vector.multi_reduction <add>, %206, %cst_90 [1] : vector<8x128xf32> to vector<8xf32>
    %208 = vector.shape_cast %207 : vector<8xf32> to vector<8x1xf32>
    %209 = arith.addf %164, %208 : vector<8x1xf32>
    %210 = arith.mulf %206, %204 : vector<8x128xf32>
    %cst_91 = arith.constant dense<0.000000e+00> : vector<8xf32>
    %211 = vector.multi_reduction <add>, %210, %cst_91 [1] : vector<8x128xf32> to vector<8xf32>
    %212 = vector.shape_cast %211 : vector<8xf32> to vector<8x1xf32>
    %213 = arith.addf %168, %212 : vector<8x1xf32>
    %214 = arith.truncf %204 : vector<8x128xf32> to vector<8x128xbf16>
    %c0_92 = arith.constant 0 : index
    %c3_93 = arith.constant 3 : index
    %c0_94 = arith.constant 0 : index
    %c0_95 = arith.constant 0 : index
    %215 = vector.load %arg5[%c0_92, %c3_93, %c0_94, %c0_95] : memref<1x8x8x128xbf16, #tpu.memory_space<vmem>>, vector<1x1x8x128xbf16>
    %216 = vector.shape_cast %215 : vector<1x1x8x128xbf16> to vector<8x128xbf16>
    %217 = vector.shape_cast %214 : vector<8x128xbf16> to vector<1x1x8x128xbf16>
    tpu.vector_store %arg5[%c0_92, %c3_93, %c0_94, %c0_95], %217 {strides = array<i32>} : memref<1x8x8x128xbf16, #tpu.memory_space<vmem>>, vector<1x1x8x128xbf16>,
    %c0_96 = arith.constant 0 : index
    %c5 = arith.constant 5 : index
    %c0_97 = arith.constant 0 : index
    %c0_98 = arith.constant 0 : index
    %218 = vector.load %arg1[%c0_96, %c5, %c0_97, %c0_98] : memref<1x8x4x128xbf16, #tpu.memory_space<vmem>>, vector<1x1x4x128xbf16>
    %219 = vector.shape_cast %218 : vector<1x1x4x128xbf16> to vector<4x128xbf16>
    %220 = arith.extf %219 : vector<4x128xbf16> to vector<4x128xf32>
    %221 = vector.broadcast %1 : vector<4x1xf32> to vector<4x128xf32>
    %222 = arith.subf %220, %221 : vector<4x128xf32>
    %223 = vector.broadcast %2 : vector<4x1xf32> to vector<4x128xf32>
    %224 = arith.mulf %222, %223 : vector<4x128xf32>
    %225 = vector.broadcast %0 : vector<1x128xf32> to vector<4x128xf32>
    %226 = arith.mulf %224, %225 : vector<4x128xf32>
    %227 = arith.truncf %226 : vector<4x128xf32> to vector<4x128xbf16>
    %228 = tpu.concatenate %3, %227, %3 in 1 : vector<4x11xbf16>, vector<4x128xbf16>, vector<4x11xbf16> -> vector<4x150xbf16>
    %229 = vector.extract_strided_slice %228 {offsets = [0, 0], sizes = [4, 128], strides = [1, 1]} : vector<4x150xbf16> to vector<4x128xbf16>
    %230 = vector.extract_strided_slice %228 {offsets = [0, 1], sizes = [4, 128], strides = [1, 1]} : vector<4x150xbf16> to vector<4x128xbf16>
    %231 = vector.extract_strided_slice %228 {offsets = [0, 2], sizes = [4, 128], strides = [1, 1]} : vector<4x150xbf16> to vector<4x128xbf16>
    %232 = vector.extract_strided_slice %228 {offsets = [0, 10], sizes = [4, 128], strides = [1, 1]} : vector<4x150xbf16> to vector<4x128xbf16>
    %233 = vector.extract_strided_slice %228 {offsets = [0, 11], sizes = [4, 128], strides = [1, 1]} : vector<4x150xbf16> to vector<4x128xbf16>
    %234 = vector.extract_strided_slice %228 {offsets = [0, 12], sizes = [4, 128], strides = [1, 1]} : vector<4x150xbf16> to vector<4x128xbf16>
    %235 = vector.extract_strided_slice %228 {offsets = [0, 20], sizes = [4, 128], strides = [1, 1]} : vector<4x150xbf16> to vector<4x128xbf16>
    %236 = vector.extract_strided_slice %228 {offsets = [0, 21], sizes = [4, 128], strides = [1, 1]} : vector<4x150xbf16> to vector<4x128xbf16>
    %237 = vector.extract_strided_slice %228 {offsets = [0, 22], sizes = [4, 128], strides = [1, 1]} : vector<4x150xbf16> to vector<4x128xbf16>
    %238 = tpu.concatenate %229, %230, %231, %232, %233, %234, %235, %236, %237 in 0 : vector<4x128xbf16>, vector<4x128xbf16>, vector<4x128xbf16>, vector<4x128xbf16>, vector<4x128xbf16>, vector<4x128xbf16>, vector<4x128xbf16>, vector<4x128xbf16>, vector<4x128xbf16> -> vector<36x128xbf16>
    %c0_99 = arith.constant 0 : index
    %c0_100 = arith.constant 0 : index
    %c0_101 = arith.constant 0 : index
    %239 = vector.load %arg3[%c0_99, %c0_100, %c0_101] : memref<3x8x36xbf16, #tpu.memory_space<vmem>>, vector<1x8x36xbf16>
    %240 = vector.shape_cast %239 : vector<1x8x36xbf16> to vector<8x36xbf16>
    %cst_102 = arith.constant dense<0.000000e+00> : vector<8x128xf32>
    %241 = tpu.matmul %240, %148, %cst_102 {dimension_numbers = #tpu.dot_dimension_numbers<[1], [0], [0], [1], [0, 0, 1, 1], [], []>} : vector<8x36xbf16>, vector<36x128xbf16>, vector<8x128xf32> -> vector<8x128xf32>
    %c1_103 = arith.constant 1 : index
    %c0_104 = arith.constant 0 : index
    %c0_105 = arith.constant 0 : index
    %242 = vector.load %arg3[%c1_103, %c0_104, %c0_105] : memref<3x8x36xbf16, #tpu.memory_space<vmem>>, vector<1x8x36xbf16>
    %243 = vector.shape_cast %242 : vector<1x8x36xbf16> to vector<8x36xbf16>
    %cst_106 = arith.constant dense<0.000000e+00> : vector<8x128xf32>
    %244 = tpu.matmul %243, %193, %cst_106 {dimension_numbers = #tpu.dot_dimension_numbers<[1], [0], [0], [1], [0, 0, 1, 1], [], []>} : vector<8x36xbf16>, vector<36x128xbf16>, vector<8x128xf32> -> vector<8x128xf32>
    %245 = arith.addf %241, %244 : vector<8x128xf32>
    %c2_107 = arith.constant 2 : index
    %c0_108 = arith.constant 0 : index
    %c0_109 = arith.constant 0 : index
    %246 = vector.load %arg3[%c2_107, %c0_108, %c0_109] : memref<3x8x36xbf16, #tpu.memory_space<vmem>>, vector<1x8x36xbf16>
    %247 = vector.shape_cast %246 : vector<1x8x36xbf16> to vector<8x36xbf16>
    %cst_110 = arith.constant dense<0.000000e+00> : vector<8x128xf32>
    %248 = tpu.matmul %247, %238, %cst_110 {dimension_numbers = #tpu.dot_dimension_numbers<[1], [0], [0], [1], [0, 0, 1, 1], [], []>} : vector<8x36xbf16>, vector<36x128xbf16>, vector<8x128xf32> -> vector<8x128xf32>
    %249 = arith.addf %245, %248 : vector<8x128xf32>
    %250 = vector.broadcast %0 : vector<1x128xf32> to vector<8x128xf32>
    %251 = arith.mulf %249, %250 : vector<8x128xf32>
    %cst_111 = arith.constant dense<0.000000e+00> : vector<8xf32>
    %252 = vector.multi_reduction <add>, %251, %cst_111 [1] : vector<8x128xf32> to vector<8xf32>
    %253 = vector.shape_cast %252 : vector<8xf32> to vector<8x1xf32>
    %254 = arith.addf %209, %253 : vector<8x1xf32>
    %255 = arith.mulf %251, %249 : vector<8x128xf32>
    %cst_112 = arith.constant dense<0.000000e+00> : vector<8xf32>
    %256 = vector.multi_reduction <add>, %255, %cst_112 [1] : vector<8x128xf32> to vector<8xf32>
    %257 = vector.shape_cast %256 : vector<8xf32> to vector<8x1xf32>
    %258 = arith.addf %213, %257 : vector<8x1xf32>
    %259 = arith.truncf %249 : vector<8x128xf32> to vector<8x128xbf16>
    %c0_113 = arith.constant 0 : index
    %c4_114 = arith.constant 4 : index
    %c0_115 = arith.constant 0 : index
    %c0_116 = arith.constant 0 : index
    %260 = vector.load %arg5[%c0_113, %c4_114, %c0_115, %c0_116] : memref<1x8x8x128xbf16, #tpu.memory_space<vmem>>, vector<1x1x8x128xbf16>
    %261 = vector.shape_cast %260 : vector<1x1x8x128xbf16> to vector<8x128xbf16>
    %262 = vector.shape_cast %259 : vector<8x128xbf16> to vector<1x1x8x128xbf16>
    tpu.vector_store %arg5[%c0_113, %c4_114, %c0_115, %c0_116], %262 {strides = array<i32>} : memref<1x8x8x128xbf16, #tpu.memory_space<vmem>>, vector<1x1x8x128xbf16>,
    %c0_117 = arith.constant 0 : index
    %c6 = arith.constant 6 : index
    %c0_118 = arith.constant 0 : index
    %c0_119 = arith.constant 0 : index
    %263 = vector.load %arg1[%c0_117, %c6, %c0_118, %c0_119] : memref<1x8x4x128xbf16, #tpu.memory_space<vmem>>, vector<1x1x4x128xbf16>
    %264 = vector.shape_cast %263 : vector<1x1x4x128xbf16> to vector<4x128xbf16>
    %265 = arith.extf %264 : vector<4x128xbf16> to vector<4x128xf32>
    %266 = vector.broadcast %1 : vector<4x1xf32> to vector<4x128xf32>
    %267 = arith.subf %265, %266 : vector<4x128xf32>
    %268 = vector.broadcast %2 : vector<4x1xf32> to vector<4x128xf32>
    %269 = arith.mulf %267, %268 : vector<4x128xf32>
    %270 = vector.broadcast %0 : vector<1x128xf32> to vector<4x128xf32>
    %271 = arith.mulf %269, %270 : vector<4x128xf32>
    %272 = arith.truncf %271 : vector<4x128xf32> to vector<4x128xbf16>
    %273 = tpu.concatenate %3, %272, %3 in 1 : vector<4x11xbf16>, vector<4x128xbf16>, vector<4x11xbf16> -> vector<4x150xbf16>
    %274 = vector.extract_strided_slice %273 {offsets = [0, 0], sizes = [4, 128], strides = [1, 1]} : vector<4x150xbf16> to vector<4x128xbf16>
    %275 = vector.extract_strided_slice %273 {offsets = [0, 1], sizes = [4, 128], strides = [1, 1]} : vector<4x150xbf16> to vector<4x128xbf16>
    %276 = vector.extract_strided_slice %273 {offsets = [0, 2], sizes = [4, 128], strides = [1, 1]} : vector<4x150xbf16> to vector<4x128xbf16>
    %277 = vector.extract_strided_slice %273 {offsets = [0, 10], sizes = [4, 128], strides = [1, 1]} : vector<4x150xbf16> to vector<4x128xbf16>
    %278 = vector.extract_strided_slice %273 {offsets = [0, 11], sizes = [4, 128], strides = [1, 1]} : vector<4x150xbf16> to vector<4x128xbf16>
    %279 = vector.extract_strided_slice %273 {offsets = [0, 12], sizes = [4, 128], strides = [1, 1]} : vector<4x150xbf16> to vector<4x128xbf16>
    %280 = vector.extract_strided_slice %273 {offsets = [0, 20], sizes = [4, 128], strides = [1, 1]} : vector<4x150xbf16> to vector<4x128xbf16>
    %281 = vector.extract_strided_slice %273 {offsets = [0, 21], sizes = [4, 128], strides = [1, 1]} : vector<4x150xbf16> to vector<4x128xbf16>
    %282 = vector.extract_strided_slice %273 {offsets = [0, 22], sizes = [4, 128], strides = [1, 1]} : vector<4x150xbf16> to vector<4x128xbf16>
    %283 = tpu.concatenate %274, %275, %276, %277, %278, %279, %280, %281, %282 in 0 : vector<4x128xbf16>, vector<4x128xbf16>, vector<4x128xbf16>, vector<4x128xbf16>, vector<4x128xbf16>, vector<4x128xbf16>, vector<4x128xbf16>, vector<4x128xbf16>, vector<4x128xbf16> -> vector<36x128xbf16>
    %c0_120 = arith.constant 0 : index
    %c0_121 = arith.constant 0 : index
    %c0_122 = arith.constant 0 : index
    %284 = vector.load %arg3[%c0_120, %c0_121, %c0_122] : memref<3x8x36xbf16, #tpu.memory_space<vmem>>, vector<1x8x36xbf16>
    %285 = vector.shape_cast %284 : vector<1x8x36xbf16> to vector<8x36xbf16>
    %cst_123 = arith.constant dense<0.000000e+00> : vector<8x128xf32>
    %286 = tpu.matmul %285, %193, %cst_123 {dimension_numbers = #tpu.dot_dimension_numbers<[1], [0], [0], [1], [0, 0, 1, 1], [], []>} : vector<8x36xbf16>, vector<36x128xbf16>, vector<8x128xf32> -> vector<8x128xf32>
    %c1_124 = arith.constant 1 : index
    %c0_125 = arith.constant 0 : index
    %c0_126 = arith.constant 0 : index
    %287 = vector.load %arg3[%c1_124, %c0_125, %c0_126] : memref<3x8x36xbf16, #tpu.memory_space<vmem>>, vector<1x8x36xbf16>
    %288 = vector.shape_cast %287 : vector<1x8x36xbf16> to vector<8x36xbf16>
    %cst_127 = arith.constant dense<0.000000e+00> : vector<8x128xf32>
    %289 = tpu.matmul %288, %238, %cst_127 {dimension_numbers = #tpu.dot_dimension_numbers<[1], [0], [0], [1], [0, 0, 1, 1], [], []>} : vector<8x36xbf16>, vector<36x128xbf16>, vector<8x128xf32> -> vector<8x128xf32>
    %290 = arith.addf %286, %289 : vector<8x128xf32>
    %c2_128 = arith.constant 2 : index
    %c0_129 = arith.constant 0 : index
    %c0_130 = arith.constant 0 : index
    %291 = vector.load %arg3[%c2_128, %c0_129, %c0_130] : memref<3x8x36xbf16, #tpu.memory_space<vmem>>, vector<1x8x36xbf16>
    %292 = vector.shape_cast %291 : vector<1x8x36xbf16> to vector<8x36xbf16>
    %cst_131 = arith.constant dense<0.000000e+00> : vector<8x128xf32>
    %293 = tpu.matmul %292, %283, %cst_131 {dimension_numbers = #tpu.dot_dimension_numbers<[1], [0], [0], [1], [0, 0, 1, 1], [], []>} : vector<8x36xbf16>, vector<36x128xbf16>, vector<8x128xf32> -> vector<8x128xf32>
    %294 = arith.addf %290, %293 : vector<8x128xf32>
    %295 = vector.broadcast %0 : vector<1x128xf32> to vector<8x128xf32>
    %296 = arith.mulf %294, %295 : vector<8x128xf32>
    %cst_132 = arith.constant dense<0.000000e+00> : vector<8xf32>
    %297 = vector.multi_reduction <add>, %296, %cst_132 [1] : vector<8x128xf32> to vector<8xf32>
    %298 = vector.shape_cast %297 : vector<8xf32> to vector<8x1xf32>
    %299 = arith.addf %254, %298 : vector<8x1xf32>
    %300 = arith.mulf %296, %294 : vector<8x128xf32>
    %cst_133 = arith.constant dense<0.000000e+00> : vector<8xf32>
    %301 = vector.multi_reduction <add>, %300, %cst_133 [1] : vector<8x128xf32> to vector<8xf32>
    %302 = vector.shape_cast %301 : vector<8xf32> to vector<8x1xf32>
    %303 = arith.addf %258, %302 : vector<8x1xf32>
    %304 = arith.truncf %294 : vector<8x128xf32> to vector<8x128xbf16>
    %c0_134 = arith.constant 0 : index
    %c5_135 = arith.constant 5 : index
    %c0_136 = arith.constant 0 : index
    %c0_137 = arith.constant 0 : index
    %305 = vector.load %arg5[%c0_134, %c5_135, %c0_136, %c0_137] : memref<1x8x8x128xbf16, #tpu.memory_space<vmem>>, vector<1x1x8x128xbf16>
    %306 = vector.shape_cast %305 : vector<1x1x8x128xbf16> to vector<8x128xbf16>
    %307 = vector.shape_cast %304 : vector<8x128xbf16> to vector<1x1x8x128xbf16>
    tpu.vector_store %arg5[%c0_134, %c5_135, %c0_136, %c0_137], %307 {strides = array<i32>} : memref<1x8x8x128xbf16, #tpu.memory_space<vmem>>, vector<1x1x8x128xbf16>,
    %c0_138 = arith.constant 0 : index
    %c7 = arith.constant 7 : index
    %c0_139 = arith.constant 0 : index
    %c0_140 = arith.constant 0 : index
    %308 = vector.load %arg1[%c0_138, %c7, %c0_139, %c0_140] : memref<1x8x4x128xbf16, #tpu.memory_space<vmem>>, vector<1x1x4x128xbf16>
    %309 = vector.shape_cast %308 : vector<1x1x4x128xbf16> to vector<4x128xbf16>
    %310 = arith.extf %309 : vector<4x128xbf16> to vector<4x128xf32>
    %311 = vector.broadcast %1 : vector<4x1xf32> to vector<4x128xf32>
    %312 = arith.subf %310, %311 : vector<4x128xf32>
    %313 = vector.broadcast %2 : vector<4x1xf32> to vector<4x128xf32>
    %314 = arith.mulf %312, %313 : vector<4x128xf32>
    %315 = vector.broadcast %0 : vector<1x128xf32> to vector<4x128xf32>
    %316 = arith.mulf %314, %315 : vector<4x128xf32>
    %317 = arith.truncf %316 : vector<4x128xf32> to vector<4x128xbf16>
    %318 = tpu.concatenate %3, %317, %3 in 1 : vector<4x11xbf16>, vector<4x128xbf16>, vector<4x11xbf16> -> vector<4x150xbf16>
    %319 = vector.extract_strided_slice %318 {offsets = [0, 0], sizes = [4, 128], strides = [1, 1]} : vector<4x150xbf16> to vector<4x128xbf16>
    %320 = vector.extract_strided_slice %318 {offsets = [0, 1], sizes = [4, 128], strides = [1, 1]} : vector<4x150xbf16> to vector<4x128xbf16>
    %321 = vector.extract_strided_slice %318 {offsets = [0, 2], sizes = [4, 128], strides = [1, 1]} : vector<4x150xbf16> to vector<4x128xbf16>
    %322 = vector.extract_strided_slice %318 {offsets = [0, 10], sizes = [4, 128], strides = [1, 1]} : vector<4x150xbf16> to vector<4x128xbf16>
    %323 = vector.extract_strided_slice %318 {offsets = [0, 11], sizes = [4, 128], strides = [1, 1]} : vector<4x150xbf16> to vector<4x128xbf16>
    %324 = vector.extract_strided_slice %318 {offsets = [0, 12], sizes = [4, 128], strides = [1, 1]} : vector<4x150xbf16> to vector<4x128xbf16>
    %325 = vector.extract_strided_slice %318 {offsets = [0, 20], sizes = [4, 128], strides = [1, 1]} : vector<4x150xbf16> to vector<4x128xbf16>
    %326 = vector.extract_strided_slice %318 {offsets = [0, 21], sizes = [4, 128], strides = [1, 1]} : vector<4x150xbf16> to vector<4x128xbf16>
    %327 = vector.extract_strided_slice %318 {offsets = [0, 22], sizes = [4, 128], strides = [1, 1]} : vector<4x150xbf16> to vector<4x128xbf16>
    %328 = tpu.concatenate %319, %320, %321, %322, %323, %324, %325, %326, %327 in 0 : vector<4x128xbf16>, vector<4x128xbf16>, vector<4x128xbf16>, vector<4x128xbf16>, vector<4x128xbf16>, vector<4x128xbf16>, vector<4x128xbf16>, vector<4x128xbf16>, vector<4x128xbf16> -> vector<36x128xbf16>
    %c0_141 = arith.constant 0 : index
    %c0_142 = arith.constant 0 : index
    %c0_143 = arith.constant 0 : index
    %329 = vector.load %arg3[%c0_141, %c0_142, %c0_143] : memref<3x8x36xbf16, #tpu.memory_space<vmem>>, vector<1x8x36xbf16>
    %330 = vector.shape_cast %329 : vector<1x8x36xbf16> to vector<8x36xbf16>
    %cst_144 = arith.constant dense<0.000000e+00> : vector<8x128xf32>
    %331 = tpu.matmul %330, %238, %cst_144 {dimension_numbers = #tpu.dot_dimension_numbers<[1], [0], [0], [1], [0, 0, 1, 1], [], []>} : vector<8x36xbf16>, vector<36x128xbf16>, vector<8x128xf32> -> vector<8x128xf32>
    %c1_145 = arith.constant 1 : index
    %c0_146 = arith.constant 0 : index
    %c0_147 = arith.constant 0 : index
    %332 = vector.load %arg3[%c1_145, %c0_146, %c0_147] : memref<3x8x36xbf16, #tpu.memory_space<vmem>>, vector<1x8x36xbf16>
    %333 = vector.shape_cast %332 : vector<1x8x36xbf16> to vector<8x36xbf16>
    %cst_148 = arith.constant dense<0.000000e+00> : vector<8x128xf32>
    %334 = tpu.matmul %333, %283, %cst_148 {dimension_numbers = #tpu.dot_dimension_numbers<[1], [0], [0], [1], [0, 0, 1, 1], [], []>} : vector<8x36xbf16>, vector<36x128xbf16>, vector<8x128xf32> -> vector<8x128xf32>
    %335 = arith.addf %331, %334 : vector<8x128xf32>
    %c2_149 = arith.constant 2 : index
    %c0_150 = arith.constant 0 : index
    %c0_151 = arith.constant 0 : index
    %336 = vector.load %arg3[%c2_149, %c0_150, %c0_151] : memref<3x8x36xbf16, #tpu.memory_space<vmem>>, vector<1x8x36xbf16>
    %337 = vector.shape_cast %336 : vector<1x8x36xbf16> to vector<8x36xbf16>
    %cst_152 = arith.constant dense<0.000000e+00> : vector<8x128xf32>
    %338 = tpu.matmul %337, %328, %cst_152 {dimension_numbers = #tpu.dot_dimension_numbers<[1], [0], [0], [1], [0, 0, 1, 1], [], []>} : vector<8x36xbf16>, vector<36x128xbf16>, vector<8x128xf32> -> vector<8x128xf32>
    %339 = arith.addf %335, %338 : vector<8x128xf32>
    %340 = vector.broadcast %0 : vector<1x128xf32> to vector<8x128xf32>
    %341 = arith.mulf %339, %340 : vector<8x128xf32>
    %cst_153 = arith.constant dense<0.000000e+00> : vector<8xf32>
    %342 = vector.multi_reduction <add>, %341, %cst_153 [1] : vector<8x128xf32> to vector<8xf32>
    %343 = vector.shape_cast %342 : vector<8xf32> to vector<8x1xf32>
    %344 = arith.addf %299, %343 : vector<8x1xf32>
    %345 = arith.mulf %341, %339 : vector<8x128xf32>
    %cst_154 = arith.constant dense<0.000000e+00> : vector<8xf32>
    %346 = vector.multi_reduction <add>, %345, %cst_154 [1] : vector<8x128xf32> to vector<8xf32>
    %347 = vector.shape_cast %346 : vector<8xf32> to vector<8x1xf32>
    %348 = arith.addf %303, %347 : vector<8x1xf32>
    %349 = arith.truncf %339 : vector<8x128xf32> to vector<8x128xbf16>
    %c0_155 = arith.constant 0 : index
    %c6_156 = arith.constant 6 : index
    %c0_157 = arith.constant 0 : index
    %c0_158 = arith.constant 0 : index
    %350 = vector.load %arg5[%c0_155, %c6_156, %c0_157, %c0_158] : memref<1x8x8x128xbf16, #tpu.memory_space<vmem>>, vector<1x1x8x128xbf16>
    %351 = vector.shape_cast %350 : vector<1x1x8x128xbf16> to vector<8x128xbf16>
    %352 = vector.shape_cast %349 : vector<8x128xbf16> to vector<1x1x8x128xbf16>
    tpu.vector_store %arg5[%c0_155, %c6_156, %c0_157, %c0_158], %352 {strides = array<i32>} : memref<1x8x8x128xbf16, #tpu.memory_space<vmem>>, vector<1x1x8x128xbf16>,
    %cst_159 = arith.constant 0.000000e+00 : bf16
    %353 = vector.broadcast %cst_159 : bf16 to vector<4x150xbf16>
    %354 = vector.extract_strided_slice %353 {offsets = [0, 0], sizes = [4, 128], strides = [1, 1]} : vector<4x150xbf16> to vector<4x128xbf16>
    %355 = vector.extract_strided_slice %353 {offsets = [0, 1], sizes = [4, 128], strides = [1, 1]} : vector<4x150xbf16> to vector<4x128xbf16>
    %356 = vector.extract_strided_slice %353 {offsets = [0, 2], sizes = [4, 128], strides = [1, 1]} : vector<4x150xbf16> to vector<4x128xbf16>
    %357 = vector.extract_strided_slice %353 {offsets = [0, 10], sizes = [4, 128], strides = [1, 1]} : vector<4x150xbf16> to vector<4x128xbf16>
    %358 = vector.extract_strided_slice %353 {offsets = [0, 11], sizes = [4, 128], strides = [1, 1]} : vector<4x150xbf16> to vector<4x128xbf16>
    %359 = vector.extract_strided_slice %353 {offsets = [0, 12], sizes = [4, 128], strides = [1, 1]} : vector<4x150xbf16> to vector<4x128xbf16>
    %360 = vector.extract_strided_slice %353 {offsets = [0, 20], sizes = [4, 128], strides = [1, 1]} : vector<4x150xbf16> to vector<4x128xbf16>
    %361 = vector.extract_strided_slice %353 {offsets = [0, 21], sizes = [4, 128], strides = [1, 1]} : vector<4x150xbf16> to vector<4x128xbf16>
    %362 = vector.extract_strided_slice %353 {offsets = [0, 22], sizes = [4, 128], strides = [1, 1]} : vector<4x150xbf16> to vector<4x128xbf16>
    %363 = tpu.concatenate %354, %355, %356, %357, %358, %359, %360, %361, %362 in 0 : vector<4x128xbf16>, vector<4x128xbf16>, vector<4x128xbf16>, vector<4x128xbf16>, vector<4x128xbf16>, vector<4x128xbf16>, vector<4x128xbf16>, vector<4x128xbf16>, vector<4x128xbf16> -> vector<36x128xbf16>
    %c0_160 = arith.constant 0 : index
    %c0_161 = arith.constant 0 : index
    %c0_162 = arith.constant 0 : index
    %364 = vector.load %arg3[%c0_160, %c0_161, %c0_162] : memref<3x8x36xbf16, #tpu.memory_space<vmem>>, vector<1x8x36xbf16>
    %365 = vector.shape_cast %364 : vector<1x8x36xbf16> to vector<8x36xbf16>
    %cst_163 = arith.constant dense<0.000000e+00> : vector<8x128xf32>
    %366 = tpu.matmul %365, %283, %cst_163 {dimension_numbers = #tpu.dot_dimension_numbers<[1], [0], [0], [1], [0, 0, 1, 1], [], []>} : vector<8x36xbf16>, vector<36x128xbf16>, vector<8x128xf32> -> vector<8x128xf32>
    %c1_164 = arith.constant 1 : index
    %c0_165 = arith.constant 0 : index
    %c0_166 = arith.constant 0 : index
    %367 = vector.load %arg3[%c1_164, %c0_165, %c0_166] : memref<3x8x36xbf16, #tpu.memory_space<vmem>>, vector<1x8x36xbf16>
    %368 = vector.shape_cast %367 : vector<1x8x36xbf16> to vector<8x36xbf16>
    %cst_167 = arith.constant dense<0.000000e+00> : vector<8x128xf32>
    %369 = tpu.matmul %368, %328, %cst_167 {dimension_numbers = #tpu.dot_dimension_numbers<[1], [0], [0], [1], [0, 0, 1, 1], [], []>} : vector<8x36xbf16>, vector<36x128xbf16>, vector<8x128xf32> -> vector<8x128xf32>
    %370 = arith.addf %366, %369 : vector<8x128xf32>
    %c2_168 = arith.constant 2 : index
    %c0_169 = arith.constant 0 : index
    %c0_170 = arith.constant 0 : index
    %371 = vector.load %arg3[%c2_168, %c0_169, %c0_170] : memref<3x8x36xbf16, #tpu.memory_space<vmem>>, vector<1x8x36xbf16>
    %372 = vector.shape_cast %371 : vector<1x8x36xbf16> to vector<8x36xbf16>
    %cst_171 = arith.constant dense<0.000000e+00> : vector<8x128xf32>
    %373 = tpu.matmul %372, %363, %cst_171 {dimension_numbers = #tpu.dot_dimension_numbers<[1], [0], [0], [1], [0, 0, 1, 1], [], []>} : vector<8x36xbf16>, vector<36x128xbf16>, vector<8x128xf32> -> vector<8x128xf32>
    %374 = arith.addf %370, %373 : vector<8x128xf32>
    %375 = vector.broadcast %0 : vector<1x128xf32> to vector<8x128xf32>
    %376 = arith.mulf %374, %375 : vector<8x128xf32>
    %cst_172 = arith.constant dense<0.000000e+00> : vector<8xf32>
    %377 = vector.multi_reduction <add>, %376, %cst_172 [1] : vector<8x128xf32> to vector<8xf32>
    %378 = vector.shape_cast %377 : vector<8xf32> to vector<8x1xf32>
    %379 = arith.addf %344, %378 : vector<8x1xf32>
    %380 = arith.mulf %376, %374 : vector<8x128xf32>
    %cst_173 = arith.constant dense<0.000000e+00> : vector<8xf32>
    %381 = vector.multi_reduction <add>, %380, %cst_173 [1] : vector<8x128xf32> to vector<8xf32>
    %382 = vector.shape_cast %381 : vector<8xf32> to vector<8x1xf32>
    %383 = arith.addf %348, %382 : vector<8x1xf32>
    %384 = arith.truncf %374 : vector<8x128xf32> to vector<8x128xbf16>
    %c0_174 = arith.constant 0 : index
    %c7_175 = arith.constant 7 : index
    %c0_176 = arith.constant 0 : index
    %c0_177 = arith.constant 0 : index
    %385 = vector.load %arg5[%c0_174, %c7_175, %c0_176, %c0_177] : memref<1x8x8x128xbf16, #tpu.memory_space<vmem>>, vector<1x1x8x128xbf16>
    %386 = vector.shape_cast %385 : vector<1x1x8x128xbf16> to vector<8x128xbf16>
    %387 = vector.shape_cast %384 : vector<8x128xbf16> to vector<1x1x8x128xbf16>
    tpu.vector_store %arg5[%c0_174, %c7_175, %c0_176, %c0_177], %387 {strides = array<i32>} : memref<1x8x8x128xbf16, #tpu.memory_space<vmem>>, vector<1x1x8x128xbf16>,
    %388 = tpu.concatenate %379, %383 in 1 : vector<8x1xf32>, vector<8x1xf32> -> vector<8x2xf32>
    %c0_178 = arith.constant 0 : index
    %c0_179 = arith.constant 0 : index
    %c0_180 = arith.constant 0 : index
    %389 = vector.load %arg6[%c0_178, %c0_179, %c0_180] : memref<1x8x2xf32, #tpu.memory_space<vmem>>, vector<1x8x2xf32>
    %390 = vector.shape_cast %389 : vector<1x8x2xf32> to vector<8x2xf32>
    %391 = vector.shape_cast %388 : vector<8x2xf32> to vector<1x8x2xf32>
    tpu.vector_store %arg6[%c0_178, %c0_179, %c0_180], %391 {strides = array<i32>} : memref<1x8x2xf32, #tpu.memory_space<vmem>>, vector<1x8x2xf32>,
    return
  }
  func.func @transform_0(%arg0: i32) -> (i32, i32, i32, i32) {
    %c0_i32 = arith.constant 0 : i32
    %c0_i32_0 = arith.constant 0 : i32
    %c0_i32_1 = arith.constant 0 : i32
    %c0_i32_2 = arith.constant 0 : i32
    return %arg0, %c0_i32, %c0_i32_0, %c0_i32_1 : i32, i32, i32, i32
  }
  func.func @transform_1(%arg0: i32) -> (i32, i32) {
    %c0_i32 = arith.constant 0 : i32
    %c0_i32_0 = arith.constant 0 : i32
    %c0_i32_1 = arith.constant 0 : i32
    return %c0_i32, %c0_i32_0 : i32, i32
  }
  func.func @transform_2(%arg0: i32) -> (i32, i32, i32) {
    %c0_i32 = arith.constant 0 : i32
    %c0_i32_0 = arith.constant 0 : i32
    %c0_i32_1 = arith.constant 0 : i32
    %c0_i32_2 = arith.constant 0 : i32
    return %c0_i32, %c0_i32_0, %c0_i32_1 : i32, i32, i32
  }
  func.func @transform_3(%arg0: i32) -> (i32, i32) {
    %c0_i32 = arith.constant 0 : i32
    %c0_i32_0 = arith.constant 0 : i32
    %c0_i32_1 = arith.constant 0 : i32
    return %c0_i32, %c0_i32_0 : i32, i32
  }
  func.func @transform_4(%arg0: i32) -> (i32, i32, i32, i32) {
    %c0_i32 = arith.constant 0 : i32
    %c0_i32_0 = arith.constant 0 : i32
    %c0_i32_1 = arith.constant 0 : i32
    %c0_i32_2 = arith.constant 0 : i32
    return %arg0, %c0_i32, %c0_i32_0, %c0_i32_1 : i32, i32, i32, i32
  }
  func.func @transform_5(%arg0: i32) -> (i32, i32, i32) {
    %c0_i32 = arith.constant 0 : i32
    %c0_i32_0 = arith.constant 0 : i32
    %c0_i32_1 = arith.constant 0 : i32
    return %arg0, %c0_i32, %c0_i32_0 : i32, i32, i32
  }
}

module attributes {stable_mosaic.version = 11 : i64} {
  func.func @kernel(%arg0: i32, %arg1: memref<1x8x8x128xbf16, #tpu.memory_space<vmem>>, %arg2: memref<8x2xf32, #tpu.memory_space<vmem>>, %arg3: memref<3x8x72xbf16, #tpu.memory_space<vmem>>, %arg4: memref<1x128xf32, #tpu.memory_space<vmem>>, %arg5: memref<1x8x8x128xbf16, #tpu.memory_space<vmem>>, %arg6: memref<1x8x2xf32, #tpu.memory_space<vmem>>) attributes {dimension_semantics = [#tpu.dimension_semantics<parallel>], iteration_bounds = array<i64: 2>, scalar_prefetch = 0 : i64, scratch_operands = 0 : i64, tpu.core_type = #tpu.core_type<tc>, window_params = [{transform_indices = @transform_0, window_bounds = array<i64: 1, 8, 8, 128>}, {pipeline_mode = #tpu.pipeline_mode<synchronous>, transform_indices = @transform_1, window_bounds = array<i64: 8, 2>}, {pipeline_mode = #tpu.pipeline_mode<synchronous>, transform_indices = @transform_2, window_bounds = array<i64: 3, 8, 72>}, {pipeline_mode = #tpu.pipeline_mode<synchronous>, transform_indices = @transform_3, window_bounds = array<i64: 1, 128>}, {transform_indices = @transform_4, window_bounds = array<i64: 1, 8, 8, 128>}, {transform_indices = @transform_5, window_bounds = array<i64: 1, 8, 2>}]} {
    %c0 = arith.constant 0 : index
    %c0_0 = arith.constant 0 : index
    %0 = vector.load %arg4[%c0, %c0_0] : memref<1x128xf32, #tpu.memory_space<vmem>>, vector<1x128xf32>
    %c0_1 = arith.constant 0 : index
    %c0_2 = arith.constant 0 : index
    %1 = vector.load %arg2[%c0_1, %c0_2] : memref<8x2xf32, #tpu.memory_space<vmem>>, vector<8x1xf32>
    %c0_3 = arith.constant 0 : index
    %c1 = arith.constant 1 : index
    %2 = vector.load %arg2[%c0_3, %c1] : memref<8x2xf32, #tpu.memory_space<vmem>>, vector<8x1xf32>
    %cst = arith.constant 0.000000e+00 : bf16
    %3 = vector.broadcast %cst : bf16 to vector<8x11xbf16>
    %cst_4 = arith.constant 0.000000e+00 : f32
    %4 = vector.broadcast %cst_4 : f32 to vector<8x1xf32>
    %cst_5 = arith.constant 0.000000e+00 : f32
    %5 = vector.broadcast %cst_5 : f32 to vector<8x1xf32>
    %cst_6 = arith.constant 0.000000e+00 : bf16
    %6 = vector.broadcast %cst_6 : bf16 to vector<8x150xbf16>
    %7 = vector.extract_strided_slice %6 {offsets = [0, 0], sizes = [8, 128], strides = [1, 1]} : vector<8x150xbf16> to vector<8x128xbf16>
    %8 = vector.extract_strided_slice %6 {offsets = [0, 1], sizes = [8, 128], strides = [1, 1]} : vector<8x150xbf16> to vector<8x128xbf16>
    %9 = vector.extract_strided_slice %6 {offsets = [0, 2], sizes = [8, 128], strides = [1, 1]} : vector<8x150xbf16> to vector<8x128xbf16>
    %10 = vector.extract_strided_slice %6 {offsets = [0, 10], sizes = [8, 128], strides = [1, 1]} : vector<8x150xbf16> to vector<8x128xbf16>
    %11 = vector.extract_strided_slice %6 {offsets = [0, 11], sizes = [8, 128], strides = [1, 1]} : vector<8x150xbf16> to vector<8x128xbf16>
    %12 = vector.extract_strided_slice %6 {offsets = [0, 12], sizes = [8, 128], strides = [1, 1]} : vector<8x150xbf16> to vector<8x128xbf16>
    %13 = vector.extract_strided_slice %6 {offsets = [0, 20], sizes = [8, 128], strides = [1, 1]} : vector<8x150xbf16> to vector<8x128xbf16>
    %14 = vector.extract_strided_slice %6 {offsets = [0, 21], sizes = [8, 128], strides = [1, 1]} : vector<8x150xbf16> to vector<8x128xbf16>
    %15 = vector.extract_strided_slice %6 {offsets = [0, 22], sizes = [8, 128], strides = [1, 1]} : vector<8x150xbf16> to vector<8x128xbf16>
    %16 = tpu.concatenate %7, %8, %9, %10, %11, %12, %13, %14, %15 in 0 : vector<8x128xbf16>, vector<8x128xbf16>, vector<8x128xbf16>, vector<8x128xbf16>, vector<8x128xbf16>, vector<8x128xbf16>, vector<8x128xbf16>, vector<8x128xbf16>, vector<8x128xbf16> -> vector<72x128xbf16>
    %c0_7 = arith.constant 0 : index
    %c0_8 = arith.constant 0 : index
    %c0_9 = arith.constant 0 : index
    %c0_10 = arith.constant 0 : index
    %17 = vector.load %arg1[%c0_7, %c0_8, %c0_9, %c0_10] : memref<1x8x8x128xbf16, #tpu.memory_space<vmem>>, vector<1x1x8x128xbf16>
    %18 = vector.shape_cast %17 : vector<1x1x8x128xbf16> to vector<8x128xbf16>
    %19 = arith.extf %18 : vector<8x128xbf16> to vector<8x128xf32>
    %20 = vector.broadcast %1 : vector<8x1xf32> to vector<8x128xf32>
    %21 = arith.subf %19, %20 : vector<8x128xf32>
    %22 = vector.broadcast %2 : vector<8x1xf32> to vector<8x128xf32>
    %23 = arith.mulf %21, %22 : vector<8x128xf32>
    %cst_11 = arith.constant 0.000000e+00 : f32
    %24 = vector.broadcast %cst_11 : f32 to vector<8x128xf32>
    %25 = arith.maximumf %23, %24 : vector<8x128xf32>
    %26 = vector.broadcast %0 : vector<1x128xf32> to vector<8x128xf32>
    %27 = arith.mulf %25, %26 : vector<8x128xf32>
    %28 = arith.truncf %27 : vector<8x128xf32> to vector<8x128xbf16>
    %29 = tpu.concatenate %3, %28, %3 in 1 : vector<8x11xbf16>, vector<8x128xbf16>, vector<8x11xbf16> -> vector<8x150xbf16>
    %30 = vector.extract_strided_slice %29 {offsets = [0, 0], sizes = [8, 128], strides = [1, 1]} : vector<8x150xbf16> to vector<8x128xbf16>
    %31 = vector.extract_strided_slice %29 {offsets = [0, 1], sizes = [8, 128], strides = [1, 1]} : vector<8x150xbf16> to vector<8x128xbf16>
    %32 = vector.extract_strided_slice %29 {offsets = [0, 2], sizes = [8, 128], strides = [1, 1]} : vector<8x150xbf16> to vector<8x128xbf16>
    %33 = vector.extract_strided_slice %29 {offsets = [0, 10], sizes = [8, 128], strides = [1, 1]} : vector<8x150xbf16> to vector<8x128xbf16>
    %34 = vector.extract_strided_slice %29 {offsets = [0, 11], sizes = [8, 128], strides = [1, 1]} : vector<8x150xbf16> to vector<8x128xbf16>
    %35 = vector.extract_strided_slice %29 {offsets = [0, 12], sizes = [8, 128], strides = [1, 1]} : vector<8x150xbf16> to vector<8x128xbf16>
    %36 = vector.extract_strided_slice %29 {offsets = [0, 20], sizes = [8, 128], strides = [1, 1]} : vector<8x150xbf16> to vector<8x128xbf16>
    %37 = vector.extract_strided_slice %29 {offsets = [0, 21], sizes = [8, 128], strides = [1, 1]} : vector<8x150xbf16> to vector<8x128xbf16>
    %38 = vector.extract_strided_slice %29 {offsets = [0, 22], sizes = [8, 128], strides = [1, 1]} : vector<8x150xbf16> to vector<8x128xbf16>
    %39 = tpu.concatenate %30, %31, %32, %33, %34, %35, %36, %37, %38 in 0 : vector<8x128xbf16>, vector<8x128xbf16>, vector<8x128xbf16>, vector<8x128xbf16>, vector<8x128xbf16>, vector<8x128xbf16>, vector<8x128xbf16>, vector<8x128xbf16>, vector<8x128xbf16> -> vector<72x128xbf16>
    %c0_12 = arith.constant 0 : index
    %c1_13 = arith.constant 1 : index
    %c0_14 = arith.constant 0 : index
    %c0_15 = arith.constant 0 : index
    %40 = vector.load %arg1[%c0_12, %c1_13, %c0_14, %c0_15] : memref<1x8x8x128xbf16, #tpu.memory_space<vmem>>, vector<1x1x8x128xbf16>
    %41 = vector.shape_cast %40 : vector<1x1x8x128xbf16> to vector<8x128xbf16>
    %42 = arith.extf %41 : vector<8x128xbf16> to vector<8x128xf32>
    %43 = vector.broadcast %1 : vector<8x1xf32> to vector<8x128xf32>
    %44 = arith.subf %42, %43 : vector<8x128xf32>
    %45 = vector.broadcast %2 : vector<8x1xf32> to vector<8x128xf32>
    %46 = arith.mulf %44, %45 : vector<8x128xf32>
    %cst_16 = arith.constant 0.000000e+00 : f32
    %47 = vector.broadcast %cst_16 : f32 to vector<8x128xf32>
    %48 = arith.maximumf %46, %47 : vector<8x128xf32>
    %49 = vector.broadcast %0 : vector<1x128xf32> to vector<8x128xf32>
    %50 = arith.mulf %48, %49 : vector<8x128xf32>
    %51 = arith.truncf %50 : vector<8x128xf32> to vector<8x128xbf16>
    %52 = tpu.concatenate %3, %51, %3 in 1 : vector<8x11xbf16>, vector<8x128xbf16>, vector<8x11xbf16> -> vector<8x150xbf16>
    %53 = vector.extract_strided_slice %52 {offsets = [0, 0], sizes = [8, 128], strides = [1, 1]} : vector<8x150xbf16> to vector<8x128xbf16>
    %54 = vector.extract_strided_slice %52 {offsets = [0, 1], sizes = [8, 128], strides = [1, 1]} : vector<8x150xbf16> to vector<8x128xbf16>
    %55 = vector.extract_strided_slice %52 {offsets = [0, 2], sizes = [8, 128], strides = [1, 1]} : vector<8x150xbf16> to vector<8x128xbf16>
    %56 = vector.extract_strided_slice %52 {offsets = [0, 10], sizes = [8, 128], strides = [1, 1]} : vector<8x150xbf16> to vector<8x128xbf16>
    %57 = vector.extract_strided_slice %52 {offsets = [0, 11], sizes = [8, 128], strides = [1, 1]} : vector<8x150xbf16> to vector<8x128xbf16>
    %58 = vector.extract_strided_slice %52 {offsets = [0, 12], sizes = [8, 128], strides = [1, 1]} : vector<8x150xbf16> to vector<8x128xbf16>
    %59 = vector.extract_strided_slice %52 {offsets = [0, 20], sizes = [8, 128], strides = [1, 1]} : vector<8x150xbf16> to vector<8x128xbf16>
    %60 = vector.extract_strided_slice %52 {offsets = [0, 21], sizes = [8, 128], strides = [1, 1]} : vector<8x150xbf16> to vector<8x128xbf16>
    %61 = vector.extract_strided_slice %52 {offsets = [0, 22], sizes = [8, 128], strides = [1, 1]} : vector<8x150xbf16> to vector<8x128xbf16>
    %62 = tpu.concatenate %53, %54, %55, %56, %57, %58, %59, %60, %61 in 0 : vector<8x128xbf16>, vector<8x128xbf16>, vector<8x128xbf16>, vector<8x128xbf16>, vector<8x128xbf16>, vector<8x128xbf16>, vector<8x128xbf16>, vector<8x128xbf16>, vector<8x128xbf16> -> vector<72x128xbf16>
    %c0_17 = arith.constant 0 : index
    %c0_18 = arith.constant 0 : index
    %c0_19 = arith.constant 0 : index
    %63 = vector.load %arg3[%c0_17, %c0_18, %c0_19] : memref<3x8x72xbf16, #tpu.memory_space<vmem>>, vector<1x8x72xbf16>
    %64 = vector.shape_cast %63 : vector<1x8x72xbf16> to vector<8x72xbf16>
    %cst_20 = arith.constant dense<0.000000e+00> : vector<8x128xf32>
    %65 = tpu.matmul %64, %16, %cst_20 {dimension_numbers = #tpu.dot_dimension_numbers<[1], [0], [0], [1], [0, 0, 1, 1], [], []>} : vector<8x72xbf16>, vector<72x128xbf16>, vector<8x128xf32> -> vector<8x128xf32>
    %c1_21 = arith.constant 1 : index
    %c0_22 = arith.constant 0 : index
    %c0_23 = arith.constant 0 : index
    %66 = vector.load %arg3[%c1_21, %c0_22, %c0_23] : memref<3x8x72xbf16, #tpu.memory_space<vmem>>, vector<1x8x72xbf16>
    %67 = vector.shape_cast %66 : vector<1x8x72xbf16> to vector<8x72xbf16>
    %cst_24 = arith.constant dense<0.000000e+00> : vector<8x128xf32>
    %68 = tpu.matmul %67, %39, %cst_24 {dimension_numbers = #tpu.dot_dimension_numbers<[1], [0], [0], [1], [0, 0, 1, 1], [], []>} : vector<8x72xbf16>, vector<72x128xbf16>, vector<8x128xf32> -> vector<8x128xf32>
    %69 = arith.addf %65, %68 : vector<8x128xf32>
    %c2 = arith.constant 2 : index
    %c0_25 = arith.constant 0 : index
    %c0_26 = arith.constant 0 : index
    %70 = vector.load %arg3[%c2, %c0_25, %c0_26] : memref<3x8x72xbf16, #tpu.memory_space<vmem>>, vector<1x8x72xbf16>
    %71 = vector.shape_cast %70 : vector<1x8x72xbf16> to vector<8x72xbf16>
    %cst_27 = arith.constant dense<0.000000e+00> : vector<8x128xf32>
    %72 = tpu.matmul %71, %62, %cst_27 {dimension_numbers = #tpu.dot_dimension_numbers<[1], [0], [0], [1], [0, 0, 1, 1], [], []>} : vector<8x72xbf16>, vector<72x128xbf16>, vector<8x128xf32> -> vector<8x128xf32>
    %73 = arith.addf %69, %72 : vector<8x128xf32>
    %74 = vector.broadcast %0 : vector<1x128xf32> to vector<8x128xf32>
    %75 = arith.mulf %73, %74 : vector<8x128xf32>
    %cst_28 = arith.constant dense<0.000000e+00> : vector<8xf32>
    %76 = vector.multi_reduction <add>, %75, %cst_28 [1] : vector<8x128xf32> to vector<8xf32>
    %77 = vector.shape_cast %76 : vector<8xf32> to vector<8x1xf32>
    %78 = arith.addf %4, %77 : vector<8x1xf32>
    %79 = arith.mulf %75, %73 : vector<8x128xf32>
    %cst_29 = arith.constant dense<0.000000e+00> : vector<8xf32>
    %80 = vector.multi_reduction <add>, %79, %cst_29 [1] : vector<8x128xf32> to vector<8xf32>
    %81 = vector.shape_cast %80 : vector<8xf32> to vector<8x1xf32>
    %82 = arith.addf %5, %81 : vector<8x1xf32>
    %83 = arith.truncf %73 : vector<8x128xf32> to vector<8x128xbf16>
    %c0_30 = arith.constant 0 : index
    %c0_31 = arith.constant 0 : index
    %c0_32 = arith.constant 0 : index
    %c0_33 = arith.constant 0 : index
    %84 = vector.load %arg5[%c0_30, %c0_31, %c0_32, %c0_33] : memref<1x8x8x128xbf16, #tpu.memory_space<vmem>>, vector<1x1x8x128xbf16>
    %85 = vector.shape_cast %84 : vector<1x1x8x128xbf16> to vector<8x128xbf16>
    %86 = vector.shape_cast %83 : vector<8x128xbf16> to vector<1x1x8x128xbf16>
    tpu.vector_store %arg5[%c0_30, %c0_31, %c0_32, %c0_33], %86 {strides = array<i32>} : memref<1x8x8x128xbf16, #tpu.memory_space<vmem>>, vector<1x1x8x128xbf16>,
    %c0_34 = arith.constant 0 : index
    %c2_35 = arith.constant 2 : index
    %c0_36 = arith.constant 0 : index
    %c0_37 = arith.constant 0 : index
    %87 = vector.load %arg1[%c0_34, %c2_35, %c0_36, %c0_37] : memref<1x8x8x128xbf16, #tpu.memory_space<vmem>>, vector<1x1x8x128xbf16>
    %88 = vector.shape_cast %87 : vector<1x1x8x128xbf16> to vector<8x128xbf16>
    %89 = arith.extf %88 : vector<8x128xbf16> to vector<8x128xf32>
    %90 = vector.broadcast %1 : vector<8x1xf32> to vector<8x128xf32>
    %91 = arith.subf %89, %90 : vector<8x128xf32>
    %92 = vector.broadcast %2 : vector<8x1xf32> to vector<8x128xf32>
    %93 = arith.mulf %91, %92 : vector<8x128xf32>
    %cst_38 = arith.constant 0.000000e+00 : f32
    %94 = vector.broadcast %cst_38 : f32 to vector<8x128xf32>
    %95 = arith.maximumf %93, %94 : vector<8x128xf32>
    %96 = vector.broadcast %0 : vector<1x128xf32> to vector<8x128xf32>
    %97 = arith.mulf %95, %96 : vector<8x128xf32>
    %98 = arith.truncf %97 : vector<8x128xf32> to vector<8x128xbf16>
    %99 = tpu.concatenate %3, %98, %3 in 1 : vector<8x11xbf16>, vector<8x128xbf16>, vector<8x11xbf16> -> vector<8x150xbf16>
    %100 = vector.extract_strided_slice %99 {offsets = [0, 0], sizes = [8, 128], strides = [1, 1]} : vector<8x150xbf16> to vector<8x128xbf16>
    %101 = vector.extract_strided_slice %99 {offsets = [0, 1], sizes = [8, 128], strides = [1, 1]} : vector<8x150xbf16> to vector<8x128xbf16>
    %102 = vector.extract_strided_slice %99 {offsets = [0, 2], sizes = [8, 128], strides = [1, 1]} : vector<8x150xbf16> to vector<8x128xbf16>
    %103 = vector.extract_strided_slice %99 {offsets = [0, 10], sizes = [8, 128], strides = [1, 1]} : vector<8x150xbf16> to vector<8x128xbf16>
    %104 = vector.extract_strided_slice %99 {offsets = [0, 11], sizes = [8, 128], strides = [1, 1]} : vector<8x150xbf16> to vector<8x128xbf16>
    %105 = vector.extract_strided_slice %99 {offsets = [0, 12], sizes = [8, 128], strides = [1, 1]} : vector<8x150xbf16> to vector<8x128xbf16>
    %106 = vector.extract_strided_slice %99 {offsets = [0, 20], sizes = [8, 128], strides = [1, 1]} : vector<8x150xbf16> to vector<8x128xbf16>
    %107 = vector.extract_strided_slice %99 {offsets = [0, 21], sizes = [8, 128], strides = [1, 1]} : vector<8x150xbf16> to vector<8x128xbf16>
    %108 = vector.extract_strided_slice %99 {offsets = [0, 22], sizes = [8, 128], strides = [1, 1]} : vector<8x150xbf16> to vector<8x128xbf16>
    %109 = tpu.concatenate %100, %101, %102, %103, %104, %105, %106, %107, %108 in 0 : vector<8x128xbf16>, vector<8x128xbf16>, vector<8x128xbf16>, vector<8x128xbf16>, vector<8x128xbf16>, vector<8x128xbf16>, vector<8x128xbf16>, vector<8x128xbf16>, vector<8x128xbf16> -> vector<72x128xbf16>
    %c0_39 = arith.constant 0 : index
    %c0_40 = arith.constant 0 : index
    %c0_41 = arith.constant 0 : index
    %110 = vector.load %arg3[%c0_39, %c0_40, %c0_41] : memref<3x8x72xbf16, #tpu.memory_space<vmem>>, vector<1x8x72xbf16>
    %111 = vector.shape_cast %110 : vector<1x8x72xbf16> to vector<8x72xbf16>
    %cst_42 = arith.constant dense<0.000000e+00> : vector<8x128xf32>
    %112 = tpu.matmul %111, %39, %cst_42 {dimension_numbers = #tpu.dot_dimension_numbers<[1], [0], [0], [1], [0, 0, 1, 1], [], []>} : vector<8x72xbf16>, vector<72x128xbf16>, vector<8x128xf32> -> vector<8x128xf32>
    %c1_43 = arith.constant 1 : index
    %c0_44 = arith.constant 0 : index
    %c0_45 = arith.constant 0 : index
    %113 = vector.load %arg3[%c1_43, %c0_44, %c0_45] : memref<3x8x72xbf16, #tpu.memory_space<vmem>>, vector<1x8x72xbf16>
    %114 = vector.shape_cast %113 : vector<1x8x72xbf16> to vector<8x72xbf16>
    %cst_46 = arith.constant dense<0.000000e+00> : vector<8x128xf32>
    %115 = tpu.matmul %114, %62, %cst_46 {dimension_numbers = #tpu.dot_dimension_numbers<[1], [0], [0], [1], [0, 0, 1, 1], [], []>} : vector<8x72xbf16>, vector<72x128xbf16>, vector<8x128xf32> -> vector<8x128xf32>
    %116 = arith.addf %112, %115 : vector<8x128xf32>
    %c2_47 = arith.constant 2 : index
    %c0_48 = arith.constant 0 : index
    %c0_49 = arith.constant 0 : index
    %117 = vector.load %arg3[%c2_47, %c0_48, %c0_49] : memref<3x8x72xbf16, #tpu.memory_space<vmem>>, vector<1x8x72xbf16>
    %118 = vector.shape_cast %117 : vector<1x8x72xbf16> to vector<8x72xbf16>
    %cst_50 = arith.constant dense<0.000000e+00> : vector<8x128xf32>
    %119 = tpu.matmul %118, %109, %cst_50 {dimension_numbers = #tpu.dot_dimension_numbers<[1], [0], [0], [1], [0, 0, 1, 1], [], []>} : vector<8x72xbf16>, vector<72x128xbf16>, vector<8x128xf32> -> vector<8x128xf32>
    %120 = arith.addf %116, %119 : vector<8x128xf32>
    %121 = vector.broadcast %0 : vector<1x128xf32> to vector<8x128xf32>
    %122 = arith.mulf %120, %121 : vector<8x128xf32>
    %cst_51 = arith.constant dense<0.000000e+00> : vector<8xf32>
    %123 = vector.multi_reduction <add>, %122, %cst_51 [1] : vector<8x128xf32> to vector<8xf32>
    %124 = vector.shape_cast %123 : vector<8xf32> to vector<8x1xf32>
    %125 = arith.addf %78, %124 : vector<8x1xf32>
    %126 = arith.mulf %122, %120 : vector<8x128xf32>
    %cst_52 = arith.constant dense<0.000000e+00> : vector<8xf32>
    %127 = vector.multi_reduction <add>, %126, %cst_52 [1] : vector<8x128xf32> to vector<8xf32>
    %128 = vector.shape_cast %127 : vector<8xf32> to vector<8x1xf32>
    %129 = arith.addf %82, %128 : vector<8x1xf32>
    %130 = arith.truncf %120 : vector<8x128xf32> to vector<8x128xbf16>
    %c0_53 = arith.constant 0 : index
    %c1_54 = arith.constant 1 : index
    %c0_55 = arith.constant 0 : index
    %c0_56 = arith.constant 0 : index
    %131 = vector.load %arg5[%c0_53, %c1_54, %c0_55, %c0_56] : memref<1x8x8x128xbf16, #tpu.memory_space<vmem>>, vector<1x1x8x128xbf16>
    %132 = vector.shape_cast %131 : vector<1x1x8x128xbf16> to vector<8x128xbf16>
    %133 = vector.shape_cast %130 : vector<8x128xbf16> to vector<1x1x8x128xbf16>
    tpu.vector_store %arg5[%c0_53, %c1_54, %c0_55, %c0_56], %133 {strides = array<i32>} : memref<1x8x8x128xbf16, #tpu.memory_space<vmem>>, vector<1x1x8x128xbf16>,
    %c0_57 = arith.constant 0 : index
    %c3 = arith.constant 3 : index
    %c0_58 = arith.constant 0 : index
    %c0_59 = arith.constant 0 : index
    %134 = vector.load %arg1[%c0_57, %c3, %c0_58, %c0_59] : memref<1x8x8x128xbf16, #tpu.memory_space<vmem>>, vector<1x1x8x128xbf16>
    %135 = vector.shape_cast %134 : vector<1x1x8x128xbf16> to vector<8x128xbf16>
    %136 = arith.extf %135 : vector<8x128xbf16> to vector<8x128xf32>
    %137 = vector.broadcast %1 : vector<8x1xf32> to vector<8x128xf32>
    %138 = arith.subf %136, %137 : vector<8x128xf32>
    %139 = vector.broadcast %2 : vector<8x1xf32> to vector<8x128xf32>
    %140 = arith.mulf %138, %139 : vector<8x128xf32>
    %cst_60 = arith.constant 0.000000e+00 : f32
    %141 = vector.broadcast %cst_60 : f32 to vector<8x128xf32>
    %142 = arith.maximumf %140, %141 : vector<8x128xf32>
    %143 = vector.broadcast %0 : vector<1x128xf32> to vector<8x128xf32>
    %144 = arith.mulf %142, %143 : vector<8x128xf32>
    %145 = arith.truncf %144 : vector<8x128xf32> to vector<8x128xbf16>
    %146 = tpu.concatenate %3, %145, %3 in 1 : vector<8x11xbf16>, vector<8x128xbf16>, vector<8x11xbf16> -> vector<8x150xbf16>
    %147 = vector.extract_strided_slice %146 {offsets = [0, 0], sizes = [8, 128], strides = [1, 1]} : vector<8x150xbf16> to vector<8x128xbf16>
    %148 = vector.extract_strided_slice %146 {offsets = [0, 1], sizes = [8, 128], strides = [1, 1]} : vector<8x150xbf16> to vector<8x128xbf16>
    %149 = vector.extract_strided_slice %146 {offsets = [0, 2], sizes = [8, 128], strides = [1, 1]} : vector<8x150xbf16> to vector<8x128xbf16>
    %150 = vector.extract_strided_slice %146 {offsets = [0, 10], sizes = [8, 128], strides = [1, 1]} : vector<8x150xbf16> to vector<8x128xbf16>
    %151 = vector.extract_strided_slice %146 {offsets = [0, 11], sizes = [8, 128], strides = [1, 1]} : vector<8x150xbf16> to vector<8x128xbf16>
    %152 = vector.extract_strided_slice %146 {offsets = [0, 12], sizes = [8, 128], strides = [1, 1]} : vector<8x150xbf16> to vector<8x128xbf16>
    %153 = vector.extract_strided_slice %146 {offsets = [0, 20], sizes = [8, 128], strides = [1, 1]} : vector<8x150xbf16> to vector<8x128xbf16>
    %154 = vector.extract_strided_slice %146 {offsets = [0, 21], sizes = [8, 128], strides = [1, 1]} : vector<8x150xbf16> to vector<8x128xbf16>
    %155 = vector.extract_strided_slice %146 {offsets = [0, 22], sizes = [8, 128], strides = [1, 1]} : vector<8x150xbf16> to vector<8x128xbf16>
    %156 = tpu.concatenate %147, %148, %149, %150, %151, %152, %153, %154, %155 in 0 : vector<8x128xbf16>, vector<8x128xbf16>, vector<8x128xbf16>, vector<8x128xbf16>, vector<8x128xbf16>, vector<8x128xbf16>, vector<8x128xbf16>, vector<8x128xbf16>, vector<8x128xbf16> -> vector<72x128xbf16>
    %c0_61 = arith.constant 0 : index
    %c0_62 = arith.constant 0 : index
    %c0_63 = arith.constant 0 : index
    %157 = vector.load %arg3[%c0_61, %c0_62, %c0_63] : memref<3x8x72xbf16, #tpu.memory_space<vmem>>, vector<1x8x72xbf16>
    %158 = vector.shape_cast %157 : vector<1x8x72xbf16> to vector<8x72xbf16>
    %cst_64 = arith.constant dense<0.000000e+00> : vector<8x128xf32>
    %159 = tpu.matmul %158, %62, %cst_64 {dimension_numbers = #tpu.dot_dimension_numbers<[1], [0], [0], [1], [0, 0, 1, 1], [], []>} : vector<8x72xbf16>, vector<72x128xbf16>, vector<8x128xf32> -> vector<8x128xf32>
    %c1_65 = arith.constant 1 : index
    %c0_66 = arith.constant 0 : index
    %c0_67 = arith.constant 0 : index
    %160 = vector.load %arg3[%c1_65, %c0_66, %c0_67] : memref<3x8x72xbf16, #tpu.memory_space<vmem>>, vector<1x8x72xbf16>
    %161 = vector.shape_cast %160 : vector<1x8x72xbf16> to vector<8x72xbf16>
    %cst_68 = arith.constant dense<0.000000e+00> : vector<8x128xf32>
    %162 = tpu.matmul %161, %109, %cst_68 {dimension_numbers = #tpu.dot_dimension_numbers<[1], [0], [0], [1], [0, 0, 1, 1], [], []>} : vector<8x72xbf16>, vector<72x128xbf16>, vector<8x128xf32> -> vector<8x128xf32>
    %163 = arith.addf %159, %162 : vector<8x128xf32>
    %c2_69 = arith.constant 2 : index
    %c0_70 = arith.constant 0 : index
    %c0_71 = arith.constant 0 : index
    %164 = vector.load %arg3[%c2_69, %c0_70, %c0_71] : memref<3x8x72xbf16, #tpu.memory_space<vmem>>, vector<1x8x72xbf16>
    %165 = vector.shape_cast %164 : vector<1x8x72xbf16> to vector<8x72xbf16>
    %cst_72 = arith.constant dense<0.000000e+00> : vector<8x128xf32>
    %166 = tpu.matmul %165, %156, %cst_72 {dimension_numbers = #tpu.dot_dimension_numbers<[1], [0], [0], [1], [0, 0, 1, 1], [], []>} : vector<8x72xbf16>, vector<72x128xbf16>, vector<8x128xf32> -> vector<8x128xf32>
    %167 = arith.addf %163, %166 : vector<8x128xf32>
    %168 = vector.broadcast %0 : vector<1x128xf32> to vector<8x128xf32>
    %169 = arith.mulf %167, %168 : vector<8x128xf32>
    %cst_73 = arith.constant dense<0.000000e+00> : vector<8xf32>
    %170 = vector.multi_reduction <add>, %169, %cst_73 [1] : vector<8x128xf32> to vector<8xf32>
    %171 = vector.shape_cast %170 : vector<8xf32> to vector<8x1xf32>
    %172 = arith.addf %125, %171 : vector<8x1xf32>
    %173 = arith.mulf %169, %167 : vector<8x128xf32>
    %cst_74 = arith.constant dense<0.000000e+00> : vector<8xf32>
    %174 = vector.multi_reduction <add>, %173, %cst_74 [1] : vector<8x128xf32> to vector<8xf32>
    %175 = vector.shape_cast %174 : vector<8xf32> to vector<8x1xf32>
    %176 = arith.addf %129, %175 : vector<8x1xf32>
    %177 = arith.truncf %167 : vector<8x128xf32> to vector<8x128xbf16>
    %c0_75 = arith.constant 0 : index
    %c2_76 = arith.constant 2 : index
    %c0_77 = arith.constant 0 : index
    %c0_78 = arith.constant 0 : index
    %178 = vector.load %arg5[%c0_75, %c2_76, %c0_77, %c0_78] : memref<1x8x8x128xbf16, #tpu.memory_space<vmem>>, vector<1x1x8x128xbf16>
    %179 = vector.shape_cast %178 : vector<1x1x8x128xbf16> to vector<8x128xbf16>
    %180 = vector.shape_cast %177 : vector<8x128xbf16> to vector<1x1x8x128xbf16>
    tpu.vector_store %arg5[%c0_75, %c2_76, %c0_77, %c0_78], %180 {strides = array<i32>} : memref<1x8x8x128xbf16, #tpu.memory_space<vmem>>, vector<1x1x8x128xbf16>,
    %c0_79 = arith.constant 0 : index
    %c4 = arith.constant 4 : index
    %c0_80 = arith.constant 0 : index
    %c0_81 = arith.constant 0 : index
    %181 = vector.load %arg1[%c0_79, %c4, %c0_80, %c0_81] : memref<1x8x8x128xbf16, #tpu.memory_space<vmem>>, vector<1x1x8x128xbf16>
    %182 = vector.shape_cast %181 : vector<1x1x8x128xbf16> to vector<8x128xbf16>
    %183 = arith.extf %182 : vector<8x128xbf16> to vector<8x128xf32>
    %184 = vector.broadcast %1 : vector<8x1xf32> to vector<8x128xf32>
    %185 = arith.subf %183, %184 : vector<8x128xf32>
    %186 = vector.broadcast %2 : vector<8x1xf32> to vector<8x128xf32>
    %187 = arith.mulf %185, %186 : vector<8x128xf32>
    %cst_82 = arith.constant 0.000000e+00 : f32
    %188 = vector.broadcast %cst_82 : f32 to vector<8x128xf32>
    %189 = arith.maximumf %187, %188 : vector<8x128xf32>
    %190 = vector.broadcast %0 : vector<1x128xf32> to vector<8x128xf32>
    %191 = arith.mulf %189, %190 : vector<8x128xf32>
    %192 = arith.truncf %191 : vector<8x128xf32> to vector<8x128xbf16>
    %193 = tpu.concatenate %3, %192, %3 in 1 : vector<8x11xbf16>, vector<8x128xbf16>, vector<8x11xbf16> -> vector<8x150xbf16>
    %194 = vector.extract_strided_slice %193 {offsets = [0, 0], sizes = [8, 128], strides = [1, 1]} : vector<8x150xbf16> to vector<8x128xbf16>
    %195 = vector.extract_strided_slice %193 {offsets = [0, 1], sizes = [8, 128], strides = [1, 1]} : vector<8x150xbf16> to vector<8x128xbf16>
    %196 = vector.extract_strided_slice %193 {offsets = [0, 2], sizes = [8, 128], strides = [1, 1]} : vector<8x150xbf16> to vector<8x128xbf16>
    %197 = vector.extract_strided_slice %193 {offsets = [0, 10], sizes = [8, 128], strides = [1, 1]} : vector<8x150xbf16> to vector<8x128xbf16>
    %198 = vector.extract_strided_slice %193 {offsets = [0, 11], sizes = [8, 128], strides = [1, 1]} : vector<8x150xbf16> to vector<8x128xbf16>
    %199 = vector.extract_strided_slice %193 {offsets = [0, 12], sizes = [8, 128], strides = [1, 1]} : vector<8x150xbf16> to vector<8x128xbf16>
    %200 = vector.extract_strided_slice %193 {offsets = [0, 20], sizes = [8, 128], strides = [1, 1]} : vector<8x150xbf16> to vector<8x128xbf16>
    %201 = vector.extract_strided_slice %193 {offsets = [0, 21], sizes = [8, 128], strides = [1, 1]} : vector<8x150xbf16> to vector<8x128xbf16>
    %202 = vector.extract_strided_slice %193 {offsets = [0, 22], sizes = [8, 128], strides = [1, 1]} : vector<8x150xbf16> to vector<8x128xbf16>
    %203 = tpu.concatenate %194, %195, %196, %197, %198, %199, %200, %201, %202 in 0 : vector<8x128xbf16>, vector<8x128xbf16>, vector<8x128xbf16>, vector<8x128xbf16>, vector<8x128xbf16>, vector<8x128xbf16>, vector<8x128xbf16>, vector<8x128xbf16>, vector<8x128xbf16> -> vector<72x128xbf16>
    %c0_83 = arith.constant 0 : index
    %c0_84 = arith.constant 0 : index
    %c0_85 = arith.constant 0 : index
    %204 = vector.load %arg3[%c0_83, %c0_84, %c0_85] : memref<3x8x72xbf16, #tpu.memory_space<vmem>>, vector<1x8x72xbf16>
    %205 = vector.shape_cast %204 : vector<1x8x72xbf16> to vector<8x72xbf16>
    %cst_86 = arith.constant dense<0.000000e+00> : vector<8x128xf32>
    %206 = tpu.matmul %205, %109, %cst_86 {dimension_numbers = #tpu.dot_dimension_numbers<[1], [0], [0], [1], [0, 0, 1, 1], [], []>} : vector<8x72xbf16>, vector<72x128xbf16>, vector<8x128xf32> -> vector<8x128xf32>
    %c1_87 = arith.constant 1 : index
    %c0_88 = arith.constant 0 : index
    %c0_89 = arith.constant 0 : index
    %207 = vector.load %arg3[%c1_87, %c0_88, %c0_89] : memref<3x8x72xbf16, #tpu.memory_space<vmem>>, vector<1x8x72xbf16>
    %208 = vector.shape_cast %207 : vector<1x8x72xbf16> to vector<8x72xbf16>
    %cst_90 = arith.constant dense<0.000000e+00> : vector<8x128xf32>
    %209 = tpu.matmul %208, %156, %cst_90 {dimension_numbers = #tpu.dot_dimension_numbers<[1], [0], [0], [1], [0, 0, 1, 1], [], []>} : vector<8x72xbf16>, vector<72x128xbf16>, vector<8x128xf32> -> vector<8x128xf32>
    %210 = arith.addf %206, %209 : vector<8x128xf32>
    %c2_91 = arith.constant 2 : index
    %c0_92 = arith.constant 0 : index
    %c0_93 = arith.constant 0 : index
    %211 = vector.load %arg3[%c2_91, %c0_92, %c0_93] : memref<3x8x72xbf16, #tpu.memory_space<vmem>>, vector<1x8x72xbf16>
    %212 = vector.shape_cast %211 : vector<1x8x72xbf16> to vector<8x72xbf16>
    %cst_94 = arith.constant dense<0.000000e+00> : vector<8x128xf32>
    %213 = tpu.matmul %212, %203, %cst_94 {dimension_numbers = #tpu.dot_dimension_numbers<[1], [0], [0], [1], [0, 0, 1, 1], [], []>} : vector<8x72xbf16>, vector<72x128xbf16>, vector<8x128xf32> -> vector<8x128xf32>
    %214 = arith.addf %210, %213 : vector<8x128xf32>
    %215 = vector.broadcast %0 : vector<1x128xf32> to vector<8x128xf32>
    %216 = arith.mulf %214, %215 : vector<8x128xf32>
    %cst_95 = arith.constant dense<0.000000e+00> : vector<8xf32>
    %217 = vector.multi_reduction <add>, %216, %cst_95 [1] : vector<8x128xf32> to vector<8xf32>
    %218 = vector.shape_cast %217 : vector<8xf32> to vector<8x1xf32>
    %219 = arith.addf %172, %218 : vector<8x1xf32>
    %220 = arith.mulf %216, %214 : vector<8x128xf32>
    %cst_96 = arith.constant dense<0.000000e+00> : vector<8xf32>
    %221 = vector.multi_reduction <add>, %220, %cst_96 [1] : vector<8x128xf32> to vector<8xf32>
    %222 = vector.shape_cast %221 : vector<8xf32> to vector<8x1xf32>
    %223 = arith.addf %176, %222 : vector<8x1xf32>
    %224 = arith.truncf %214 : vector<8x128xf32> to vector<8x128xbf16>
    %c0_97 = arith.constant 0 : index
    %c3_98 = arith.constant 3 : index
    %c0_99 = arith.constant 0 : index
    %c0_100 = arith.constant 0 : index
    %225 = vector.load %arg5[%c0_97, %c3_98, %c0_99, %c0_100] : memref<1x8x8x128xbf16, #tpu.memory_space<vmem>>, vector<1x1x8x128xbf16>
    %226 = vector.shape_cast %225 : vector<1x1x8x128xbf16> to vector<8x128xbf16>
    %227 = vector.shape_cast %224 : vector<8x128xbf16> to vector<1x1x8x128xbf16>
    tpu.vector_store %arg5[%c0_97, %c3_98, %c0_99, %c0_100], %227 {strides = array<i32>} : memref<1x8x8x128xbf16, #tpu.memory_space<vmem>>, vector<1x1x8x128xbf16>,
    %c0_101 = arith.constant 0 : index
    %c5 = arith.constant 5 : index
    %c0_102 = arith.constant 0 : index
    %c0_103 = arith.constant 0 : index
    %228 = vector.load %arg1[%c0_101, %c5, %c0_102, %c0_103] : memref<1x8x8x128xbf16, #tpu.memory_space<vmem>>, vector<1x1x8x128xbf16>
    %229 = vector.shape_cast %228 : vector<1x1x8x128xbf16> to vector<8x128xbf16>
    %230 = arith.extf %229 : vector<8x128xbf16> to vector<8x128xf32>
    %231 = vector.broadcast %1 : vector<8x1xf32> to vector<8x128xf32>
    %232 = arith.subf %230, %231 : vector<8x128xf32>
    %233 = vector.broadcast %2 : vector<8x1xf32> to vector<8x128xf32>
    %234 = arith.mulf %232, %233 : vector<8x128xf32>
    %cst_104 = arith.constant 0.000000e+00 : f32
    %235 = vector.broadcast %cst_104 : f32 to vector<8x128xf32>
    %236 = arith.maximumf %234, %235 : vector<8x128xf32>
    %237 = vector.broadcast %0 : vector<1x128xf32> to vector<8x128xf32>
    %238 = arith.mulf %236, %237 : vector<8x128xf32>
    %239 = arith.truncf %238 : vector<8x128xf32> to vector<8x128xbf16>
    %240 = tpu.concatenate %3, %239, %3 in 1 : vector<8x11xbf16>, vector<8x128xbf16>, vector<8x11xbf16> -> vector<8x150xbf16>
    %241 = vector.extract_strided_slice %240 {offsets = [0, 0], sizes = [8, 128], strides = [1, 1]} : vector<8x150xbf16> to vector<8x128xbf16>
    %242 = vector.extract_strided_slice %240 {offsets = [0, 1], sizes = [8, 128], strides = [1, 1]} : vector<8x150xbf16> to vector<8x128xbf16>
    %243 = vector.extract_strided_slice %240 {offsets = [0, 2], sizes = [8, 128], strides = [1, 1]} : vector<8x150xbf16> to vector<8x128xbf16>
    %244 = vector.extract_strided_slice %240 {offsets = [0, 10], sizes = [8, 128], strides = [1, 1]} : vector<8x150xbf16> to vector<8x128xbf16>
    %245 = vector.extract_strided_slice %240 {offsets = [0, 11], sizes = [8, 128], strides = [1, 1]} : vector<8x150xbf16> to vector<8x128xbf16>
    %246 = vector.extract_strided_slice %240 {offsets = [0, 12], sizes = [8, 128], strides = [1, 1]} : vector<8x150xbf16> to vector<8x128xbf16>
    %247 = vector.extract_strided_slice %240 {offsets = [0, 20], sizes = [8, 128], strides = [1, 1]} : vector<8x150xbf16> to vector<8x128xbf16>
    %248 = vector.extract_strided_slice %240 {offsets = [0, 21], sizes = [8, 128], strides = [1, 1]} : vector<8x150xbf16> to vector<8x128xbf16>
    %249 = vector.extract_strided_slice %240 {offsets = [0, 22], sizes = [8, 128], strides = [1, 1]} : vector<8x150xbf16> to vector<8x128xbf16>
    %250 = tpu.concatenate %241, %242, %243, %244, %245, %246, %247, %248, %249 in 0 : vector<8x128xbf16>, vector<8x128xbf16>, vector<8x128xbf16>, vector<8x128xbf16>, vector<8x128xbf16>, vector<8x128xbf16>, vector<8x128xbf16>, vector<8x128xbf16>, vector<8x128xbf16> -> vector<72x128xbf16>
    %c0_105 = arith.constant 0 : index
    %c0_106 = arith.constant 0 : index
    %c0_107 = arith.constant 0 : index
    %251 = vector.load %arg3[%c0_105, %c0_106, %c0_107] : memref<3x8x72xbf16, #tpu.memory_space<vmem>>, vector<1x8x72xbf16>
    %252 = vector.shape_cast %251 : vector<1x8x72xbf16> to vector<8x72xbf16>
    %cst_108 = arith.constant dense<0.000000e+00> : vector<8x128xf32>
    %253 = tpu.matmul %252, %156, %cst_108 {dimension_numbers = #tpu.dot_dimension_numbers<[1], [0], [0], [1], [0, 0, 1, 1], [], []>} : vector<8x72xbf16>, vector<72x128xbf16>, vector<8x128xf32> -> vector<8x128xf32>
    %c1_109 = arith.constant 1 : index
    %c0_110 = arith.constant 0 : index
    %c0_111 = arith.constant 0 : index
    %254 = vector.load %arg3[%c1_109, %c0_110, %c0_111] : memref<3x8x72xbf16, #tpu.memory_space<vmem>>, vector<1x8x72xbf16>
    %255 = vector.shape_cast %254 : vector<1x8x72xbf16> to vector<8x72xbf16>
    %cst_112 = arith.constant dense<0.000000e+00> : vector<8x128xf32>
    %256 = tpu.matmul %255, %203, %cst_112 {dimension_numbers = #tpu.dot_dimension_numbers<[1], [0], [0], [1], [0, 0, 1, 1], [], []>} : vector<8x72xbf16>, vector<72x128xbf16>, vector<8x128xf32> -> vector<8x128xf32>
    %257 = arith.addf %253, %256 : vector<8x128xf32>
    %c2_113 = arith.constant 2 : index
    %c0_114 = arith.constant 0 : index
    %c0_115 = arith.constant 0 : index
    %258 = vector.load %arg3[%c2_113, %c0_114, %c0_115] : memref<3x8x72xbf16, #tpu.memory_space<vmem>>, vector<1x8x72xbf16>
    %259 = vector.shape_cast %258 : vector<1x8x72xbf16> to vector<8x72xbf16>
    %cst_116 = arith.constant dense<0.000000e+00> : vector<8x128xf32>
    %260 = tpu.matmul %259, %250, %cst_116 {dimension_numbers = #tpu.dot_dimension_numbers<[1], [0], [0], [1], [0, 0, 1, 1], [], []>} : vector<8x72xbf16>, vector<72x128xbf16>, vector<8x128xf32> -> vector<8x128xf32>
    %261 = arith.addf %257, %260 : vector<8x128xf32>
    %262 = vector.broadcast %0 : vector<1x128xf32> to vector<8x128xf32>
    %263 = arith.mulf %261, %262 : vector<8x128xf32>
    %cst_117 = arith.constant dense<0.000000e+00> : vector<8xf32>
    %264 = vector.multi_reduction <add>, %263, %cst_117 [1] : vector<8x128xf32> to vector<8xf32>
    %265 = vector.shape_cast %264 : vector<8xf32> to vector<8x1xf32>
    %266 = arith.addf %219, %265 : vector<8x1xf32>
    %267 = arith.mulf %263, %261 : vector<8x128xf32>
    %cst_118 = arith.constant dense<0.000000e+00> : vector<8xf32>
    %268 = vector.multi_reduction <add>, %267, %cst_118 [1] : vector<8x128xf32> to vector<8xf32>
    %269 = vector.shape_cast %268 : vector<8xf32> to vector<8x1xf32>
    %270 = arith.addf %223, %269 : vector<8x1xf32>
    %271 = arith.truncf %261 : vector<8x128xf32> to vector<8x128xbf16>
    %c0_119 = arith.constant 0 : index
    %c4_120 = arith.constant 4 : index
    %c0_121 = arith.constant 0 : index
    %c0_122 = arith.constant 0 : index
    %272 = vector.load %arg5[%c0_119, %c4_120, %c0_121, %c0_122] : memref<1x8x8x128xbf16, #tpu.memory_space<vmem>>, vector<1x1x8x128xbf16>
    %273 = vector.shape_cast %272 : vector<1x1x8x128xbf16> to vector<8x128xbf16>
    %274 = vector.shape_cast %271 : vector<8x128xbf16> to vector<1x1x8x128xbf16>
    tpu.vector_store %arg5[%c0_119, %c4_120, %c0_121, %c0_122], %274 {strides = array<i32>} : memref<1x8x8x128xbf16, #tpu.memory_space<vmem>>, vector<1x1x8x128xbf16>,
    %c0_123 = arith.constant 0 : index
    %c6 = arith.constant 6 : index
    %c0_124 = arith.constant 0 : index
    %c0_125 = arith.constant 0 : index
    %275 = vector.load %arg1[%c0_123, %c6, %c0_124, %c0_125] : memref<1x8x8x128xbf16, #tpu.memory_space<vmem>>, vector<1x1x8x128xbf16>
    %276 = vector.shape_cast %275 : vector<1x1x8x128xbf16> to vector<8x128xbf16>
    %277 = arith.extf %276 : vector<8x128xbf16> to vector<8x128xf32>
    %278 = vector.broadcast %1 : vector<8x1xf32> to vector<8x128xf32>
    %279 = arith.subf %277, %278 : vector<8x128xf32>
    %280 = vector.broadcast %2 : vector<8x1xf32> to vector<8x128xf32>
    %281 = arith.mulf %279, %280 : vector<8x128xf32>
    %cst_126 = arith.constant 0.000000e+00 : f32
    %282 = vector.broadcast %cst_126 : f32 to vector<8x128xf32>
    %283 = arith.maximumf %281, %282 : vector<8x128xf32>
    %284 = vector.broadcast %0 : vector<1x128xf32> to vector<8x128xf32>
    %285 = arith.mulf %283, %284 : vector<8x128xf32>
    %286 = arith.truncf %285 : vector<8x128xf32> to vector<8x128xbf16>
    %287 = tpu.concatenate %3, %286, %3 in 1 : vector<8x11xbf16>, vector<8x128xbf16>, vector<8x11xbf16> -> vector<8x150xbf16>
    %288 = vector.extract_strided_slice %287 {offsets = [0, 0], sizes = [8, 128], strides = [1, 1]} : vector<8x150xbf16> to vector<8x128xbf16>
    %289 = vector.extract_strided_slice %287 {offsets = [0, 1], sizes = [8, 128], strides = [1, 1]} : vector<8x150xbf16> to vector<8x128xbf16>
    %290 = vector.extract_strided_slice %287 {offsets = [0, 2], sizes = [8, 128], strides = [1, 1]} : vector<8x150xbf16> to vector<8x128xbf16>
    %291 = vector.extract_strided_slice %287 {offsets = [0, 10], sizes = [8, 128], strides = [1, 1]} : vector<8x150xbf16> to vector<8x128xbf16>
    %292 = vector.extract_strided_slice %287 {offsets = [0, 11], sizes = [8, 128], strides = [1, 1]} : vector<8x150xbf16> to vector<8x128xbf16>
    %293 = vector.extract_strided_slice %287 {offsets = [0, 12], sizes = [8, 128], strides = [1, 1]} : vector<8x150xbf16> to vector<8x128xbf16>
    %294 = vector.extract_strided_slice %287 {offsets = [0, 20], sizes = [8, 128], strides = [1, 1]} : vector<8x150xbf16> to vector<8x128xbf16>
    %295 = vector.extract_strided_slice %287 {offsets = [0, 21], sizes = [8, 128], strides = [1, 1]} : vector<8x150xbf16> to vector<8x128xbf16>
    %296 = vector.extract_strided_slice %287 {offsets = [0, 22], sizes = [8, 128], strides = [1, 1]} : vector<8x150xbf16> to vector<8x128xbf16>
    %297 = tpu.concatenate %288, %289, %290, %291, %292, %293, %294, %295, %296 in 0 : vector<8x128xbf16>, vector<8x128xbf16>, vector<8x128xbf16>, vector<8x128xbf16>, vector<8x128xbf16>, vector<8x128xbf16>, vector<8x128xbf16>, vector<8x128xbf16>, vector<8x128xbf16> -> vector<72x128xbf16>
    %c0_127 = arith.constant 0 : index
    %c0_128 = arith.constant 0 : index
    %c0_129 = arith.constant 0 : index
    %298 = vector.load %arg3[%c0_127, %c0_128, %c0_129] : memref<3x8x72xbf16, #tpu.memory_space<vmem>>, vector<1x8x72xbf16>
    %299 = vector.shape_cast %298 : vector<1x8x72xbf16> to vector<8x72xbf16>
    %cst_130 = arith.constant dense<0.000000e+00> : vector<8x128xf32>
    %300 = tpu.matmul %299, %203, %cst_130 {dimension_numbers = #tpu.dot_dimension_numbers<[1], [0], [0], [1], [0, 0, 1, 1], [], []>} : vector<8x72xbf16>, vector<72x128xbf16>, vector<8x128xf32> -> vector<8x128xf32>
    %c1_131 = arith.constant 1 : index
    %c0_132 = arith.constant 0 : index
    %c0_133 = arith.constant 0 : index
    %301 = vector.load %arg3[%c1_131, %c0_132, %c0_133] : memref<3x8x72xbf16, #tpu.memory_space<vmem>>, vector<1x8x72xbf16>
    %302 = vector.shape_cast %301 : vector<1x8x72xbf16> to vector<8x72xbf16>
    %cst_134 = arith.constant dense<0.000000e+00> : vector<8x128xf32>
    %303 = tpu.matmul %302, %250, %cst_134 {dimension_numbers = #tpu.dot_dimension_numbers<[1], [0], [0], [1], [0, 0, 1, 1], [], []>} : vector<8x72xbf16>, vector<72x128xbf16>, vector<8x128xf32> -> vector<8x128xf32>
    %304 = arith.addf %300, %303 : vector<8x128xf32>
    %c2_135 = arith.constant 2 : index
    %c0_136 = arith.constant 0 : index
    %c0_137 = arith.constant 0 : index
    %305 = vector.load %arg3[%c2_135, %c0_136, %c0_137] : memref<3x8x72xbf16, #tpu.memory_space<vmem>>, vector<1x8x72xbf16>
    %306 = vector.shape_cast %305 : vector<1x8x72xbf16> to vector<8x72xbf16>
    %cst_138 = arith.constant dense<0.000000e+00> : vector<8x128xf32>
    %307 = tpu.matmul %306, %297, %cst_138 {dimension_numbers = #tpu.dot_dimension_numbers<[1], [0], [0], [1], [0, 0, 1, 1], [], []>} : vector<8x72xbf16>, vector<72x128xbf16>, vector<8x128xf32> -> vector<8x128xf32>
    %308 = arith.addf %304, %307 : vector<8x128xf32>
    %309 = vector.broadcast %0 : vector<1x128xf32> to vector<8x128xf32>
    %310 = arith.mulf %308, %309 : vector<8x128xf32>
    %cst_139 = arith.constant dense<0.000000e+00> : vector<8xf32>
    %311 = vector.multi_reduction <add>, %310, %cst_139 [1] : vector<8x128xf32> to vector<8xf32>
    %312 = vector.shape_cast %311 : vector<8xf32> to vector<8x1xf32>
    %313 = arith.addf %266, %312 : vector<8x1xf32>
    %314 = arith.mulf %310, %308 : vector<8x128xf32>
    %cst_140 = arith.constant dense<0.000000e+00> : vector<8xf32>
    %315 = vector.multi_reduction <add>, %314, %cst_140 [1] : vector<8x128xf32> to vector<8xf32>
    %316 = vector.shape_cast %315 : vector<8xf32> to vector<8x1xf32>
    %317 = arith.addf %270, %316 : vector<8x1xf32>
    %318 = arith.truncf %308 : vector<8x128xf32> to vector<8x128xbf16>
    %c0_141 = arith.constant 0 : index
    %c5_142 = arith.constant 5 : index
    %c0_143 = arith.constant 0 : index
    %c0_144 = arith.constant 0 : index
    %319 = vector.load %arg5[%c0_141, %c5_142, %c0_143, %c0_144] : memref<1x8x8x128xbf16, #tpu.memory_space<vmem>>, vector<1x1x8x128xbf16>
    %320 = vector.shape_cast %319 : vector<1x1x8x128xbf16> to vector<8x128xbf16>
    %321 = vector.shape_cast %318 : vector<8x128xbf16> to vector<1x1x8x128xbf16>
    tpu.vector_store %arg5[%c0_141, %c5_142, %c0_143, %c0_144], %321 {strides = array<i32>} : memref<1x8x8x128xbf16, #tpu.memory_space<vmem>>, vector<1x1x8x128xbf16>,
    %c0_145 = arith.constant 0 : index
    %c7 = arith.constant 7 : index
    %c0_146 = arith.constant 0 : index
    %c0_147 = arith.constant 0 : index
    %322 = vector.load %arg1[%c0_145, %c7, %c0_146, %c0_147] : memref<1x8x8x128xbf16, #tpu.memory_space<vmem>>, vector<1x1x8x128xbf16>
    %323 = vector.shape_cast %322 : vector<1x1x8x128xbf16> to vector<8x128xbf16>
    %324 = arith.extf %323 : vector<8x128xbf16> to vector<8x128xf32>
    %325 = vector.broadcast %1 : vector<8x1xf32> to vector<8x128xf32>
    %326 = arith.subf %324, %325 : vector<8x128xf32>
    %327 = vector.broadcast %2 : vector<8x1xf32> to vector<8x128xf32>
    %328 = arith.mulf %326, %327 : vector<8x128xf32>
    %cst_148 = arith.constant 0.000000e+00 : f32
    %329 = vector.broadcast %cst_148 : f32 to vector<8x128xf32>
    %330 = arith.maximumf %328, %329 : vector<8x128xf32>
    %331 = vector.broadcast %0 : vector<1x128xf32> to vector<8x128xf32>
    %332 = arith.mulf %330, %331 : vector<8x128xf32>
    %333 = arith.truncf %332 : vector<8x128xf32> to vector<8x128xbf16>
    %334 = tpu.concatenate %3, %333, %3 in 1 : vector<8x11xbf16>, vector<8x128xbf16>, vector<8x11xbf16> -> vector<8x150xbf16>
    %335 = vector.extract_strided_slice %334 {offsets = [0, 0], sizes = [8, 128], strides = [1, 1]} : vector<8x150xbf16> to vector<8x128xbf16>
    %336 = vector.extract_strided_slice %334 {offsets = [0, 1], sizes = [8, 128], strides = [1, 1]} : vector<8x150xbf16> to vector<8x128xbf16>
    %337 = vector.extract_strided_slice %334 {offsets = [0, 2], sizes = [8, 128], strides = [1, 1]} : vector<8x150xbf16> to vector<8x128xbf16>
    %338 = vector.extract_strided_slice %334 {offsets = [0, 10], sizes = [8, 128], strides = [1, 1]} : vector<8x150xbf16> to vector<8x128xbf16>
    %339 = vector.extract_strided_slice %334 {offsets = [0, 11], sizes = [8, 128], strides = [1, 1]} : vector<8x150xbf16> to vector<8x128xbf16>
    %340 = vector.extract_strided_slice %334 {offsets = [0, 12], sizes = [8, 128], strides = [1, 1]} : vector<8x150xbf16> to vector<8x128xbf16>
    %341 = vector.extract_strided_slice %334 {offsets = [0, 20], sizes = [8, 128], strides = [1, 1]} : vector<8x150xbf16> to vector<8x128xbf16>
    %342 = vector.extract_strided_slice %334 {offsets = [0, 21], sizes = [8, 128], strides = [1, 1]} : vector<8x150xbf16> to vector<8x128xbf16>
    %343 = vector.extract_strided_slice %334 {offsets = [0, 22], sizes = [8, 128], strides = [1, 1]} : vector<8x150xbf16> to vector<8x128xbf16>
    %344 = tpu.concatenate %335, %336, %337, %338, %339, %340, %341, %342, %343 in 0 : vector<8x128xbf16>, vector<8x128xbf16>, vector<8x128xbf16>, vector<8x128xbf16>, vector<8x128xbf16>, vector<8x128xbf16>, vector<8x128xbf16>, vector<8x128xbf16>, vector<8x128xbf16> -> vector<72x128xbf16>
    %c0_149 = arith.constant 0 : index
    %c0_150 = arith.constant 0 : index
    %c0_151 = arith.constant 0 : index
    %345 = vector.load %arg3[%c0_149, %c0_150, %c0_151] : memref<3x8x72xbf16, #tpu.memory_space<vmem>>, vector<1x8x72xbf16>
    %346 = vector.shape_cast %345 : vector<1x8x72xbf16> to vector<8x72xbf16>
    %cst_152 = arith.constant dense<0.000000e+00> : vector<8x128xf32>
    %347 = tpu.matmul %346, %250, %cst_152 {dimension_numbers = #tpu.dot_dimension_numbers<[1], [0], [0], [1], [0, 0, 1, 1], [], []>} : vector<8x72xbf16>, vector<72x128xbf16>, vector<8x128xf32> -> vector<8x128xf32>
    %c1_153 = arith.constant 1 : index
    %c0_154 = arith.constant 0 : index
    %c0_155 = arith.constant 0 : index
    %348 = vector.load %arg3[%c1_153, %c0_154, %c0_155] : memref<3x8x72xbf16, #tpu.memory_space<vmem>>, vector<1x8x72xbf16>
    %349 = vector.shape_cast %348 : vector<1x8x72xbf16> to vector<8x72xbf16>
    %cst_156 = arith.constant dense<0.000000e+00> : vector<8x128xf32>
    %350 = tpu.matmul %349, %297, %cst_156 {dimension_numbers = #tpu.dot_dimension_numbers<[1], [0], [0], [1], [0, 0, 1, 1], [], []>} : vector<8x72xbf16>, vector<72x128xbf16>, vector<8x128xf32> -> vector<8x128xf32>
    %351 = arith.addf %347, %350 : vector<8x128xf32>
    %c2_157 = arith.constant 2 : index
    %c0_158 = arith.constant 0 : index
    %c0_159 = arith.constant 0 : index
    %352 = vector.load %arg3[%c2_157, %c0_158, %c0_159] : memref<3x8x72xbf16, #tpu.memory_space<vmem>>, vector<1x8x72xbf16>
    %353 = vector.shape_cast %352 : vector<1x8x72xbf16> to vector<8x72xbf16>
    %cst_160 = arith.constant dense<0.000000e+00> : vector<8x128xf32>
    %354 = tpu.matmul %353, %344, %cst_160 {dimension_numbers = #tpu.dot_dimension_numbers<[1], [0], [0], [1], [0, 0, 1, 1], [], []>} : vector<8x72xbf16>, vector<72x128xbf16>, vector<8x128xf32> -> vector<8x128xf32>
    %355 = arith.addf %351, %354 : vector<8x128xf32>
    %356 = vector.broadcast %0 : vector<1x128xf32> to vector<8x128xf32>
    %357 = arith.mulf %355, %356 : vector<8x128xf32>
    %cst_161 = arith.constant dense<0.000000e+00> : vector<8xf32>
    %358 = vector.multi_reduction <add>, %357, %cst_161 [1] : vector<8x128xf32> to vector<8xf32>
    %359 = vector.shape_cast %358 : vector<8xf32> to vector<8x1xf32>
    %360 = arith.addf %313, %359 : vector<8x1xf32>
    %361 = arith.mulf %357, %355 : vector<8x128xf32>
    %cst_162 = arith.constant dense<0.000000e+00> : vector<8xf32>
    %362 = vector.multi_reduction <add>, %361, %cst_162 [1] : vector<8x128xf32> to vector<8xf32>
    %363 = vector.shape_cast %362 : vector<8xf32> to vector<8x1xf32>
    %364 = arith.addf %317, %363 : vector<8x1xf32>
    %365 = arith.truncf %355 : vector<8x128xf32> to vector<8x128xbf16>
    %c0_163 = arith.constant 0 : index
    %c6_164 = arith.constant 6 : index
    %c0_165 = arith.constant 0 : index
    %c0_166 = arith.constant 0 : index
    %366 = vector.load %arg5[%c0_163, %c6_164, %c0_165, %c0_166] : memref<1x8x8x128xbf16, #tpu.memory_space<vmem>>, vector<1x1x8x128xbf16>
    %367 = vector.shape_cast %366 : vector<1x1x8x128xbf16> to vector<8x128xbf16>
    %368 = vector.shape_cast %365 : vector<8x128xbf16> to vector<1x1x8x128xbf16>
    tpu.vector_store %arg5[%c0_163, %c6_164, %c0_165, %c0_166], %368 {strides = array<i32>} : memref<1x8x8x128xbf16, #tpu.memory_space<vmem>>, vector<1x1x8x128xbf16>,
    %cst_167 = arith.constant 0.000000e+00 : bf16
    %369 = vector.broadcast %cst_167 : bf16 to vector<8x150xbf16>
    %370 = vector.extract_strided_slice %369 {offsets = [0, 0], sizes = [8, 128], strides = [1, 1]} : vector<8x150xbf16> to vector<8x128xbf16>
    %371 = vector.extract_strided_slice %369 {offsets = [0, 1], sizes = [8, 128], strides = [1, 1]} : vector<8x150xbf16> to vector<8x128xbf16>
    %372 = vector.extract_strided_slice %369 {offsets = [0, 2], sizes = [8, 128], strides = [1, 1]} : vector<8x150xbf16> to vector<8x128xbf16>
    %373 = vector.extract_strided_slice %369 {offsets = [0, 10], sizes = [8, 128], strides = [1, 1]} : vector<8x150xbf16> to vector<8x128xbf16>
    %374 = vector.extract_strided_slice %369 {offsets = [0, 11], sizes = [8, 128], strides = [1, 1]} : vector<8x150xbf16> to vector<8x128xbf16>
    %375 = vector.extract_strided_slice %369 {offsets = [0, 12], sizes = [8, 128], strides = [1, 1]} : vector<8x150xbf16> to vector<8x128xbf16>
    %376 = vector.extract_strided_slice %369 {offsets = [0, 20], sizes = [8, 128], strides = [1, 1]} : vector<8x150xbf16> to vector<8x128xbf16>
    %377 = vector.extract_strided_slice %369 {offsets = [0, 21], sizes = [8, 128], strides = [1, 1]} : vector<8x150xbf16> to vector<8x128xbf16>
    %378 = vector.extract_strided_slice %369 {offsets = [0, 22], sizes = [8, 128], strides = [1, 1]} : vector<8x150xbf16> to vector<8x128xbf16>
    %379 = tpu.concatenate %370, %371, %372, %373, %374, %375, %376, %377, %378 in 0 : vector<8x128xbf16>, vector<8x128xbf16>, vector<8x128xbf16>, vector<8x128xbf16>, vector<8x128xbf16>, vector<8x128xbf16>, vector<8x128xbf16>, vector<8x128xbf16>, vector<8x128xbf16> -> vector<72x128xbf16>
    %c0_168 = arith.constant 0 : index
    %c0_169 = arith.constant 0 : index
    %c0_170 = arith.constant 0 : index
    %380 = vector.load %arg3[%c0_168, %c0_169, %c0_170] : memref<3x8x72xbf16, #tpu.memory_space<vmem>>, vector<1x8x72xbf16>
    %381 = vector.shape_cast %380 : vector<1x8x72xbf16> to vector<8x72xbf16>
    %cst_171 = arith.constant dense<0.000000e+00> : vector<8x128xf32>
    %382 = tpu.matmul %381, %297, %cst_171 {dimension_numbers = #tpu.dot_dimension_numbers<[1], [0], [0], [1], [0, 0, 1, 1], [], []>} : vector<8x72xbf16>, vector<72x128xbf16>, vector<8x128xf32> -> vector<8x128xf32>
    %c1_172 = arith.constant 1 : index
    %c0_173 = arith.constant 0 : index
    %c0_174 = arith.constant 0 : index
    %383 = vector.load %arg3[%c1_172, %c0_173, %c0_174] : memref<3x8x72xbf16, #tpu.memory_space<vmem>>, vector<1x8x72xbf16>
    %384 = vector.shape_cast %383 : vector<1x8x72xbf16> to vector<8x72xbf16>
    %cst_175 = arith.constant dense<0.000000e+00> : vector<8x128xf32>
    %385 = tpu.matmul %384, %344, %cst_175 {dimension_numbers = #tpu.dot_dimension_numbers<[1], [0], [0], [1], [0, 0, 1, 1], [], []>} : vector<8x72xbf16>, vector<72x128xbf16>, vector<8x128xf32> -> vector<8x128xf32>
    %386 = arith.addf %382, %385 : vector<8x128xf32>
    %c2_176 = arith.constant 2 : index
    %c0_177 = arith.constant 0 : index
    %c0_178 = arith.constant 0 : index
    %387 = vector.load %arg3[%c2_176, %c0_177, %c0_178] : memref<3x8x72xbf16, #tpu.memory_space<vmem>>, vector<1x8x72xbf16>
    %388 = vector.shape_cast %387 : vector<1x8x72xbf16> to vector<8x72xbf16>
    %cst_179 = arith.constant dense<0.000000e+00> : vector<8x128xf32>
    %389 = tpu.matmul %388, %379, %cst_179 {dimension_numbers = #tpu.dot_dimension_numbers<[1], [0], [0], [1], [0, 0, 1, 1], [], []>} : vector<8x72xbf16>, vector<72x128xbf16>, vector<8x128xf32> -> vector<8x128xf32>
    %390 = arith.addf %386, %389 : vector<8x128xf32>
    %391 = vector.broadcast %0 : vector<1x128xf32> to vector<8x128xf32>
    %392 = arith.mulf %390, %391 : vector<8x128xf32>
    %cst_180 = arith.constant dense<0.000000e+00> : vector<8xf32>
    %393 = vector.multi_reduction <add>, %392, %cst_180 [1] : vector<8x128xf32> to vector<8xf32>
    %394 = vector.shape_cast %393 : vector<8xf32> to vector<8x1xf32>
    %395 = arith.addf %360, %394 : vector<8x1xf32>
    %396 = arith.mulf %392, %390 : vector<8x128xf32>
    %cst_181 = arith.constant dense<0.000000e+00> : vector<8xf32>
    %397 = vector.multi_reduction <add>, %396, %cst_181 [1] : vector<8x128xf32> to vector<8xf32>
    %398 = vector.shape_cast %397 : vector<8xf32> to vector<8x1xf32>
    %399 = arith.addf %364, %398 : vector<8x1xf32>
    %400 = arith.truncf %390 : vector<8x128xf32> to vector<8x128xbf16>
    %c0_182 = arith.constant 0 : index
    %c7_183 = arith.constant 7 : index
    %c0_184 = arith.constant 0 : index
    %c0_185 = arith.constant 0 : index
    %401 = vector.load %arg5[%c0_182, %c7_183, %c0_184, %c0_185] : memref<1x8x8x128xbf16, #tpu.memory_space<vmem>>, vector<1x1x8x128xbf16>
    %402 = vector.shape_cast %401 : vector<1x1x8x128xbf16> to vector<8x128xbf16>
    %403 = vector.shape_cast %400 : vector<8x128xbf16> to vector<1x1x8x128xbf16>
    tpu.vector_store %arg5[%c0_182, %c7_183, %c0_184, %c0_185], %403 {strides = array<i32>} : memref<1x8x8x128xbf16, #tpu.memory_space<vmem>>, vector<1x1x8x128xbf16>,
    %404 = tpu.concatenate %395, %399 in 1 : vector<8x1xf32>, vector<8x1xf32> -> vector<8x2xf32>
    %c0_186 = arith.constant 0 : index
    %c0_187 = arith.constant 0 : index
    %c0_188 = arith.constant 0 : index
    %405 = vector.load %arg6[%c0_186, %c0_187, %c0_188] : memref<1x8x2xf32, #tpu.memory_space<vmem>>, vector<1x8x2xf32>
    %406 = vector.shape_cast %405 : vector<1x8x2xf32> to vector<8x2xf32>
    %407 = vector.shape_cast %404 : vector<8x2xf32> to vector<1x8x2xf32>
    tpu.vector_store %arg6[%c0_186, %c0_187, %c0_188], %407 {strides = array<i32>} : memref<1x8x2xf32, #tpu.memory_space<vmem>>, vector<1x8x2xf32>,
    return
  }
  func.func @transform_0(%arg0: i32) -> (i32, i32, i32, i32) {
    %c0_i32 = arith.constant 0 : i32
    %c0_i32_0 = arith.constant 0 : i32
    %c0_i32_1 = arith.constant 0 : i32
    %c0_i32_2 = arith.constant 0 : i32
    return %arg0, %c0_i32, %c0_i32_0, %c0_i32_1 : i32, i32, i32, i32
  }
  func.func @transform_1(%arg0: i32) -> (i32, i32) {
    %c0_i32 = arith.constant 0 : i32
    %c0_i32_0 = arith.constant 0 : i32
    %c0_i32_1 = arith.constant 0 : i32
    return %c0_i32, %c0_i32_0 : i32, i32
  }
  func.func @transform_2(%arg0: i32) -> (i32, i32, i32) {
    %c0_i32 = arith.constant 0 : i32
    %c0_i32_0 = arith.constant 0 : i32
    %c0_i32_1 = arith.constant 0 : i32
    %c0_i32_2 = arith.constant 0 : i32
    return %c0_i32, %c0_i32_0, %c0_i32_1 : i32, i32, i32
  }
  func.func @transform_3(%arg0: i32) -> (i32, i32) {
    %c0_i32 = arith.constant 0 : i32
    %c0_i32_0 = arith.constant 0 : i32
    %c0_i32_1 = arith.constant 0 : i32
    return %c0_i32, %c0_i32_0 : i32, i32
  }
  func.func @transform_4(%arg0: i32) -> (i32, i32, i32, i32) {
    %c0_i32 = arith.constant 0 : i32
    %c0_i32_0 = arith.constant 0 : i32
    %c0_i32_1 = arith.constant 0 : i32
    %c0_i32_2 = arith.constant 0 : i32
    return %arg0, %c0_i32, %c0_i32_0, %c0_i32_1 : i32, i32, i32, i32
  }
  func.func @transform_5(%arg0: i32) -> (i32, i32, i32) {
    %c0_i32 = arith.constant 0 : i32
    %c0_i32_0 = arith.constant 0 : i32
    %c0_i32_1 = arith.constant 0 : i32
    return %arg0, %c0_i32, %c0_i32_0 : i32, i32, i32
  }
}

</mosaic_0001>

<llo_original>
// kernel: unit_cell_double_conv.3
$region0: #{unit_cell_double_conv.3}
  #allocation0 [shape = 'u32[]', space=smem, size = 0x4, offset = 0x4, fixed_abs, tag = 'smem constant byte address 0x4 - core index']
  #allocation1 [shape = 'u32[72,128]{1,0:T(1,128)}', space=vmem, size = 0x9000, scoped, tag = 'internal scratch']
  %s0 = inlined_call_operand.vmem [shape: bf16[2,8,8,128], index: 0, kind: input, shape index: {}]
  %s1 = inlined_call_operand.vmem [shape: f32[8,2], index: 1, kind: input, shape index: {}]
  %s2 = inlined_call_operand.vmem [shape: bf16[3,8,72], index: 2, kind: input, shape index: {}]
  %s3 = inlined_call_operand.vmem [shape: f32[1,128], index: 3, kind: input, shape index: {}]
  %s4 = inlined_call_operand.vmem [shape: bf16[2,8,8,128], index: 4, kind: output, shape index: {0}]
  %s5 = inlined_call_operand.vmem [shape: f32[2,8,2], index: 5, kind: output, shape index: {1}]
  %6 = xla_tuple %s4, %s5
  %s7 = sld [smem:[#allocation0]]
  $region57: #{unit_cell_double_conv.3} parent=0
    _
  %s9 = ssub.s32 1, %s7
  %s10 = scalar_select 0, %s9, %s7
  loop: start=0, step=1, limit=4
  $region2: #{unit_cell_double_conv.3} parent=0 // loop_pre_header
    _
  $region3: #{unit_cell_double_conv.3} parent=0 // loop_header
    %s12 = sphi 0, %s16
    %p13 = scmp.ge.s32.totalorder %s12, 4
    %s22 = sphi 0, %s24
    %s25 = sphi 0, %s22
    %s26 = sphi 0, %s25
    %s42 = sphi 0, %s26
    %s46 = sphi 0, %s46
    %s48 = sphi 0, %s46
    %s49 = sphi 0, %s48
    %s63 = sphi 0, %s49
    %s67 = sphi 0, %s67
    %s69 = sphi 0, %s67
    %s70 = sphi 0, %s69
    %s84 = sphi 0, %s70
    %s88 = sphi 0, %s88
    %s90 = sphi 0, %s88
    %s91 = sphi 0, %s90
    %s105 = sphi 0, %s91
    %s111 = sphi 0, %s113
    %s114 = sphi 0, %s111
    %s115 = sphi 0, %s114
    %s131 = sphi 0, %s115
    %s137 = sphi 0, %s139
    %s140 = sphi 0, %s137
    %s141 = sphi 0, %s140
    %s157 = sphi 0, %s141
  $region4: #{unit_cell_double_conv.3} parent=0 // loop_header_branch
    %15 = sbr.rel (%p13) target = $region8
  $region5: #{unit_cell_double_conv.3} parent=0 // loop_body
    %s17 = ssub.s32 %s12, 1
    %s18 = ssub.s32 %s12, 2
    %s19 = sadd.s32 %s12, 1
    %s20 = ssub.s32 %s12, %s19
    %p21 = scmp.eq.s32.totalorder %s20, 0
    %s23 = sadd.s32 %s22, 1
    %s24 = scalar_select %p21, %s22, %s23
    %p27 = pneg %p21
    %p28 = scmp.eq.s32.totalorder %s12, 1
    %p29 = por %p27, %p28
    %p30 = scmp.ne.s32.totalorder %s22, %s25
    %p31 = scmp.eq.s32.totalorder %s12, 0
    %p32 = por %p30, %p31
    %p33 = scmp.ne.s32.totalorder %s22, %s25
    %p34 = scmp.eq.s32.totalorder %s17, 1
    %p35 = por %p33, %p34
    %p36 = scmp.ne.s32.totalorder %s25, %s26
    %p37 = scmp.eq.s32.totalorder %s17, 0
    %p38 = por %p36, %p37
    %p39 = scmp.ne.s32.totalorder %s25, %s26
    %p40 = scmp.eq.s32.totalorder %s18, 1
    %p41 = por %p39, %p40
    %p43 = scmp.ne.s32.totalorder %s26, %s42
    %p44 = scmp.eq.s32.totalorder %s18, 0
    %p45 = por %p43, %p44
    %s47 = sadd.s32 %s46, 1
    %p50 = scmp.eq.s32.totalorder %s12, 1
    %p51 = scmp.ne.s32.totalorder %s46, %s48
    %p52 = scmp.eq.s32.totalorder %s12, 0
    %p53 = por %p51, %p52
    %p54 = scmp.ne.s32.totalorder %s46, %s48
    %p55 = scmp.eq.s32.totalorder %s17, 1
    %p56 = por %p54, %p55
    %p57 = scmp.ne.s32.totalorder %s48, %s49
    %p58 = scmp.eq.s32.totalorder %s17, 0
    %p59 = por %p57, %p58
    %p60 = scmp.ne.s32.totalorder %s48, %s49
    %p61 = scmp.eq.s32.totalorder %s18, 1
    %p62 = por %p60, %p61
    %p64 = scmp.ne.s32.totalorder %s49, %s63
    %p65 = scmp.eq.s32.totalorder %s18, 0
    %p66 = por %p64, %p65
    %s68 = sadd.s32 %s67, 1
    %p71 = scmp.eq.s32.totalorder %s12, 1
    %p72 = scmp.ne.s32.totalorder %s67, %s69
    %p73 = scmp.eq.s32.totalorder %s12, 0
    %p74 = por %p72, %p73
    %p75 = scmp.ne.s32.totalorder %s67, %s69
    %p76 = scmp.eq.s32.totalorder %s17, 1
    %p77 = por %p75, %p76
    %p78 = scmp.ne.s32.totalorder %s69, %s70
    %p79 = scmp.eq.s32.totalorder %s17, 0
    %p80 = por %p78, %p79
    %p81 = scmp.ne.s32.totalorder %s69, %s70
    %p82 = scmp.eq.s32.totalorder %s18, 1
    %p83 = por %p81, %p82
    %p85 = scmp.ne.s32.totalorder %s70, %s84
    %p86 = scmp.eq.s32.totalorder %s18, 0
    %p87 = por %p85, %p86
    %s89 = sadd.s32 %s88, 1
    %p92 = scmp.eq.s32.totalorder %s12, 1
    %p93 = scmp.ne.s32.totalorder %s88, %s90
    %p94 = scmp.eq.s32.totalorder %s12, 0
    %p95 = por %p93, %p94
    %p96 = scmp.ne.s32.totalorder %s88, %s90
    %p97 = scmp.eq.s32.totalorder %s17, 1
    %p98 = por %p96, %p97
    %p99 = scmp.ne.s32.totalorder %s90, %s91
    %p100 = scmp.eq.s32.totalorder %s17, 0
    %p101 = por %p99, %p100
    %p102 = scmp.ne.s32.totalorder %s90, %s91
    %p103 = scmp.eq.s32.totalorder %s18, 1
    %p104 = por %p102, %p103
    %p106 = scmp.ne.s32.totalorder %s91, %s105
    %p107 = scmp.eq.s32.totalorder %s18, 0
    %p108 = por %p106, %p107
    %s109 = ssub.s32 %s12, %s19
    %p110 = scmp.eq.s32.totalorder %s109, 0
    %s112 = sadd.s32 %s111, 1
    %s113 = scalar_select %p110, %s111, %s112
    %p116 = pneg %p110
    %p117 = scmp.eq.s32.totalorder %s12, 1
    %p118 = por %p116, %p117
    %p119 = scmp.ne.s32.totalorder %s111, %s114
    %p120 = scmp.eq.s32.totalorder %s12, 0
    %p121 = por %p119, %p120
    %p122 = scmp.ne.s32.totalorder %s111, %s114
    %p123 = scmp.eq.s32.totalorder %s17, 1
    %p124 = por %p122, %p123
    %p125 = scmp.ne.s32.totalorder %s114, %s115
    %p126 = scmp.eq.s32.totalorder %s17, 0
    %p127 = por %p125, %p126
    %p128 = scmp.ne.s32.totalorder %s114, %s115
    %p129 = scmp.eq.s32.totalorder %s18, 1
    %p130 = por %p128, %p129
    %p132 = scmp.ne.s32.totalorder %s115, %s131
    %p133 = scmp.eq.s32.totalorder %s18, 0
    %p134 = por %p132, %p133
    %s135 = ssub.s32 %s12, %s19
    %p136 = scmp.eq.s32.totalorder %s135, 0
    %s138 = sadd.s32 %s137, 1
    %s139 = scalar_select %p136, %s137, %s138
    %p142 = pneg %p136
    %p143 = scmp.eq.s32.totalorder %s12, 1
    %p144 = por %p142, %p143
    %p145 = scmp.ne.s32.totalorder %s137, %s140
    %p146 = scmp.eq.s32.totalorder %s12, 0
    %p147 = por %p145, %p146
    %p148 = scmp.ne.s32.totalorder %s137, %s140
    %p149 = scmp.eq.s32.totalorder %s17, 1
    %p150 = por %p148, %p149
    %p151 = scmp.ne.s32.totalorder %s140, %s141
    %p152 = scmp.eq.s32.totalorder %s17, 0
    %p153 = por %p151, %p152
    %p154 = scmp.ne.s32.totalorder %s140, %s141
    %p155 = scmp.eq.s32.totalorder %s18, 1
    %p156 = por %p154, %p155
    %p158 = scmp.ne.s32.totalorder %s141, %s157
    %p159 = scmp.eq.s32.totalorder %s18, 0
    %p160 = por %p158, %p159
    %p161 = scmp.le.s32.totalorder 1, %s12
    %p162 = scmp.lt.s32.totalorder %s12, 3
    %p163 = pnand %p161, %p162
    %p164 = pneg %p163
    // Predicated region
    $region9: #{unit_cell_double_conv.3} parent=5 // pred_check
      _
    $region10: #{unit_cell_double_conv.3} parent=5 // pred_check_branch
      %166 = sbr.rel (%p163) target = $region12
    $region11: #{unit_cell_double_conv.3} parent=5 // pred_region
      %s167 = ssub.s32 %s12, 1
      // Predicated region
      $region13: #{unit_cell_double_conv.3} parent=11 // pred_check
        %p168 = pneg %p59
      $region14: #{unit_cell_double_conv.3} parent=11 // pred_check_branch
        %170 = sbr.rel (%p168) target = $region16
      $region15: #{unit_cell_double_conv.3} parent=11 // pred_region
        _
      $region16: #{unit_cell_double_conv.3} parent=11 // pred_fallthru
        _
      // Predicated region
      $region17: #{unit_cell_double_conv.3} parent=11 // pred_check
        %p171 = pneg %p80
      $region18: #{unit_cell_double_conv.3} parent=11 // pred_check_branch
        %173 = sbr.rel (%p171) target = $region20
      $region19: #{unit_cell_double_conv.3} parent=11 // pred_region
        _
      $region20: #{unit_cell_double_conv.3} parent=11 // pred_fallthru
        _
      // Predicated region
      $region21: #{unit_cell_double_conv.3} parent=11 // pred_check
        %p174 = pneg %p101
      $region22: #{unit_cell_double_conv.3} parent=11 // pred_check_branch
        %176 = sbr.rel (%p174) target = $region24
      $region23: #{unit_cell_double_conv.3} parent=11 // pred_region
        _
      $region24: #{unit_cell_double_conv.3} parent=11 // pred_fallthru
        _
    $region12: #{unit_cell_double_conv.3} parent=5 // pred_fallthru
      _
    %p177 = scmp.lt.s32.totalorder %s12, 2
    // Predicated region
    $region25: #{unit_cell_double_conv.3} parent=5 // pred_check
      %p178 = pneg %p177
    $region26: #{unit_cell_double_conv.3} parent=5 // pred_check_branch
      %180 = sbr.rel (%p178) target = $region28
    $region27: #{unit_cell_double_conv.3} parent=5 // pred_region
      // Predicated region
      $region29: #{unit_cell_double_conv.3} parent=27 // pred_check
        %p181 = pneg %p32
      $region30: #{unit_cell_double_conv.3} parent=27 // pred_check_branch
        %183 = sbr.rel (%p181) target = $region32
      $region31: #{unit_cell_double_conv.3} parent=27 // pred_region
        %p184 = scmp.lt.s32.totalorder %s12, 1
        %s185 = scalar_select %p184, %s12, 1
        %s186 = smul.addr %s185, 8
        %s187 = smul.addr %s186, 4
        %s188 = scalar_lea.vmem %s0, %s187
      $region32: #{unit_cell_double_conv.3} parent=27 // pred_fallthru
        _
    $region28: #{unit_cell_double_conv.3} parent=5 // pred_fallthru
      _
    %p189 = scmp.le.s32.totalorder 1, %s12
    %p190 = scmp.lt.s32.totalorder %s12, 3
    %p191 = pnand %p189, %p190
    %p192 = pneg %p191
    // Predicated region
    $region33: #{unit_cell_double_conv.3} parent=5 // pred_check
      _
    $region34: #{unit_cell_double_conv.3} parent=5 // pred_check_branch
      %194 = sbr.rel (%p191) target = $region36
    $region35: #{unit_cell_double_conv.3} parent=5 // pred_region
      %s195 = ssub.s32 %s12, 1
      %p196 = scmp.lt.s32.totalorder %s17, 1
      %s197 = scalar_select %p196, %s17, 1
      %s198 = smul.addr %s197, 8
      %s199 = smul.addr %s198, 4
      %s200 = scalar_lea.vmem %s0, %s199
      %p201 = pneg %p38
      %p202 = pneg %p35
      %p203 = pneg %p59
      %p204 = pneg %p56
      %p205 = pneg %p80
      %p206 = pneg %p77
      %p207 = pneg %p101
      %p208 = pneg %p98
      %p209 = pneg %p127
      %p210 = pneg %p124
      %p211 = scmp.lt.s32.totalorder %s17, 1
      %s212 = scalar_select %p211, %s17, 1
      %s213 = smul.addr %s212, 8
      %s214 = smul.addr %s213, 4
      %s215 = scalar_lea.vmem %s4, %s214
      %p216 = pneg %p153
      %p217 = pneg %p150
      %p218 = scmp.lt.s32.totalorder %s17, 1
      %s219 = scalar_select %p218, %s17, 1
      %s220 = smul.addr %s219, 8
      %s221 = scalar_lea.vmem %s5, %s220
      %p222 = scmp.lt.s32.totalorder %s17, 1
      %s223 = scalar_select %p222, %s17, 1
      %s224 = smul.addr %s223, 8
      %s225 = smul.addr %s224, 4
      %s226 = scalar_lea.vmem %s0, %s225
      %p227 = scmp.lt.s32.totalorder %s17, 1
      %s228 = scalar_select %p227, %s17, 1
      %s229 = smul.addr %s228, 8
      %s230 = smul.addr %s229, 4
      %s231 = scalar_lea.vmem %s4, %s230
      %p232 = scmp.lt.s32.totalorder %s17, 1
      %s233 = scalar_select %p232, %s17, 1
      %s234 = smul.addr %s233, 8
      %s235 = scalar_lea.vmem %s5, %s234
      %v237 = vld [vmem:[%s3] sm:$0x1]
      %v238 = vld [vmem:[%s1] sm:$0xff]
      %vm239 = vcmask 1043456
      %v242 = vld [vmem:[%s226] sm:$0xf]
      %v243 = vunpack.c.l.bf16 %v242
      %245 = vset.pattern.permute.xlu0 0
      %246 = vperm.xlu0 %245, %v238
      %v247 = vpop.permute.xlu0 %246
      %v249 = vsub.f32 %v243, %v247
      %250 = vset.pattern.permute.xlu0 1
      %251 = vperm.xlu0 %250, %v238
      %v252 = vpop.permute.xlu0 %251
      %v254 = vmul.f32 %v249, %v252
      %v255 = vmax.f32 %v254, 0.0
      %v257 = vperm.slane %v237, 0
      %v259 = vmul.f32 %v255, %v257
      %v260 = vpack.c.bf16 %v259, %v259
      %v262 = vunpack.c.l.b16 %v260
      %v263 = vpack.c.b16 %v262, %v262
      %264 = vrot.lane.b32.xlu0 %v263, 11
      %v265 = vpop.permute.xlu0 %264
      %vm266 = vcmask 89088
      %v268 = vsel %vm266, 0, %v265
      %v269 = vsel %vm266, %v265, 0
      %v272 = vrot.slane %v268, 4
      %v273 = vrot.slane %v269, 4
      %274 = vrot.lane.b32.xlu0 %v272, 127
      %v275 = vpop.permute.xlu0 %274
      %276 = vrot.lane.b32.xlu0 %v273, 127
      %v277 = vpop.permute.xlu0 %276
      %vm278 = vcmask 1039360
      %v279 = vsel %vm278, %v275, %v277
      %280 = vrot.lane.b32.xlu0 %v268, 126
      %v281 = vpop.permute.xlu0 %280
      %282 = vrot.lane.b32.xlu0 %v269, 126
      %v283 = vpop.permute.xlu0 %282
      %vm284 = vcmask 1031168
      %v285 = vsel %vm284, %v281, %v283
      %286 = vrot.lane.b32.xlu0 %v272, 118
      %v287 = vpop.permute.xlu0 %286
      %288 = vrot.lane.b32.xlu0 %v273, 118
      %v289 = vpop.permute.xlu0 %288
      %vm290 = vcmask 965632
      %v291 = vsel %vm290, %v287, %v289
      %292 = vrot.lane.b32.xlu0 %v268, 117
      %v293 = vpop.permute.xlu0 %292
      %294 = vrot.lane.b32.xlu0 %v269, 117
      %v295 = vpop.permute.xlu0 %294
      %vm296 = vcmask 957440
      %v297 = vsel %vm296, %v293, %v295
      %298 = vrot.lane.b32.xlu0 %v272, 116
      %v299 = vpop.permute.xlu0 %298
      %300 = vrot.lane.b32.xlu0 %v273, 116
      %v301 = vpop.permute.xlu0 %300
      %vm302 = vcmask 949248
      %v303 = vsel %vm302, %v299, %v301
      %304 = vrot.lane.b32.xlu0 %v268, 108
      %v305 = vpop.permute.xlu0 %304
      %306 = vrot.lane.b32.xlu0 %v269, 108
      %v307 = vpop.permute.xlu0 %306
      %vm308 = vcmask 883712
      %v309 = vsel %vm308, %v305, %v307
      %310 = vrot.lane.b32.xlu0 %v272, 107
      %v311 = vpop.permute.xlu0 %310
      %312 = vrot.lane.b32.xlu0 %v273, 107
      %v313 = vpop.permute.xlu0 %312
      %vm314 = vcmask 875520
      %v315 = vsel %vm314, %v311, %v313
      %316 = vrot.lane.b32.xlu0 %v268, 106
      %v317 = vpop.permute.xlu0 %316
      %318 = vrot.lane.b32.xlu0 %v269, 106
      %v319 = vpop.permute.xlu0 %318
      %vm320 = vcmask 867328
      %v321 = vsel %vm320, %v317, %v319
      %v323 = vsel %vm239, %v268, %v279
      %v327 = vsel %vm239, %v285, %v291
      %v331 = vsel %vm239, %v297, %v303
      %v335 = vsel %vm239, %v309, %v315
      %s337 = scalar_lea.vmem %s226, 4
      %v338 = vld [vmem:[%s337] sm:$0xf]
      %v339 = vunpack.c.l.bf16 %v338
      %v340 = vsub.f32 %v339, %v247
      %v341 = vmul.f32 %v340, %v252
      %v342 = vmax.f32 %v341, 0.0
      %v343 = vmul.f32 %v342, %v257
      %v344 = vpack.c.bf16 %v343, %v343
      %v346 = vunpack.c.l.b16 %v344
      %v347 = vpack.c.b16 %v346, %v346
      %348 = vrot.lane.b32.xlu0 %v347, 11
      %v349 = vpop.permute.xlu0 %348
      %v351 = vsel %vm266, 0, %v349
      %v352 = vsel %vm266, %v349, 0
      %v355 = vrot.slane %v351, 4
      %v356 = vrot.slane %v352, 4
      %357 = vrot.lane.b32.xlu0 %v355, 127
      %v358 = vpop.permute.xlu0 %357
      %359 = vrot.lane.b32.xlu0 %v356, 127
      %v360 = vpop.permute.xlu0 %359
      %v361 = vsel %vm278, %v358, %v360
      %362 = vrot.lane.b32.xlu0 %v351, 126
      %v363 = vpop.permute.xlu0 %362
      %364 = vrot.lane.b32.xlu0 %v352, 126
      %v365 = vpop.permute.xlu0 %364
      %v366 = vsel %vm284, %v363, %v365
      %367 = vrot.lane.b32.xlu0 %v355, 118
      %v368 = vpop.permute.xlu0 %367
      %369 = vrot.lane.b32.xlu0 %v356, 118
      %v370 = vpop.permute.xlu0 %369
      %v371 = vsel %vm290, %v368, %v370
      %372 = vrot.lane.b32.xlu0 %v351, 117
      %v373 = vpop.permute.xlu0 %372
      %374 = vrot.lane.b32.xlu0 %v352, 117
      %v375 = vpop.permute.xlu0 %374
      %v376 = vsel %vm296, %v373, %v375
      %377 = vrot.lane.b32.xlu0 %v355, 116
      %v378 = vpop.permute.xlu0 %377
      %379 = vrot.lane.b32.xlu0 %v356, 116
      %v380 = vpop.permute.xlu0 %379
      %v381 = vsel %vm302, %v378, %v380
      %382 = vrot.lane.b32.xlu0 %v351, 108
      %v383 = vpop.permute.xlu0 %382
      %384 = vrot.lane.b32.xlu0 %v352, 108
      %v385 = vpop.permute.xlu0 %384
      %v386 = vsel %vm308, %v383, %v385
      %387 = vrot.lane.b32.xlu0 %v355, 107
      %v388 = vpop.permute.xlu0 %387
      %389 = vrot.lane.b32.xlu0 %v356, 107
      %v390 = vpop.permute.xlu0 %389
      %v391 = vsel %vm314, %v388, %v390
      %392 = vrot.lane.b32.xlu0 %v351, 106
      %v393 = vpop.permute.xlu0 %392
      %394 = vrot.lane.b32.xlu0 %v352, 106
      %v395 = vpop.permute.xlu0 %394
      %v396 = vsel %vm320, %v393, %v395
      %v398 = vsel %vm239, %v351, %v361
      %v402 = vsel %vm239, %v366, %v371
      %v406 = vsel %vm239, %v376, %v381
      %v410 = vsel %vm239, %v386, %v391
      %v412 = vld [vmem:[%s2] sm:$0xf]
      %s413 = scalar_lea.vmem %s2, 4
      %v414 = vld [vmem:[%s413] sm:$0xf]
      %vm415 = vcmask 588800
      %v417 = vsel %vm415, %v414, 0
      %v420 = vsel %vm239, %v321, 0
      %422 = vmatpush.bf16.msra.mxu0 0
      %423 = vmatpush.bf16.msra.mxu0 0
      %424 = vmatpush.bf16.msra.mxu0 0
      %425 = vmatpush.bf16.msra.mxu0 %v420
      %426 = vmatpush.bf16.msra.mxu0 %v335
      %427 = vmatpush.bf16.msra.mxu0 %v331
      %428 = vmatpush.bf16.msra.mxu0 %v327
      %429 = vmatpush.bf16.msra.mxu0 %v323
      %430 = vmatmul.bf16.gmra.mxu0 %v417
      %v431 = vpop.f32.mrf.mxu0
      %v432 = vadd.f32 0.0, %v431
      %v433 = vpop.f32.mrf.mxu0
      %434 = vdwg.mxu0
      %v436 = vsel %vm415, %v412, 0
      %v438 = vsel %vm239, 0, 0
      %440 = vmatpush.bf16.msra.mxu0 0
      %441 = vmatpush.bf16.msra.mxu0 0
      %442 = vmatpush.bf16.msra.mxu0 0
      %443 = vmatpush.bf16.msra.mxu0 %v438
      %444 = vmatpush.bf16.msra.mxu0 0
      %445 = vmatpush.bf16.msra.mxu0 0
      %446 = vmatpush.bf16.msra.mxu0 0
      %447 = vmatpush.bf16.msra.mxu0 0
      %448 = vmatmul.bf16.gmra.mxu0 %v436
      %v449 = vpop.f32.mrf.mxu0
      %v450 = vadd.f32 %v432, %v449
      %v451 = vpop.f32.mrf.mxu0
      %452 = vdwg.mxu0
      %s453 = scalar_lea.vmem %s2, 8
      %v454 = vld [vmem:[%s453] sm:$0xf]
      %v456 = vsel %vm415, %v454, 0
      %v459 = vsel %vm239, %v396, 0
      %461 = vmatpush.bf16.msra.mxu0 0
      %462 = vmatpush.bf16.msra.mxu0 0
      %463 = vmatpush.bf16.msra.mxu0 0
      %464 = vmatpush.bf16.msra.mxu0 %v459
      %465 = vmatpush.bf16.msra.mxu0 %v410
      %466 = vmatpush.bf16.msra.mxu0 %v406
      %467 = vmatpush.bf16.msra.mxu0 %v402
      %468 = vmatpush.bf16.msra.mxu0 %v398
      %469 = vmatmul.bf16.gmra.mxu0 %v456
      %v470 = vpop.f32.mrf.mxu0
      %v471 = vadd.f32 0.0, %v470
      %v472 = vpop.f32.mrf.mxu0
      %473 = vdwg.mxu0
      %v474 = vadd.f32 %v450, %v471
      %v475 = vmul.f32 %v474, %v257
      %476 = vadd.xlane.f32.xlu0 %v475
      %v477 = vpop.xlane.xlu0 %476
      %v478 = vadd.f32 %v477, 0.0
      %v479 = vmul.f32 %v475, %v474
      %480 = vadd.xlane.f32.xlu0 %v479
      %v481 = vpop.xlane.xlu0 %480
      %v482 = vadd.f32 %v481, 0.0
      %v483 = vpack.c.bf16 %v474, %v474
      %484 = vst [vmem:[%s231] sm:$0xf] %v483
      %s485 = scalar_lea.vmem %s226, 8
      %v486 = vld [vmem:[%s485] sm:$0xf]
      %v487 = vunpack.c.l.bf16 %v486
      %v488 = vsub.f32 %v487, %v247
      %v489 = vmul.f32 %v488, %v252
      %v490 = vmax.f32 %v489, 0.0
      %v491 = vmul.f32 %v490, %v257
      %v492 = vpack.c.bf16 %v491, %v491
      %v494 = vunpack.c.l.b16 %v492
      %v495 = vpack.c.b16 %v494, %v494
      %496 = vrot.lane.b32.xlu0 %v495, 11
      %v497 = vpop.permute.xlu0 %496
      %v499 = vsel %vm266, 0, %v497
      %v500 = vsel %vm266, %v497, 0
      %v503 = vrot.slane %v499, 4
      %v504 = vrot.slane %v500, 4
      %505 = vrot.lane.b32.xlu0 %v503, 127
      %v506 = vpop.permute.xlu0 %505
      %507 = vrot.lane.b32.xlu0 %v504, 127
      %v508 = vpop.permute.xlu0 %507
      %v509 = vsel %vm278, %v506, %v508
      %510 = vrot.lane.b32.xlu0 %v499, 126
      %v511 = vpop.permute.xlu0 %510
      %512 = vrot.lane.b32.xlu0 %v500, 126
      %v513 = vpop.permute.xlu0 %512
      %v514 = vsel %vm284, %v511, %v513
      %515 = vrot.lane.b32.xlu0 %v503, 118
      %v516 = vpop.permute.xlu0 %515
      %517 = vrot.lane.b32.xlu0 %v504, 118
      %v518 = vpop.permute.xlu0 %517
      %v519 = vsel %vm290, %v516, %v518
      %520 = vrot.lane.b32.xlu0 %v499, 117
      %v521 = vpop.permute.xlu0 %520
      %522 = vrot.lane.b32.xlu0 %v500, 117
      %v523 = vpop.permute.xlu0 %522
      %v524 = vsel %vm296, %v521, %v523
      %525 = vrot.lane.b32.xlu0 %v503, 116
      %v526 = vpop.permute.xlu0 %525
      %527 = vrot.lane.b32.xlu0 %v504, 116
      %v528 = vpop.permute.xlu0 %527
      %v529 = vsel %vm302, %v526, %v528
      %530 = vrot.lane.b32.xlu0 %v499, 108
      %v531 = vpop.permute.xlu0 %530
      %532 = vrot.lane.b32.xlu0 %v500, 108
      %v533 = vpop.permute.xlu0 %532
      %v534 = vsel %vm308, %v531, %v533
      %535 = vrot.lane.b32.xlu0 %v503, 107
      %v536 = vpop.permute.xlu0 %535
      %537 = vrot.lane.b32.xlu0 %v504, 107
      %v538 = vpop.permute.xlu0 %537
      %v539 = vsel %vm314, %v536, %v538
      %540 = vrot.lane.b32.xlu0 %v499, 106
      %v541 = vpop.permute.xlu0 %540
      %542 = vrot.lane.b32.xlu0 %v500, 106
      %v543 = vpop.permute.xlu0 %542
      %v544 = vsel %vm320, %v541, %v543
      %v546 = vsel %vm239, %v499, %v509
      %v550 = vsel %vm239, %v514, %v519
      %v554 = vsel %vm239, %v524, %v529
      %v558 = vsel %vm239, %v534, %v539
      %v560 = vld [vmem:[%s2] sm:$0xf]
      %v561 = vld [vmem:[%s413] sm:$0xf]
      %v563 = vsel %vm415, %v561, 0
      %565 = vmatpush.bf16.msra.mxu0 0
      %566 = vmatpush.bf16.msra.mxu0 0
      %567 = vmatpush.bf16.msra.mxu0 0
      %568 = vmatpush.bf16.msra.mxu0 %v459
      %569 = vmatpush.bf16.msra.mxu0 %v410
      %570 = vmatpush.bf16.msra.mxu0 %v406
      %571 = vmatpush.bf16.msra.mxu0 %v402
      %572 = vmatpush.bf16.msra.mxu0 %v398
      %573 = vmatmul.bf16.gmra.mxu0 %v563
      %v574 = vpop.f32.mrf.mxu0
      %v575 = vadd.f32 0.0, %v574
      %v576 = vpop.f32.mrf.mxu0
      %577 = vdwg.mxu0
      %v579 = vsel %vm415, %v560, 0
      %581 = vmatpush.bf16.msra.mxu0 0
      %582 = vmatpush.bf16.msra.mxu0 0
      %583 = vmatpush.bf16.msra.mxu0 0
      %584 = vmatpush.bf16.msra.mxu0 %v420
      %585 = vmatpush.bf16.msra.mxu0 %v335
      %586 = vmatpush.bf16.msra.mxu0 %v331
      %587 = vmatpush.bf16.msra.mxu0 %v327
      %588 = vmatpush.bf16.msra.mxu0 %v323
      %589 = vmatmul.bf16.gmra.mxu0 %v579
      %v590 = vpop.f32.mrf.mxu0
      %v591 = vadd.f32 %v575, %v590
      %v592 = vpop.f32.mrf.mxu0
      %593 = vdwg.mxu0
      %v594 = vld [vmem:[%s453] sm:$0xf]
      %v596 = vsel %vm415, %v594, 0
      %v599 = vsel %vm239, %v544, 0
      %601 = vmatpush.bf16.msra.mxu0 0
      %602 = vmatpush.bf16.msra.mxu0 0
      %603 = vmatpush.bf16.msra.mxu0 0
      %604 = vmatpush.bf16.msra.mxu0 %v599
      %605 = vmatpush.bf16.msra.mxu0 %v558
      %606 = vmatpush.bf16.msra.mxu0 %v554
      %607 = vmatpush.bf16.msra.mxu0 %v550
      %608 = vmatpush.bf16.msra.mxu0 %v546
      %609 = vmatmul.bf16.gmra.mxu0 %v596
      %v610 = vpop.f32.mrf.mxu0
      %v611 = vadd.f32 0.0, %v610
      %v612 = vpop.f32.mrf.mxu0
      %613 = vdwg.mxu0
      %v614 = vadd.f32 %v591, %v611
      %v615 = vmul.f32 %v614, %v257
      %616 = vadd.xlane.f32.xlu0 %v615
      %v617 = vpop.xlane.xlu0 %616
      %v618 = vadd.f32 %v478, %v617
      %v619 = vmul.f32 %v615, %v614
      %620 = vadd.xlane.f32.xlu0 %v619
      %v621 = vpop.xlane.xlu0 %620
      %v622 = vadd.f32 %v482, %v621
      %v623 = vpack.c.bf16 %v614, %v614
      %s624 = scalar_lea.vmem %s231, 4
      %625 = vst [vmem:[%s624] sm:$0xf] %v623
      %s626 = scalar_lea.vmem %s226, 12
      %v627 = vld [vmem:[%s626] sm:$0xf]
      %v628 = vunpack.c.l.bf16 %v627
      %v629 = vsub.f32 %v628, %v247
      %v630 = vmul.f32 %v629, %v252
      %v631 = vmax.f32 %v630, 0.0
      %v632 = vmul.f32 %v631, %v257
      %v633 = vpack.c.bf16 %v632, %v632
      %v635 = vunpack.c.l.b16 %v633
      %v636 = vpack.c.b16 %v635, %v635
      %637 = vrot.lane.b32.xlu0 %v636, 11
      %v638 = vpop.permute.xlu0 %637
      %v640 = vsel %vm266, 0, %v638
      %v641 = vsel %vm266, %v638, 0
      %v644 = vrot.slane %v640, 4
      %v645 = vrot.slane %v641, 4
      %646 = vrot.lane.b32.xlu0 %v644, 127
      %v647 = vpop.permute.xlu0 %646
      %648 = vrot.lane.b32.xlu0 %v645, 127
      %v649 = vpop.permute.xlu0 %648
      %v650 = vsel %vm278, %v647, %v649
      %651 = vrot.lane.b32.xlu0 %v640, 126
      %v652 = vpop.permute.xlu0 %651
      %653 = vrot.lane.b32.xlu0 %v641, 126
      %v654 = vpop.permute.xlu0 %653
      %v655 = vsel %vm284, %v652, %v654
      %656 = vrot.lane.b32.xlu0 %v644, 118
      %v657 = vpop.permute.xlu0 %656
      %658 = vrot.lane.b32.xlu0 %v645, 118
      %v659 = vpop.permute.xlu0 %658
      %v660 = vsel %vm290, %v657, %v659
      %661 = vrot.lane.b32.xlu0 %v640, 117
      %v662 = vpop.permute.xlu0 %661
      %663 = vrot.lane.b32.xlu0 %v641, 117
      %v664 = vpop.permute.xlu0 %663
      %v665 = vsel %vm296, %v662, %v664
      %666 = vrot.lane.b32.xlu0 %v644, 116
      %v667 = vpop.permute.xlu0 %666
      %668 = vrot.lane.b32.xlu0 %v645, 116
      %v669 = vpop.permute.xlu0 %668
      %v670 = vsel %vm302, %v667, %v669
      %671 = vrot.lane.b32.xlu0 %v640, 108
      %v672 = vpop.permute.xlu0 %671
      %673 = vrot.lane.b32.xlu0 %v641, 108
      %v674 = vpop.permute.xlu0 %673
      %v675 = vsel %vm308, %v672, %v674
      %676 = vrot.lane.b32.xlu0 %v644, 107
      %v677 = vpop.permute.xlu0 %676
      %678 = vrot.lane.b32.xlu0 %v645, 107
      %v679 = vpop.permute.xlu0 %678
      %v680 = vsel %vm314, %v677, %v679
      %681 = vrot.lane.b32.xlu0 %v640, 106
      %v682 = vpop.permute.xlu0 %681
      %683 = vrot.lane.b32.xlu0 %v641, 106
      %v684 = vpop.permute.xlu0 %683
      %v685 = vsel %vm320, %v682, %v684
      %v687 = vsel %vm239, %v640, %v650
      %v691 = vsel %vm239, %v655, %v660
      %v695 = vsel %vm239, %v665, %v670
      %v699 = vsel %vm239, %v675, %v680
      %v701 = vld [vmem:[%s2] sm:$0xf]
      %v702 = vld [vmem:[%s413] sm:$0xf]
      %v704 = vsel %vm415, %v702, 0
      %706 = vmatpush.bf16.msra.mxu0 0
      %707 = vmatpush.bf16.msra.mxu0 0
      %708 = vmatpush.bf16.msra.mxu0 0
      %709 = vmatpush.bf16.msra.mxu0 %v599
      %710 = vmatpush.bf16.msra.mxu0 %v558
      %711 = vmatpush.bf16.msra.mxu0 %v554
      %712 = vmatpush.bf16.msra.mxu0 %v550
      %713 = vmatpush.bf16.msra.mxu0 %v546
      %714 = vmatmul.bf16.gmra.mxu0 %v704
      %v715 = vpop.f32.mrf.mxu0
      %v716 = vadd.f32 0.0, %v715
      %v717 = vpop.f32.mrf.mxu0
      %718 = vdwg.mxu0
      %v720 = vsel %vm415, %v701, 0
      %722 = vmatpush.bf16.msra.mxu0 0
      %723 = vmatpush.bf16.msra.mxu0 0
      %724 = vmatpush.bf16.msra.mxu0 0
      %725 = vmatpush.bf16.msra.mxu0 %v459
      %726 = vmatpush.bf16.msra.mxu0 %v410
      %727 = vmatpush.bf16.msra.mxu0 %v406
      %728 = vmatpush.bf16.msra.mxu0 %v402
      %729 = vmatpush.bf16.msra.mxu0 %v398
      %730 = vmatmul.bf16.gmra.mxu0 %v720
      %v731 = vpop.f32.mrf.mxu0
      %v732 = vadd.f32 %v716, %v731
      %v733 = vpop.f32.mrf.mxu0
      %734 = vdwg.mxu0
      %v735 = vld [vmem:[%s453] sm:$0xf]
      %v737 = vsel %vm415, %v735, 0
      %v740 = vsel %vm239, %v685, 0
      %742 = vmatpush.bf16.msra.mxu0 0
      %743 = vmatpush.bf16.msra.mxu0 0
      %744 = vmatpush.bf16.msra.mxu0 0
      %745 = vmatpush.bf16.msra.mxu0 %v740
      %746 = vmatpush.bf16.msra.mxu0 %v699
      %747 = vmatpush.bf16.msra.mxu0 %v695
      %748 = vmatpush.bf16.msra.mxu0 %v691
      %749 = vmatpush.bf16.msra.mxu0 %v687
      %750 = vmatmul.bf16.gmra.mxu0 %v737
      %v751 = vpop.f32.mrf.mxu0
      %v752 = vadd.f32 0.0, %v751
      %v753 = vpop.f32.mrf.mxu0
      %754 = vdwg.mxu0
      %v755 = vadd.f32 %v732, %v752
      %v756 = vmul.f32 %v755, %v257
      %757 = vadd.xlane.f32.xlu0 %v756
      %v758 = vpop.xlane.xlu0 %757
      %v759 = vadd.f32 %v618, %v758
      %v760 = vmul.f32 %v756, %v755
      %761 = vadd.xlane.f32.xlu0 %v760
      %v762 = vpop.xlane.xlu0 %761
      %v763 = vadd.f32 %v622, %v762
      %v764 = vpack.c.bf16 %v755, %v755
      %s765 = scalar_lea.vmem %s231, 8
      %766 = vst [vmem:[%s765] sm:$0xf] %v764
      %s767 = scalar_lea.vmem %s226, 16
      %v768 = vld [vmem:[%s767] sm:$0xf]
      %v769 = vunpack.c.l.bf16 %v768
      %v770 = vsub.f32 %v769, %v247
      %v771 = vmul.f32 %v770, %v252
      %v772 = vmax.f32 %v771, 0.0
      %v773 = vmul.f32 %v772, %v257
      %v774 = vpack.c.bf16 %v773, %v773
      %v776 = vunpack.c.l.b16 %v774
      %v777 = vpack.c.b16 %v776, %v776
      %778 = vrot.lane.b32.xlu0 %v777, 11
      %v779 = vpop.permute.xlu0 %778
      %v781 = vsel %vm266, 0, %v779
      %v782 = vsel %vm266, %v779, 0
      %v785 = vrot.slane %v781, 4
      %v786 = vrot.slane %v782, 4
      %787 = vrot.lane.b32.xlu0 %v785, 127
      %v788 = vpop.permute.xlu0 %787
      %789 = vrot.lane.b32.xlu0 %v786, 127
      %v790 = vpop.permute.xlu0 %789
      %v791 = vsel %vm278, %v788, %v790
      %792 = vrot.lane.b32.xlu0 %v781, 126
      %v793 = vpop.permute.xlu0 %792
      %794 = vrot.lane.b32.xlu0 %v782, 126
      %v795 = vpop.permute.xlu0 %794
      %v796 = vsel %vm284, %v793, %v795
      %797 = vrot.lane.b32.xlu0 %v785, 118
      %v798 = vpop.permute.xlu0 %797
      %799 = vrot.lane.b32.xlu0 %v786, 118
      %v800 = vpop.permute.xlu0 %799
      %v801 = vsel %vm290, %v798, %v800
      %802 = vrot.lane.b32.xlu0 %v781, 117
      %v803 = vpop.permute.xlu0 %802
      %804 = vrot.lane.b32.xlu0 %v782, 117
      %v805 = vpop.permute.xlu0 %804
      %v806 = vsel %vm296, %v803, %v805
      %807 = vrot.lane.b32.xlu0 %v785, 116
      %v808 = vpop.permute.xlu0 %807
      %809 = vrot.lane.b32.xlu0 %v786, 116
      %v810 = vpop.permute.xlu0 %809
      %v811 = vsel %vm302, %v808, %v810
      %812 = vrot.lane.b32.xlu0 %v781, 108
      %v813 = vpop.permute.xlu0 %812
      %814 = vrot.lane.b32.xlu0 %v782, 108
      %v815 = vpop.permute.xlu0 %814
      %v816 = vsel %vm308, %v813, %v815
      %817 = vrot.lane.b32.xlu0 %v785, 107
      %v818 = vpop.permute.xlu0 %817
      %819 = vrot.lane.b32.xlu0 %v786, 107
      %v820 = vpop.permute.xlu0 %819
      %v821 = vsel %vm314, %v818, %v820
      %822 = vrot.lane.b32.xlu0 %v781, 106
      %v823 = vpop.permute.xlu0 %822
      %824 = vrot.lane.b32.xlu0 %v782, 106
      %v825 = vpop.permute.xlu0 %824
      %v826 = vsel %vm320, %v823, %v825
      %v828 = vsel %vm239, %v781, %v791
      %v832 = vsel %vm239, %v796, %v801
      %v836 = vsel %vm239, %v806, %v811
      %v840 = vsel %vm239, %v816, %v821
      %v842 = vld [vmem:[%s2] sm:$0xf]
      %v843 = vld [vmem:[%s413] sm:$0xf]
      %v845 = vsel %vm415, %v843, 0
      %847 = vmatpush.bf16.msra.mxu0 0
      %848 = vmatpush.bf16.msra.mxu0 0
      %849 = vmatpush.bf16.msra.mxu0 0
      %850 = vmatpush.bf16.msra.mxu0 %v740
      %851 = vmatpush.bf16.msra.mxu0 %v699
      %852 = vmatpush.bf16.msra.mxu0 %v695
      %853 = vmatpush.bf16.msra.mxu0 %v691
      %854 = vmatpush.bf16.msra.mxu0 %v687
      %855 = vmatmul.bf16.gmra.mxu0 %v845
      %v856 = vpop.f32.mrf.mxu0
      %v857 = vadd.f32 0.0, %v856
      %v858 = vpop.f32.mrf.mxu0
      %859 = vdwg.mxu0
      %v861 = vsel %vm415, %v842, 0
      %863 = vmatpush.bf16.msra.mxu0 0
      %864 = vmatpush.bf16.msra.mxu0 0
      %865 = vmatpush.bf16.msra.mxu0 0
      %866 = vmatpush.bf16.msra.mxu0 %v599
      %867 = vmatpush.bf16.msra.mxu0 %v558
      %868 = vmatpush.bf16.msra.mxu0 %v554
      %869 = vmatpush.bf16.msra.mxu0 %v550
      %870 = vmatpush.bf16.msra.mxu0 %v546
      %871 = vmatmul.bf16.gmra.mxu0 %v861
      %v872 = vpop.f32.mrf.mxu0
      %v873 = vadd.f32 %v857, %v872
      %v874 = vpop.f32.mrf.mxu0
      %875 = vdwg.mxu0
      %v876 = vld [vmem:[%s453] sm:$0xf]
      %v878 = vsel %vm415, %v876, 0
      %v881 = vsel %vm239, %v826, 0
      %883 = vmatpush.bf16.msra.mxu0 0
      %884 = vmatpush.bf16.msra.mxu0 0
      %885 = vmatpush.bf16.msra.mxu0 0
      %886 = vmatpush.bf16.msra.mxu0 %v881
      %887 = vmatpush.bf16.msra.mxu0 %v840
      %888 = vmatpush.bf16.msra.mxu0 %v836
      %889 = vmatpush.bf16.msra.mxu0 %v832
      %890 = vmatpush.bf16.msra.mxu0 %v828
      %891 = vmatmul.bf16.gmra.mxu0 %v878
      %v892 = vpop.f32.mrf.mxu0
      %v893 = vadd.f32 0.0, %v892
      %v894 = vpop.f32.mrf.mxu0
      %895 = vdwg.mxu0
      %v896 = vadd.f32 %v873, %v893
      %v897 = vmul.f32 %v896, %v257
      %898 = vadd.xlane.f32.xlu0 %v897
      %v899 = vpop.xlane.xlu0 %898
      %v900 = vadd.f32 %v759, %v899
      %v901 = vmul.f32 %v897, %v896
      %902 = vadd.xlane.f32.xlu0 %v901
      %v903 = vpop.xlane.xlu0 %902
      %v904 = vadd.f32 %v763, %v903
      %v905 = vpack.c.bf16 %v896, %v896
      %s906 = scalar_lea.vmem %s231, 12
      %907 = vst [vmem:[%s906] sm:$0xf] %v905
      %s908 = scalar_lea.vmem %s226, 20
      %v909 = vld [vmem:[%s908] sm:$0xf]
      %v910 = vunpack.c.l.bf16 %v909
      %v911 = vsub.f32 %v910, %v247
      %v912 = vmul.f32 %v911, %v252
      %v913 = vmax.f32 %v912, 0.0
      %v914 = vmul.f32 %v913, %v257
      %v915 = vpack.c.bf16 %v914, %v914
      %v917 = vunpack.c.l.b16 %v915
      %v918 = vpack.c.b16 %v917, %v917
      %919 = vrot.lane.b32.xlu0 %v918, 11
      %v920 = vpop.permute.xlu0 %919
      %v922 = vsel %vm266, 0, %v920
      %v923 = vsel %vm266, %v920, 0
      %v926 = vrot.slane %v922, 4
      %v927 = vrot.slane %v923, 4
      %928 = vrot.lane.b32.xlu0 %v926, 127
      %v929 = vpop.permute.xlu0 %928
      %930 = vrot.lane.b32.xlu0 %v927, 127
      %v931 = vpop.permute.xlu0 %930
      %v932 = vsel %vm278, %v929, %v931
      %933 = vrot.lane.b32.xlu0 %v922, 126
      %v934 = vpop.permute.xlu0 %933
      %935 = vrot.lane.b32.xlu0 %v923, 126
      %v936 = vpop.permute.xlu0 %935
      %v937 = vsel %vm284, %v934, %v936
      %938 = vrot.lane.b32.xlu0 %v926, 118
      %v939 = vpop.permute.xlu0 %938
      %940 = vrot.lane.b32.xlu0 %v927, 118
      %v941 = vpop.permute.xlu0 %940
      %v942 = vsel %vm290, %v939, %v941
      %943 = vrot.lane.b32.xlu0 %v922, 117
      %v944 = vpop.permute.xlu0 %943
      %945 = vrot.lane.b32.xlu0 %v923, 117
      %v946 = vpop.permute.xlu0 %945
      %v947 = vsel %vm296, %v944, %v946
      %948 = vrot.lane.b32.xlu0 %v926, 116
      %v949 = vpop.permute.xlu0 %948
      %950 = vrot.lane.b32.xlu0 %v927, 116
      %v951 = vpop.permute.xlu0 %950
      %v952 = vsel %vm302, %v949, %v951
      %953 = vrot.lane.b32.xlu0 %v922, 108
      %v954 = vpop.permute.xlu0 %953
      %955 = vrot.lane.b32.xlu0 %v923, 108
      %v956 = vpop.permute.xlu0 %955
      %v957 = vsel %vm308, %v954, %v956
      %958 = vrot.lane.b32.xlu0 %v926, 107
      %v959 = vpop.permute.xlu0 %958
      %960 = vrot.lane.b32.xlu0 %v927, 107
      %v961 = vpop.permute.xlu0 %960
      %v962 = vsel %vm314, %v959, %v961
      %963 = vrot.lane.b32.xlu0 %v922, 106
      %v964 = vpop.permute.xlu0 %963
      %965 = vrot.lane.b32.xlu0 %v923, 106
      %v966 = vpop.permute.xlu0 %965
      %v967 = vsel %vm320, %v964, %v966
      %v969 = vsel %vm239, %v922, %v932
      %v973 = vsel %vm239, %v937, %v942
      %v977 = vsel %vm239, %v947, %v952
      %v981 = vsel %vm239, %v957, %v962
      %v983 = vld [vmem:[%s2] sm:$0xf]
      %v984 = vld [vmem:[%s413] sm:$0xf]
      %v986 = vsel %vm415, %v984, 0
      %988 = vmatpush.bf16.msra.mxu0 0
      %989 = vmatpush.bf16.msra.mxu0 0
      %990 = vmatpush.bf16.msra.mxu0 0
      %991 = vmatpush.bf16.msra.mxu0 %v881
      %992 = vmatpush.bf16.msra.mxu0 %v840
      %993 = vmatpush.bf16.msra.mxu0 %v836
      %994 = vmatpush.bf16.msra.mxu0 %v832
      %995 = vmatpush.bf16.msra.mxu0 %v828
      %996 = vmatmul.bf16.gmra.mxu0 %v986
      %v997 = vpop.f32.mrf.mxu0
      %v998 = vadd.f32 0.0, %v997
      %v999 = vpop.f32.mrf.mxu0
      %1000 = vdwg.mxu0
      %v1002 = vsel %vm415, %v983, 0
      %1004 = vmatpush.bf16.msra.mxu0 0
      %1005 = vmatpush.bf16.msra.mxu0 0
      %1006 = vmatpush.bf16.msra.mxu0 0
      %1007 = vmatpush.bf16.msra.mxu0 %v740
      %1008 = vmatpush.bf16.msra.mxu0 %v699
      %1009 = vmatpush.bf16.msra.mxu0 %v695
      %1010 = vmatpush.bf16.msra.mxu0 %v691
      %1011 = vmatpush.bf16.msra.mxu0 %v687
      %1012 = vmatmul.bf16.gmra.mxu0 %v1002
      %v1013 = vpop.f32.mrf.mxu0
      %v1014 = vadd.f32 %v998, %v1013
      %v1015 = vpop.f32.mrf.mxu0
      %1016 = vdwg.mxu0
      %v1017 = vld [vmem:[%s453] sm:$0xf]
      %v1019 = vsel %vm415, %v1017, 0
      %v1022 = vsel %vm239, %v967, 0
      %1024 = vmatpush.bf16.msra.mxu0 0
      %1025 = vmatpush.bf16.msra.mxu0 0
      %1026 = vmatpush.bf16.msra.mxu0 0
      %1027 = vmatpush.bf16.msra.mxu0 %v1022
      %1028 = vmatpush.bf16.msra.mxu0 %v981
      %1029 = vmatpush.bf16.msra.mxu0 %v977
      %1030 = vmatpush.bf16.msra.mxu0 %v973
      %1031 = vmatpush.bf16.msra.mxu0 %v969
      %1032 = vmatmul.bf16.gmra.mxu0 %v1019
      %v1033 = vpop.f32.mrf.mxu0
      %v1034 = vadd.f32 0.0, %v1033
      %v1035 = vpop.f32.mrf.mxu0
      %1036 = vdwg.mxu0
      %v1037 = vadd.f32 %v1014, %v1034
      %v1038 = vmul.f32 %v1037, %v257
      %1039 = vadd.xlane.f32.xlu0 %v1038
      %v1040 = vpop.xlane.xlu0 %1039
      %v1041 = vadd.f32 %v900, %v1040
      %v1042 = vmul.f32 %v1038, %v1037
      %1043 = vadd.xlane.f32.xlu0 %v1042
      %v1044 = vpop.xlane.xlu0 %1043
      %v1045 = vadd.f32 %v904, %v1044
      %v1046 = vpack.c.bf16 %v1037, %v1037
      %s1047 = scalar_lea.vmem %s231, 16
      %1048 = vst [vmem:[%s1047] sm:$0xf] %v1046
      %s1049 = scalar_lea.vmem %s226, 24
      %v1050 = vld [vmem:[%s1049] sm:$0xf]
      %v1051 = vunpack.c.l.bf16 %v1050
      %v1052 = vsub.f32 %v1051, %v247
      %v1053 = vmul.f32 %v1052, %v252
      %v1054 = vmax.f32 %v1053, 0.0
      %v1055 = vmul.f32 %v1054, %v257
      %v1056 = vpack.c.bf16 %v1055, %v1055
      %v1058 = vunpack.c.l.b16 %v1056
      %v1059 = vpack.c.b16 %v1058, %v1058
      %1060 = vrot.lane.b32.xlu0 %v1059, 11
      %v1061 = vpop.permute.xlu0 %1060
      %v1063 = vsel %vm266, 0, %v1061
      %v1064 = vsel %vm266, %v1061, 0
      %v1067 = vrot.slane %v1063, 4
      %v1068 = vrot.slane %v1064, 4
      %1069 = vrot.lane.b32.xlu0 %v1067, 127
      %v1070 = vpop.permute.xlu0 %1069
      %1071 = vrot.lane.b32.xlu0 %v1068, 127
      %v1072 = vpop.permute.xlu0 %1071
      %v1073 = vsel %vm278, %v1070, %v1072
      %1074 = vrot.lane.b32.xlu0 %v1063, 126
      %v1075 = vpop.permute.xlu0 %1074
      %1076 = vrot.lane.b32.xlu0 %v1064, 126
      %v1077 = vpop.permute.xlu0 %1076
      %v1078 = vsel %vm284, %v1075, %v1077
      %1079 = vrot.lane.b32.xlu0 %v1067, 118
      %v1080 = vpop.permute.xlu0 %1079
      %1081 = vrot.lane.b32.xlu0 %v1068, 118
      %v1082 = vpop.permute.xlu0 %1081
      %v1083 = vsel %vm290, %v1080, %v1082
      %1084 = vrot.lane.b32.xlu0 %v1063, 117
      %v1085 = vpop.permute.xlu0 %1084
      %1086 = vrot.lane.b32.xlu0 %v1064, 117
      %v1087 = vpop.permute.xlu0 %1086
      %v1088 = vsel %vm296, %v1085, %v1087
      %1089 = vrot.lane.b32.xlu0 %v1067, 116
      %v1090 = vpop.permute.xlu0 %1089
      %1091 = vrot.lane.b32.xlu0 %v1068, 116
      %v1092 = vpop.permute.xlu0 %1091
      %v1093 = vsel %vm302, %v1090, %v1092
      %1094 = vrot.lane.b32.xlu0 %v1063, 108
      %v1095 = vpop.permute.xlu0 %1094
      %1096 = vrot.lane.b32.xlu0 %v1064, 108
      %v1097 = vpop.permute.xlu0 %1096
      %v1098 = vsel %vm308, %v1095, %v1097
      %1099 = vrot.lane.b32.xlu0 %v1067, 107
      %v1100 = vpop.permute.xlu0 %1099
      %1101 = vrot.lane.b32.xlu0 %v1068, 107
      %v1102 = vpop.permute.xlu0 %1101
      %v1103 = vsel %vm314, %v1100, %v1102
      %1104 = vrot.lane.b32.xlu0 %v1063, 106
      %v1105 = vpop.permute.xlu0 %1104
      %1106 = vrot.lane.b32.xlu0 %v1064, 106
      %v1107 = vpop.permute.xlu0 %1106
      %v1108 = vsel %vm320, %v1105, %v1107
      %v1110 = vsel %vm239, %v1063, %v1073
      %v1114 = vsel %vm239, %v1078, %v1083
      %v1118 = vsel %vm239, %v1088, %v1093
      %v1122 = vsel %vm239, %v1098, %v1103
      %v1124 = vld [vmem:[%s2] sm:$0xf]
      %v1125 = vld [vmem:[%s413] sm:$0xf]
      %v1127 = vsel %vm415, %v1125, 0
      %1129 = vmatpush.bf16.msra.mxu0 0
      %1130 = vmatpush.bf16.msra.mxu0 0
      %1131 = vmatpush.bf16.msra.mxu0 0
      %1132 = vmatpush.bf16.msra.mxu0 %v1022
      %1133 = vmatpush.bf16.msra.mxu0 %v981
      %1134 = vmatpush.bf16.msra.mxu0 %v977
      %1135 = vmatpush.bf16.msra.mxu0 %v973
      %1136 = vmatpush.bf16.msra.mxu0 %v969
      %1137 = vmatmul.bf16.gmra.mxu0 %v1127
      %v1138 = vpop.f32.mrf.mxu0
      %v1139 = vadd.f32 0.0, %v1138
      %v1140 = vpop.f32.mrf.mxu0
      %1141 = vdwg.mxu0
      %v1143 = vsel %vm415, %v1124, 0
      %1145 = vmatpush.bf16.msra.mxu0 0
      %1146 = vmatpush.bf16.msra.mxu0 0
      %1147 = vmatpush.bf16.msra.mxu0 0
      %1148 = vmatpush.bf16.msra.mxu0 %v881
      %1149 = vmatpush.bf16.msra.mxu0 %v840
      %1150 = vmatpush.bf16.msra.mxu0 %v836
      %1151 = vmatpush.bf16.msra.mxu0 %v832
      %1152 = vmatpush.bf16.msra.mxu0 %v828
      %1153 = vmatmul.bf16.gmra.mxu0 %v1143
      %v1154 = vpop.f32.mrf.mxu0
      %v1155 = vadd.f32 %v1139, %v1154
      %v1156 = vpop.f32.mrf.mxu0
      %1157 = vdwg.mxu0
      %v1158 = vld [vmem:[%s453] sm:$0xf]
      %v1160 = vsel %vm415, %v1158, 0
      %v1163 = vsel %vm239, %v1108, 0
      %1165 = vmatpush.bf16.msra.mxu0 0
      %1166 = vmatpush.bf16.msra.mxu0 0
      %1167 = vmatpush.bf16.msra.mxu0 0
      %1168 = vmatpush.bf16.msra.mxu0 %v1163
      %1169 = vmatpush.bf16.msra.mxu0 %v1122
      %1170 = vmatpush.bf16.msra.mxu0 %v1118
      %1171 = vmatpush.bf16.msra.mxu0 %v1114
      %1172 = vmatpush.bf16.msra.mxu0 %v1110
      %1173 = vmatmul.bf16.gmra.mxu0 %v1160
      %v1174 = vpop.f32.mrf.mxu0
      %v1175 = vadd.f32 0.0, %v1174
      %v1176 = vpop.f32.mrf.mxu0
      %1177 = vdwg.mxu0
      %v1178 = vadd.f32 %v1155, %v1175
      %v1179 = vmul.f32 %v1178, %v257
      %1180 = vadd.xlane.f32.xlu0 %v1179
      %v1181 = vpop.xlane.xlu0 %1180
      %v1182 = vadd.f32 %v1041, %v1181
      %v1183 = vmul.f32 %v1179, %v1178
      %1184 = vadd.xlane.f32.xlu0 %v1183
      %v1185 = vpop.xlane.xlu0 %1184
      %v1186 = vadd.f32 %v1045, %v1185
      %v1187 = vpack.c.bf16 %v1178, %v1178
      %s1188 = scalar_lea.vmem %s231, 20
      %1189 = vst [vmem:[%s1188] sm:$0xf] %v1187
      %s1190 = scalar_lea.vmem %s226, 28
      %v1191 = vld [vmem:[%s1190] sm:$0xf]
      %v1192 = vunpack.c.l.bf16 %v1191
      %v1193 = vsub.f32 %v1192, %v247
      %v1194 = vmul.f32 %v1193, %v252
      %v1195 = vmax.f32 %v1194, 0.0
      %v1196 = vmul.f32 %v1195, %v257
      %v1197 = vpack.c.bf16 %v1196, %v1196
      %v1199 = vunpack.c.l.b16 %v1197
      %v1200 = vpack.c.b16 %v1199, %v1199
      %1201 = vrot.lane.b32.xlu0 %v1200, 11
      %v1202 = vpop.permute.xlu0 %1201
      %v1204 = vsel %vm266, 0, %v1202
      %v1205 = vsel %vm266, %v1202, 0
      %v1208 = vrot.slane %v1204, 4
      %v1209 = vrot.slane %v1205, 4
      %1210 = vrot.lane.b32.xlu0 %v1208, 127
      %v1211 = vpop.permute.xlu0 %1210
      %1212 = vrot.lane.b32.xlu0 %v1209, 127
      %v1213 = vpop.permute.xlu0 %1212
      %v1214 = vsel %vm278, %v1211, %v1213
      %1215 = vrot.lane.b32.xlu0 %v1204, 126
      %v1216 = vpop.permute.xlu0 %1215
      %1217 = vrot.lane.b32.xlu0 %v1205, 126
      %v1218 = vpop.permute.xlu0 %1217
      %v1219 = vsel %vm284, %v1216, %v1218
      %1220 = vrot.lane.b32.xlu0 %v1208, 118
      %v1221 = vpop.permute.xlu0 %1220
      %1222 = vrot.lane.b32.xlu0 %v1209, 118
      %v1223 = vpop.permute.xlu0 %1222
      %v1224 = vsel %vm290, %v1221, %v1223
      %1225 = vrot.lane.b32.xlu0 %v1204, 117
      %v1226 = vpop.permute.xlu0 %1225
      %1227 = vrot.lane.b32.xlu0 %v1205, 117
      %v1228 = vpop.permute.xlu0 %1227
      %v1229 = vsel %vm296, %v1226, %v1228
      %1230 = vrot.lane.b32.xlu0 %v1208, 116
      %v1231 = vpop.permute.xlu0 %1230
      %1232 = vrot.lane.b32.xlu0 %v1209, 116
      %v1233 = vpop.permute.xlu0 %1232
      %v1234 = vsel %vm302, %v1231, %v1233
      %1235 = vrot.lane.b32.xlu0 %v1204, 108
      %v1236 = vpop.permute.xlu0 %1235
      %1237 = vrot.lane.b32.xlu0 %v1205, 108
      %v1238 = vpop.permute.xlu0 %1237
      %v1239 = vsel %vm308, %v1236, %v1238
      %1240 = vrot.lane.b32.xlu0 %v1208, 107
      %v1241 = vpop.permute.xlu0 %1240
      %1242 = vrot.lane.b32.xlu0 %v1209, 107
      %v1243 = vpop.permute.xlu0 %1242
      %v1244 = vsel %vm314, %v1241, %v1243
      %1245 = vrot.lane.b32.xlu0 %v1204, 106
      %v1246 = vpop.permute.xlu0 %1245
      %1247 = vrot.lane.b32.xlu0 %v1205, 106
      %v1248 = vpop.permute.xlu0 %1247
      %v1249 = vsel %vm320, %v1246, %v1248
      %v1251 = vsel %vm239, %v1204, %v1214
      %v1255 = vsel %vm239, %v1219, %v1224
      %v1259 = vsel %vm239, %v1229, %v1234
      %v1263 = vsel %vm239, %v1239, %v1244
      %v1265 = vld [vmem:[%s2] sm:$0xf]
      %v1266 = vld [vmem:[%s413] sm:$0xf]
      %v1268 = vsel %vm415, %v1266, 0
      %1270 = vmatpush.bf16.msra.mxu0 0
      %1271 = vmatpush.bf16.msra.mxu0 0
      %1272 = vmatpush.bf16.msra.mxu0 0
      %1273 = vmatpush.bf16.msra.mxu0 %v1163
      %1274 = vmatpush.bf16.msra.mxu0 %v1122
      %1275 = vmatpush.bf16.msra.mxu0 %v1118
      %1276 = vmatpush.bf16.msra.mxu0 %v1114
      %1277 = vmatpush.bf16.msra.mxu0 %v1110
      %1278 = vmatmul.bf16.gmra.mxu0 %v1268
      %v1279 = vpop.f32.mrf.mxu0
      %v1280 = vadd.f32 0.0, %v1279
      %v1281 = vpop.f32.mrf.mxu0
      %1282 = vdwg.mxu0
      %v1284 = vsel %vm415, %v1265, 0
      %1286 = vmatpush.bf16.msra.mxu0 0
      %1287 = vmatpush.bf16.msra.mxu0 0
      %1288 = vmatpush.bf16.msra.mxu0 0
      %1289 = vmatpush.bf16.msra.mxu0 %v1022
      %1290 = vmatpush.bf16.msra.mxu0 %v981
      %1291 = vmatpush.bf16.msra.mxu0 %v977
      %1292 = vmatpush.bf16.msra.mxu0 %v973
      %1293 = vmatpush.bf16.msra.mxu0 %v969
      %1294 = vmatmul.bf16.gmra.mxu0 %v1284
      %v1295 = vpop.f32.mrf.mxu0
      %v1296 = vadd.f32 %v1280, %v1295
      %v1297 = vpop.f32.mrf.mxu0
      %1298 = vdwg.mxu0
      %v1299 = vld [vmem:[%s453] sm:$0xf]
      %v1301 = vsel %vm415, %v1299, 0
      %v1304 = vsel %vm239, %v1249, 0
      %1306 = vmatpush.bf16.msra.mxu0 0
      %1307 = vmatpush.bf16.msra.mxu0 0
      %1308 = vmatpush.bf16.msra.mxu0 0
      %1309 = vmatpush.bf16.msra.mxu0 %v1304
      %1310 = vmatpush.bf16.msra.mxu0 %v1263
      %1311 = vmatpush.bf16.msra.mxu0 %v1259
      %1312 = vmatpush.bf16.msra.mxu0 %v1255
      %1313 = vmatpush.bf16.msra.mxu0 %v1251
      %1314 = vmatmul.bf16.gmra.mxu0 %v1301
      %v1315 = vpop.f32.mrf.mxu0
      %v1316 = vadd.f32 0.0, %v1315
      %v1317 = vpop.f32.mrf.mxu0
      %1318 = vdwg.mxu0
      %v1319 = vadd.f32 %v1296, %v1316
      %v1320 = vmul.f32 %v1319, %v257
      %1321 = vadd.xlane.f32.xlu0 %v1320
      %v1322 = vpop.xlane.xlu0 %1321
      %v1323 = vadd.f32 %v1182, %v1322
      %v1324 = vmul.f32 %v1320, %v1319
      %1325 = vadd.xlane.f32.xlu0 %v1324
      %v1326 = vpop.xlane.xlu0 %1325
      %v1327 = vadd.f32 %v1186, %v1326
      %v1328 = vpack.c.bf16 %v1319, %v1319
      %s1329 = scalar_lea.vmem %s231, 24
      %1330 = vst [vmem:[%s1329] sm:$0xf] %v1328
      %v1331 = vld [vmem:[%s2] sm:$0xf]
      %v1332 = vld [vmem:[%s413] sm:$0xf]
      %v1334 = vsel %vm415, %v1332, 0
      %1336 = vmatpush.bf16.msra.mxu0 0
      %1337 = vmatpush.bf16.msra.mxu0 0
      %1338 = vmatpush.bf16.msra.mxu0 0
      %1339 = vmatpush.bf16.msra.mxu0 %v1304
      %1340 = vmatpush.bf16.msra.mxu0 %v1263
      %1341 = vmatpush.bf16.msra.mxu0 %v1259
      %1342 = vmatpush.bf16.msra.mxu0 %v1255
      %1343 = vmatpush.bf16.msra.mxu0 %v1251
      %1344 = vmatmul.bf16.gmra.mxu0 %v1334
      %v1345 = vpop.f32.mrf.mxu0
      %v1346 = vadd.f32 0.0, %v1345
      %v1347 = vpop.f32.mrf.mxu0
      %1348 = vdwg.mxu0
      %v1350 = vsel %vm415, %v1331, 0
      %1352 = vmatpush.bf16.msra.mxu0 0
      %1353 = vmatpush.bf16.msra.mxu0 0
      %1354 = vmatpush.bf16.msra.mxu0 0
      %1355 = vmatpush.bf16.msra.mxu0 %v1163
      %1356 = vmatpush.bf16.msra.mxu0 %v1122
      %1357 = vmatpush.bf16.msra.mxu0 %v1118
      %1358 = vmatpush.bf16.msra.mxu0 %v1114
      %1359 = vmatpush.bf16.msra.mxu0 %v1110
      %1360 = vmatmul.bf16.gmra.mxu0 %v1350
      %v1361 = vpop.f32.mrf.mxu0
      %v1362 = vadd.f32 %v1346, %v1361
      %v1363 = vpop.f32.mrf.mxu0
      %1364 = vdwg.mxu0
      %v1365 = vld [vmem:[%s453] sm:$0xf]
      %v1367 = vsel %vm415, %v1365, 0
      %1369 = vmatpush.bf16.msra.mxu0 0
      %1370 = vmatpush.bf16.msra.mxu0 0
      %1371 = vmatpush.bf16.msra.mxu0 0
      %1372 = vmatpush.bf16.msra.mxu0 %v438
      %1373 = vmatpush.bf16.msra.mxu0 0
      %1374 = vmatpush.bf16.msra.mxu0 0
      %1375 = vmatpush.bf16.msra.mxu0 0
      %1376 = vmatpush.bf16.msra.mxu0 0
      %1377 = vmatmul.bf16.gmra.mxu0 %v1367
      %v1378 = vpop.f32.mrf.mxu0
      %v1379 = vadd.f32 0.0, %v1378
      %v1380 = vpop.f32.mrf.mxu0
      %1381 = vdwg.mxu0
      %v1382 = vadd.f32 %v1362, %v1379
      %v1383 = vmul.f32 %v1382, %v257
      %1384 = vadd.xlane.f32.xlu0 %v1383
      %v1385 = vpop.xlane.xlu0 %1384
      %v1386 = vadd.f32 %v1323, %v1385
      %v1387 = vmul.f32 %v1383, %v1382
      %1388 = vadd.xlane.f32.xlu0 %v1387
      %v1389 = vpop.xlane.xlu0 %1388
      %v1390 = vadd.f32 %v1327, %v1389
      %v1391 = vpack.c.bf16 %v1382, %v1382
      %s1392 = scalar_lea.vmem %s231, 28
      %1393 = vst [vmem:[%s1392] sm:$0xf] %v1391
      %vm1394 = vcmask 7168
      %v1395 = vsel %vm1394, %v1386, %v1390
      %vm1396 = vcmask 15360
      %1397 = vst.msk [vmem:[%s235] sm:$0xff] %vm1396, %v1395
      %p1398 = scmp.lt.s32.totalorder %s17, 1
      %s1399 = scalar_select %p1398, %s17, 1
      %s1400 = smul.addr %s1399, 8
      %s1401 = smul.addr %s1400, 4
      %s1402 = scalar_lea.vmem %s4, %s1401
      %p1403 = scmp.lt.s32.totalorder %s17, 1
      %s1404 = scalar_select %p1403, %s17, 1
      %s1405 = smul.addr %s1404, 8
      %s1406 = scalar_lea.vmem %s5, %s1405
      // Predicated region
      $region37: #{unit_cell_double_conv.3} parent=35 // pred_check
        %p1407 = pneg %p124
      $region38: #{unit_cell_double_conv.3} parent=35 // pred_check_branch
        %1409 = sbr.rel (%p1407) target = $region40
      $region39: #{unit_cell_double_conv.3} parent=35 // pred_region
        _
      $region40: #{unit_cell_double_conv.3} parent=35 // pred_fallthru
        _
      // Predicated region
      $region41: #{unit_cell_double_conv.3} parent=35 // pred_check
        %p1410 = pneg %p150
      $region42: #{unit_cell_double_conv.3} parent=35 // pred_check_branch
        %1412 = sbr.rel (%p1410) target = $region44
      $region43: #{unit_cell_double_conv.3} parent=35 // pred_region
        _
      $region44: #{unit_cell_double_conv.3} parent=35 // pred_fallthru
        _
    $region36: #{unit_cell_double_conv.3} parent=5 // pred_fallthru
      _
    %p1413 = scmp.le.s32.totalorder 2, %s12
    // Predicated region
    $region45: #{unit_cell_double_conv.3} parent=5 // pred_check
      %p1414 = pneg %p1413
    $region46: #{unit_cell_double_conv.3} parent=5 // pred_check_branch
      %1416 = sbr.rel (%p1414) target = $region48
    $region47: #{unit_cell_double_conv.3} parent=5 // pred_region
      %s1417 = ssub.s32 %s12, 2
      // Predicated region
      $region49: #{unit_cell_double_conv.3} parent=47 // pred_check
        %p1418 = pneg %p130
      $region50: #{unit_cell_double_conv.3} parent=47 // pred_check_branch
        %1420 = sbr.rel (%p1418) target = $region52
      $region51: #{unit_cell_double_conv.3} parent=47 // pred_region
        %p1421 = scmp.lt.s32.totalorder %s18, 1
        %s1422 = scalar_select %p1421, %s18, 1
        %s1423 = smul.addr %s1422, 8
        %s1424 = smul.addr %s1423, 4
        %s1425 = scalar_lea.vmem %s4, %s1424
      $region52: #{unit_cell_double_conv.3} parent=47 // pred_fallthru
        _
      // Predicated region
      $region53: #{unit_cell_double_conv.3} parent=47 // pred_check
        %p1426 = pneg %p156
      $region54: #{unit_cell_double_conv.3} parent=47 // pred_check_branch
        %1428 = sbr.rel (%p1426) target = $region56
      $region55: #{unit_cell_double_conv.3} parent=47 // pred_region
        %p1429 = scmp.lt.s32.totalorder %s18, 1
        %s1430 = scalar_select %p1429, %s18, 1
        %s1431 = smul.addr %s1430, 8
        %s1432 = scalar_lea.vmem %s5, %s1431
      $region56: #{unit_cell_double_conv.3} parent=47 // pred_fallthru
        _
    $region48: #{unit_cell_double_conv.3} parent=5 // pred_fallthru
      _
  $region6: #{unit_cell_double_conv.3} parent=0 // loop_footer
    %s16 = sadd.s32 1, %s12
  $region7: #{unit_cell_double_conv.3} parent=0 // loop_footer_branch
    %11 = sbr.rel target = $region3
  $region8: #{unit_cell_double_conv.3} parent=0 // loop_exit
    _

// kernel: unit_cell_double_conv.2
$region0: #{unit_cell_double_conv.2}
  #allocation0 [shape = 'u32[]', space=smem, size = 0x4, offset = 0x4, fixed_abs, tag = 'smem constant byte address 0x4 - core index']
  #allocation1 [shape = 'u32[72,128]{1,0:T(1,128)}', space=vmem, size = 0x9000, scoped, tag = 'internal scratch']
  %s0 = inlined_call_operand.vmem [shape: bf16[2,8,4,128], index: 0, kind: input, shape index: {}]
  %s1 = inlined_call_operand.vmem [shape: f32[4,2], index: 1, kind: input, shape index: {}]
  %s2 = inlined_call_operand.vmem [shape: bf16[3,8,36], index: 2, kind: input, shape index: {}]
  %s3 = inlined_call_operand.vmem [shape: f32[1,128], index: 3, kind: input, shape index: {}]
  %s4 = inlined_call_operand.vmem [shape: bf16[2,8,8,128], index: 4, kind: output, shape index: {0}]
  %s5 = inlined_call_operand.vmem [shape: f32[2,8,2], index: 5, kind: output, shape index: {1}]
  %6 = xla_tuple %s4, %s5
  %s7 = sld [smem:[#allocation0]]
  $region57: #{unit_cell_double_conv.2} parent=0
    _
  %s9 = ssub.s32 1, %s7
  %s10 = scalar_select 0, %s9, %s7
  loop: start=0, step=1, limit=4
  $region2: #{unit_cell_double_conv.2} parent=0 // loop_pre_header
    _
  $region3: #{unit_cell_double_conv.2} parent=0 // loop_header
    %s12 = sphi 0, %s16
    %p13 = scmp.ge.s32.totalorder %s12, 4
    %s22 = sphi 0, %s24
    %s25 = sphi 0, %s22
    %s26 = sphi 0, %s25
    %s42 = sphi 0, %s26
    %s46 = sphi 0, %s46
    %s48 = sphi 0, %s46
    %s49 = sphi 0, %s48
    %s63 = sphi 0, %s49
    %s67 = sphi 0, %s67
    %s69 = sphi 0, %s67
    %s70 = sphi 0, %s69
    %s84 = sphi 0, %s70
    %s88 = sphi 0, %s88
    %s90 = sphi 0, %s88
    %s91 = sphi 0, %s90
    %s105 = sphi 0, %s91
    %s111 = sphi 0, %s113
    %s114 = sphi 0, %s111
    %s115 = sphi 0, %s114
    %s131 = sphi 0, %s115
    %s137 = sphi 0, %s139
    %s140 = sphi 0, %s137
    %s141 = sphi 0, %s140
    %s157 = sphi 0, %s141
  $region4: #{unit_cell_double_conv.2} parent=0 // loop_header_branch
    %15 = sbr.rel (%p13) target = $region8
  $region5: #{unit_cell_double_conv.2} parent=0 // loop_body
    %s17 = ssub.s32 %s12, 1
    %s18 = ssub.s32 %s12, 2
    %s19 = sadd.s32 %s12, 1
    %s20 = ssub.s32 %s12, %s19
    %p21 = scmp.eq.s32.totalorder %s20, 0
    %s23 = sadd.s32 %s22, 1
    %s24 = scalar_select %p21, %s22, %s23
    %p27 = pneg %p21
    %p28 = scmp.eq.s32.totalorder %s12, 1
    %p29 = por %p27, %p28
    %p30 = scmp.ne.s32.totalorder %s22, %s25
    %p31 = scmp.eq.s32.totalorder %s12, 0
    %p32 = por %p30, %p31
    %p33 = scmp.ne.s32.totalorder %s22, %s25
    %p34 = scmp.eq.s32.totalorder %s17, 1
    %p35 = por %p33, %p34
    %p36 = scmp.ne.s32.totalorder %s25, %s26
    %p37 = scmp.eq.s32.totalorder %s17, 0
    %p38 = por %p36, %p37
    %p39 = scmp.ne.s32.totalorder %s25, %s26
    %p40 = scmp.eq.s32.totalorder %s18, 1
    %p41 = por %p39, %p40
    %p43 = scmp.ne.s32.totalorder %s26, %s42
    %p44 = scmp.eq.s32.totalorder %s18, 0
    %p45 = por %p43, %p44
    %s47 = sadd.s32 %s46, 1
    %p50 = scmp.eq.s32.totalorder %s12, 1
    %p51 = scmp.ne.s32.totalorder %s46, %s48
    %p52 = scmp.eq.s32.totalorder %s12, 0
    %p53 = por %p51, %p52
    %p54 = scmp.ne.s32.totalorder %s46, %s48
    %p55 = scmp.eq.s32.totalorder %s17, 1
    %p56 = por %p54, %p55
    %p57 = scmp.ne.s32.totalorder %s48, %s49
    %p58 = scmp.eq.s32.totalorder %s17, 0
    %p59 = por %p57, %p58
    %p60 = scmp.ne.s32.totalorder %s48, %s49
    %p61 = scmp.eq.s32.totalorder %s18, 1
    %p62 = por %p60, %p61
    %p64 = scmp.ne.s32.totalorder %s49, %s63
    %p65 = scmp.eq.s32.totalorder %s18, 0
    %p66 = por %p64, %p65
    %s68 = sadd.s32 %s67, 1
    %p71 = scmp.eq.s32.totalorder %s12, 1
    %p72 = scmp.ne.s32.totalorder %s67, %s69
    %p73 = scmp.eq.s32.totalorder %s12, 0
    %p74 = por %p72, %p73
    %p75 = scmp.ne.s32.totalorder %s67, %s69
    %p76 = scmp.eq.s32.totalorder %s17, 1
    %p77 = por %p75, %p76
    %p78 = scmp.ne.s32.totalorder %s69, %s70
    %p79 = scmp.eq.s32.totalorder %s17, 0
    %p80 = por %p78, %p79
    %p81 = scmp.ne.s32.totalorder %s69, %s70
    %p82 = scmp.eq.s32.totalorder %s18, 1
    %p83 = por %p81, %p82
    %p85 = scmp.ne.s32.totalorder %s70, %s84
    %p86 = scmp.eq.s32.totalorder %s18, 0
    %p87 = por %p85, %p86
    %s89 = sadd.s32 %s88, 1
    %p92 = scmp.eq.s32.totalorder %s12, 1
    %p93 = scmp.ne.s32.totalorder %s88, %s90
    %p94 = scmp.eq.s32.totalorder %s12, 0
    %p95 = por %p93, %p94
    %p96 = scmp.ne.s32.totalorder %s88, %s90
    %p97 = scmp.eq.s32.totalorder %s17, 1
    %p98 = por %p96, %p97
    %p99 = scmp.ne.s32.totalorder %s90, %s91
    %p100 = scmp.eq.s32.totalorder %s17, 0
    %p101 = por %p99, %p100
    %p102 = scmp.ne.s32.totalorder %s90, %s91
    %p103 = scmp.eq.s32.totalorder %s18, 1
    %p104 = por %p102, %p103
    %p106 = scmp.ne.s32.totalorder %s91, %s105
    %p107 = scmp.eq.s32.totalorder %s18, 0
    %p108 = por %p106, %p107
    %s109 = ssub.s32 %s12, %s19
    %p110 = scmp.eq.s32.totalorder %s109, 0
    %s112 = sadd.s32 %s111, 1
    %s113 = scalar_select %p110, %s111, %s112
    %p116 = pneg %p110
    %p117 = scmp.eq.s32.totalorder %s12, 1
    %p118 = por %p116, %p117
    %p119 = scmp.ne.s32.totalorder %s111, %s114
    %p120 = scmp.eq.s32.totalorder %s12, 0
    %p121 = por %p119, %p120
    %p122 = scmp.ne.s32.totalorder %s111, %s114
    %p123 = scmp.eq.s32.totalorder %s17, 1
    %p124 = por %p122, %p123
    %p125 = scmp.ne.s32.totalorder %s114, %s115
    %p126 = scmp.eq.s32.totalorder %s17, 0
    %p127 = por %p125, %p126
    %p128 = scmp.ne.s32.totalorder %s114, %s115
    %p129 = scmp.eq.s32.totalorder %s18, 1
    %p130 = por %p128, %p129
    %p132 = scmp.ne.s32.totalorder %s115, %s131
    %p133 = scmp.eq.s32.totalorder %s18, 0
    %p134 = por %p132, %p133
    %s135 = ssub.s32 %s12, %s19
    %p136 = scmp.eq.s32.totalorder %s135, 0
    %s138 = sadd.s32 %s137, 1
    %s139 = scalar_select %p136, %s137, %s138
    %p142 = pneg %p136
    %p143 = scmp.eq.s32.totalorder %s12, 1
    %p144 = por %p142, %p143
    %p145 = scmp.ne.s32.totalorder %s137, %s140
    %p146 = scmp.eq.s32.totalorder %s12, 0
    %p147 = por %p145, %p146
    %p148 = scmp.ne.s32.totalorder %s137, %s140
    %p149 = scmp.eq.s32.totalorder %s17, 1
    %p150 = por %p148, %p149
    %p151 = scmp.ne.s32.totalorder %s140, %s141
    %p152 = scmp.eq.s32.totalorder %s17, 0
    %p153 = por %p151, %p152
    %p154 = scmp.ne.s32.totalorder %s140, %s141
    %p155 = scmp.eq.s32.totalorder %s18, 1
    %p156 = por %p154, %p155
    %p158 = scmp.ne.s32.totalorder %s141, %s157
    %p159 = scmp.eq.s32.totalorder %s18, 0
    %p160 = por %p158, %p159
    %p161 = scmp.le.s32.totalorder 1, %s12
    %p162 = scmp.lt.s32.totalorder %s12, 3
    %p163 = pnand %p161, %p162
    %p164 = pneg %p163
    // Predicated region
    $region9: #{unit_cell_double_conv.2} parent=5 // pred_check
      _
    $region10: #{unit_cell_double_conv.2} parent=5 // pred_check_branch
      %166 = sbr.rel (%p163) target = $region12
    $region11: #{unit_cell_double_conv.2} parent=5 // pred_region
      %s167 = ssub.s32 %s12, 1
      // Predicated region
      $region13: #{unit_cell_double_conv.2} parent=11 // pred_check
        %p168 = pneg %p59
      $region14: #{unit_cell_double_conv.2} parent=11 // pred_check_branch
        %170 = sbr.rel (%p168) target = $region16
      $region15: #{unit_cell_double_conv.2} parent=11 // pred_region
        _
      $region16: #{unit_cell_double_conv.2} parent=11 // pred_fallthru
        _
      // Predicated region
      $region17: #{unit_cell_double_conv.2} parent=11 // pred_check
        %p171 = pneg %p80
      $region18: #{unit_cell_double_conv.2} parent=11 // pred_check_branch
        %173 = sbr.rel (%p171) target = $region20
      $region19: #{unit_cell_double_conv.2} parent=11 // pred_region
        _
      $region20: #{unit_cell_double_conv.2} parent=11 // pred_fallthru
        _
      // Predicated region
      $region21: #{unit_cell_double_conv.2} parent=11 // pred_check
        %p174 = pneg %p101
      $region22: #{unit_cell_double_conv.2} parent=11 // pred_check_branch
        %176 = sbr.rel (%p174) target = $region24
      $region23: #{unit_cell_double_conv.2} parent=11 // pred_region
        _
      $region24: #{unit_cell_double_conv.2} parent=11 // pred_fallthru
        _
    $region12: #{unit_cell_double_conv.2} parent=5 // pred_fallthru
      _
    %p177 = scmp.lt.s32.totalorder %s12, 2
    // Predicated region
    $region25: #{unit_cell_double_conv.2} parent=5 // pred_check
      %p178 = pneg %p177
    $region26: #{unit_cell_double_conv.2} parent=5 // pred_check_branch
      %180 = sbr.rel (%p178) target = $region28
    $region27: #{unit_cell_double_conv.2} parent=5 // pred_region
      // Predicated region
      $region29: #{unit_cell_double_conv.2} parent=27 // pred_check
        %p181 = pneg %p32
      $region30: #{unit_cell_double_conv.2} parent=27 // pred_check_branch
        %183 = sbr.rel (%p181) target = $region32
      $region31: #{unit_cell_double_conv.2} parent=27 // pred_region
        %p184 = scmp.lt.s32.totalorder %s12, 1
        %s185 = scalar_select %p184, %s12, 1
        %s186 = smul.addr %s185, 8
        %s187 = smul.addr %s186, 2
        %s188 = scalar_lea.vmem %s0, %s187
      $region32: #{unit_cell_double_conv.2} parent=27 // pred_fallthru
        _
    $region28: #{unit_cell_double_conv.2} parent=5 // pred_fallthru
      _
    %p189 = scmp.le.s32.totalorder 1, %s12
    %p190 = scmp.lt.s32.totalorder %s12, 3
    %p191 = pnand %p189, %p190
    %p192 = pneg %p191
    // Predicated region
    $region33: #{unit_cell_double_conv.2} parent=5 // pred_check
      _
    $region34: #{unit_cell_double_conv.2} parent=5 // pred_check_branch
      %194 = sbr.rel (%p191) target = $region36
    $region35: #{unit_cell_double_conv.2} parent=5 // pred_region
      %s195 = ssub.s32 %s12, 1
      %p196 = scmp.lt.s32.totalorder %s17, 1
      %s197 = scalar_select %p196, %s17, 1
      %s198 = smul.addr %s197, 8
      %s199 = smul.addr %s198, 2
      %s200 = scalar_lea.vmem %s0, %s199
      %p201 = pneg %p38
      %p202 = pneg %p35
      %p203 = pneg %p59
      %p204 = pneg %p56
      %p205 = pneg %p80
      %p206 = pneg %p77
      %p207 = pneg %p101
      %p208 = pneg %p98
      %p209 = pneg %p127
      %p210 = pneg %p124
      %p211 = scmp.lt.s32.totalorder %s17, 1
      %s212 = scalar_select %p211, %s17, 1
      %s213 = smul.addr %s212, 8
      %s214 = smul.addr %s213, 4
      %s215 = scalar_lea.vmem %s4, %s214
      %p216 = pneg %p153
      %p217 = pneg %p150
      %p218 = scmp.lt.s32.totalorder %s17, 1
      %s219 = scalar_select %p218, %s17, 1
      %s220 = smul.addr %s219, 8
      %s221 = scalar_lea.vmem %s5, %s220
      %p222 = scmp.lt.s32.totalorder %s17, 1
      %s223 = scalar_select %p222, %s17, 1
      %s224 = smul.addr %s223, 8
      %s225 = smul.addr %s224, 2
      %s226 = scalar_lea.vmem %s0, %s225
      %p227 = scmp.lt.s32.totalorder %s17, 1
      %s228 = scalar_select %p227, %s17, 1
      %s229 = smul.addr %s228, 8
      %s230 = smul.addr %s229, 4
      %s231 = scalar_lea.vmem %s4, %s230
      %p232 = scmp.lt.s32.totalorder %s17, 1
      %s233 = scalar_select %p232, %s17, 1
      %s234 = smul.addr %s233, 8
      %s235 = scalar_lea.vmem %s5, %s234
      %v237 = vld [vmem:[%s3] sm:$0x1]
      %v238 = vld [vmem:[%s1] sm:$0xf]
      %vm239 = vcmask 1041408
      %vm241 = vcmask 1043456
      %v242 = vsel %vm241, 0, 0
      %vm243 = vcmask 1045504
      %v244 = vsel %vm243, %v242, 0
      %v246 = vld [vmem:[%s226] sm:$0x3]
      %v247 = vunpack.c.l.bf16 %v246
      %249 = vset.pattern.permute.xlu0 0
      %250 = vperm.xlu0 %249, %v238
      %v251 = vpop.permute.xlu0 %250
      %v253 = vsub.f32 %v247, %v251
      %254 = vset.pattern.permute.xlu0 1
      %255 = vperm.xlu0 %254, %v238
      %v256 = vpop.permute.xlu0 %255
      %v258 = vmul.f32 %v253, %v256
      %v260 = vperm.slane %v237, 0
      %v262 = vmul.f32 %v258, %v260
      %v263 = vpack.c.bf16 %v262, %v262
      %v265 = vunpack.c.l.b16 %v263
      %v266 = vpack.c.b16 %v265, %v265
      %267 = vrot.lane.b32.xlu0 %v266, 11
      %v268 = vpop.permute.xlu0 %267
      %vm269 = vcmask 89088
      %v271 = vsel %vm269, 0, %v268
      %v272 = vsel %vm269, %v268, 0
      %v275 = vrot.slane %v271, 6
      %v276 = vrot.slane %v272, 6
      %277 = vrot.lane.b32.xlu0 %v275, 127
      %v278 = vpop.permute.xlu0 %277
      %279 = vrot.lane.b32.xlu0 %v276, 127
      %v280 = vpop.permute.xlu0 %279
      %vm281 = vcmask 1039360
      %v282 = vsel %vm281, %v278, %v280
      %v283 = vrot.slane %v271, 4
      %v284 = vrot.slane %v272, 4
      %285 = vrot.lane.b32.xlu0 %v283, 126
      %v286 = vpop.permute.xlu0 %285
      %287 = vrot.lane.b32.xlu0 %v284, 126
      %v288 = vpop.permute.xlu0 %287
      %vm289 = vcmask 1031168
      %v290 = vsel %vm289, %v286, %v288
      %v291 = vrot.slane %v271, 2
      %v292 = vrot.slane %v272, 2
      %293 = vrot.lane.b32.xlu0 %v291, 118
      %v294 = vpop.permute.xlu0 %293
      %295 = vrot.lane.b32.xlu0 %v292, 118
      %v296 = vpop.permute.xlu0 %295
      %vm297 = vcmask 965632
      %v298 = vsel %vm297, %v294, %v296
      %299 = vrot.lane.b32.xlu0 %v271, 117
      %v300 = vpop.permute.xlu0 %299
      %301 = vrot.lane.b32.xlu0 %v272, 117
      %v302 = vpop.permute.xlu0 %301
      %vm303 = vcmask 957440
      %v304 = vsel %vm303, %v300, %v302
      %305 = vrot.lane.b32.xlu0 %v275, 116
      %v306 = vpop.permute.xlu0 %305
      %307 = vrot.lane.b32.xlu0 %v276, 116
      %v308 = vpop.permute.xlu0 %307
      %vm309 = vcmask 949248
      %v310 = vsel %vm309, %v306, %v308
      %311 = vrot.lane.b32.xlu0 %v283, 108
      %v312 = vpop.permute.xlu0 %311
      %313 = vrot.lane.b32.xlu0 %v284, 108
      %v314 = vpop.permute.xlu0 %313
      %vm315 = vcmask 883712
      %v316 = vsel %vm315, %v312, %v314
      %317 = vrot.lane.b32.xlu0 %v291, 107
      %v318 = vpop.permute.xlu0 %317
      %319 = vrot.lane.b32.xlu0 %v292, 107
      %v320 = vpop.permute.xlu0 %319
      %vm321 = vcmask 875520
      %v322 = vsel %vm321, %v318, %v320
      %323 = vrot.lane.b32.xlu0 %v271, 106
      %v324 = vpop.permute.xlu0 %323
      %325 = vrot.lane.b32.xlu0 %v272, 106
      %v326 = vpop.permute.xlu0 %325
      %vm327 = vcmask 867328
      %v328 = vsel %vm327, %v324, %v326
      %v330 = vsel %vm239, %v271, %v282
      %v332 = vsel %vm241, %v330, %v290
      %v334 = vsel %vm243, %v332, %v298
      %v338 = vsel %vm239, %v304, %v310
      %v340 = vsel %vm241, %v338, %v316
      %v342 = vsel %vm243, %v340, %v322
      %s344 = scalar_lea.vmem %s226, 2
      %v345 = vld [vmem:[%s344] sm:$0x3]
      %v346 = vunpack.c.l.bf16 %v345
      %v347 = vsub.f32 %v346, %v251
      %v348 = vmul.f32 %v347, %v256
      %v349 = vmul.f32 %v348, %v260
      %v350 = vpack.c.bf16 %v349, %v349
      %v352 = vunpack.c.l.b16 %v350
      %v353 = vpack.c.b16 %v352, %v352
      %354 = vrot.lane.b32.xlu0 %v353, 11
      %v355 = vpop.permute.xlu0 %354
      %v357 = vsel %vm269, 0, %v355
      %v358 = vsel %vm269, %v355, 0
      %v361 = vrot.slane %v357, 6
      %v362 = vrot.slane %v358, 6
      %363 = vrot.lane.b32.xlu0 %v361, 127
      %v364 = vpop.permute.xlu0 %363
      %365 = vrot.lane.b32.xlu0 %v362, 127
      %v366 = vpop.permute.xlu0 %365
      %v367 = vsel %vm281, %v364, %v366
      %v368 = vrot.slane %v357, 4
      %v369 = vrot.slane %v358, 4
      %370 = vrot.lane.b32.xlu0 %v368, 126
      %v371 = vpop.permute.xlu0 %370
      %372 = vrot.lane.b32.xlu0 %v369, 126
      %v373 = vpop.permute.xlu0 %372
      %v374 = vsel %vm289, %v371, %v373
      %v375 = vrot.slane %v357, 2
      %v376 = vrot.slane %v358, 2
      %377 = vrot.lane.b32.xlu0 %v375, 118
      %v378 = vpop.permute.xlu0 %377
      %379 = vrot.lane.b32.xlu0 %v376, 118
      %v380 = vpop.permute.xlu0 %379
      %v381 = vsel %vm297, %v378, %v380
      %382 = vrot.lane.b32.xlu0 %v357, 117
      %v383 = vpop.permute.xlu0 %382
      %384 = vrot.lane.b32.xlu0 %v358, 117
      %v385 = vpop.permute.xlu0 %384
      %v386 = vsel %vm303, %v383, %v385
      %387 = vrot.lane.b32.xlu0 %v361, 116
      %v388 = vpop.permute.xlu0 %387
      %389 = vrot.lane.b32.xlu0 %v362, 116
      %v390 = vpop.permute.xlu0 %389
      %v391 = vsel %vm309, %v388, %v390
      %392 = vrot.lane.b32.xlu0 %v368, 108
      %v393 = vpop.permute.xlu0 %392
      %394 = vrot.lane.b32.xlu0 %v369, 108
      %v395 = vpop.permute.xlu0 %394
      %v396 = vsel %vm315, %v393, %v395
      %397 = vrot.lane.b32.xlu0 %v375, 107
      %v398 = vpop.permute.xlu0 %397
      %399 = vrot.lane.b32.xlu0 %v376, 107
      %v400 = vpop.permute.xlu0 %399
      %v401 = vsel %vm321, %v398, %v400
      %402 = vrot.lane.b32.xlu0 %v357, 106
      %v403 = vpop.permute.xlu0 %402
      %404 = vrot.lane.b32.xlu0 %v358, 106
      %v405 = vpop.permute.xlu0 %404
      %v406 = vsel %vm327, %v403, %v405
      %v408 = vsel %vm239, %v357, %v367
      %v410 = vsel %vm241, %v408, %v374
      %v412 = vsel %vm243, %v410, %v381
      %v416 = vsel %vm239, %v386, %v391
      %v418 = vsel %vm241, %v416, %v396
      %v420 = vsel %vm243, %v418, %v401
      %v422 = vld [vmem:[%s2] sm:$0xf]
      %s423 = scalar_lea.vmem %s2, 4
      %v424 = vld [vmem:[%s423] sm:$0xf]
      %vm425 = vcmask 293888
      %v427 = vsel %vm425, %v424, 0
      %v430 = vsel %vm239, %v328, 0
      %432 = vmatpush.bf16.msra.mxu0 0
      %433 = vmatpush.bf16.msra.mxu0 0
      %434 = vmatpush.bf16.msra.mxu0 0
      %435 = vmatpush.bf16.msra.mxu0 0
      %436 = vmatpush.bf16.msra.mxu0 0
      %437 = vmatpush.bf16.msra.mxu0 %v430
      %438 = vmatpush.bf16.msra.mxu0 %v342
      %439 = vmatpush.bf16.msra.mxu0 %v334
      %440 = vmatmul.bf16.gmra.mxu0 %v427
      %v441 = vpop.f32.mrf.mxu0
      %v442 = vadd.f32 0.0, %v441
      %v443 = vpop.f32.mrf.mxu0
      %444 = vdwg.mxu0
      %v446 = vsel %vm425, %v422, 0
      %v448 = vsel %vm239, 0, 0
      %450 = vmatpush.bf16.msra.mxu0 0
      %451 = vmatpush.bf16.msra.mxu0 0
      %452 = vmatpush.bf16.msra.mxu0 0
      %453 = vmatpush.bf16.msra.mxu0 0
      %454 = vmatpush.bf16.msra.mxu0 0
      %455 = vmatpush.bf16.msra.mxu0 %v448
      %456 = vmatpush.bf16.msra.mxu0 %v244
      %457 = vmatpush.bf16.msra.mxu0 %v244
      %458 = vmatmul.bf16.gmra.mxu0 %v446
      %v459 = vpop.f32.mrf.mxu0
      %v460 = vadd.f32 %v442, %v459
      %v461 = vpop.f32.mrf.mxu0
      %462 = vdwg.mxu0
      %s463 = scalar_lea.vmem %s2, 8
      %v464 = vld [vmem:[%s463] sm:$0xf]
      %v466 = vsel %vm425, %v464, 0
      %v469 = vsel %vm239, %v406, 0
      %471 = vmatpush.bf16.msra.mxu0 0
      %472 = vmatpush.bf16.msra.mxu0 0
      %473 = vmatpush.bf16.msra.mxu0 0
      %474 = vmatpush.bf16.msra.mxu0 0
      %475 = vmatpush.bf16.msra.mxu0 0
      %476 = vmatpush.bf16.msra.mxu0 %v469
      %477 = vmatpush.bf16.msra.mxu0 %v420
      %478 = vmatpush.bf16.msra.mxu0 %v412
      %479 = vmatmul.bf16.gmra.mxu0 %v466
      %v480 = vpop.f32.mrf.mxu0
      %v481 = vadd.f32 0.0, %v480
      %v482 = vpop.f32.mrf.mxu0
      %483 = vdwg.mxu0
      %v484 = vadd.f32 %v460, %v481
      %v485 = vmul.f32 %v484, %v260
      %486 = vadd.xlane.f32.xlu0 %v485
      %v487 = vpop.xlane.xlu0 %486
      %v488 = vadd.f32 %v487, 0.0
      %v489 = vmul.f32 %v485, %v484
      %490 = vadd.xlane.f32.xlu0 %v489
      %v491 = vpop.xlane.xlu0 %490
      %v492 = vadd.f32 %v491, 0.0
      %v493 = vpack.c.bf16 %v484, %v484
      %494 = vst [vmem:[%s231] sm:$0xf] %v493
      %s495 = scalar_lea.vmem %s226, 4
      %v496 = vld [vmem:[%s495] sm:$0x3]
      %v497 = vunpack.c.l.bf16 %v496
      %v498 = vsub.f32 %v497, %v251
      %v499 = vmul.f32 %v498, %v256
      %v500 = vmul.f32 %v499, %v260
      %v501 = vpack.c.bf16 %v500, %v500
      %v503 = vunpack.c.l.b16 %v501
      %v504 = vpack.c.b16 %v503, %v503
      %505 = vrot.lane.b32.xlu0 %v504, 11
      %v506 = vpop.permute.xlu0 %505
      %v508 = vsel %vm269, 0, %v506
      %v509 = vsel %vm269, %v506, 0
      %v512 = vrot.slane %v508, 6
      %v513 = vrot.slane %v509, 6
      %514 = vrot.lane.b32.xlu0 %v512, 127
      %v515 = vpop.permute.xlu0 %514
      %516 = vrot.lane.b32.xlu0 %v513, 127
      %v517 = vpop.permute.xlu0 %516
      %v518 = vsel %vm281, %v515, %v517
      %v519 = vrot.slane %v508, 4
      %v520 = vrot.slane %v509, 4
      %521 = vrot.lane.b32.xlu0 %v519, 126
      %v522 = vpop.permute.xlu0 %521
      %523 = vrot.lane.b32.xlu0 %v520, 126
      %v524 = vpop.permute.xlu0 %523
      %v525 = vsel %vm289, %v522, %v524
      %v526 = vrot.slane %v508, 2
      %v527 = vrot.slane %v509, 2
      %528 = vrot.lane.b32.xlu0 %v526, 118
      %v529 = vpop.permute.xlu0 %528
      %530 = vrot.lane.b32.xlu0 %v527, 118
      %v531 = vpop.permute.xlu0 %530
      %v532 = vsel %vm297, %v529, %v531
      %533 = vrot.lane.b32.xlu0 %v508, 117
      %v534 = vpop.permute.xlu0 %533
      %535 = vrot.lane.b32.xlu0 %v509, 117
      %v536 = vpop.permute.xlu0 %535
      %v537 = vsel %vm303, %v534, %v536
      %538 = vrot.lane.b32.xlu0 %v512, 116
      %v539 = vpop.permute.xlu0 %538
      %540 = vrot.lane.b32.xlu0 %v513, 116
      %v541 = vpop.permute.xlu0 %540
      %v542 = vsel %vm309, %v539, %v541
      %543 = vrot.lane.b32.xlu0 %v519, 108
      %v544 = vpop.permute.xlu0 %543
      %545 = vrot.lane.b32.xlu0 %v520, 108
      %v546 = vpop.permute.xlu0 %545
      %v547 = vsel %vm315, %v544, %v546
      %548 = vrot.lane.b32.xlu0 %v526, 107
      %v549 = vpop.permute.xlu0 %548
      %550 = vrot.lane.b32.xlu0 %v527, 107
      %v551 = vpop.permute.xlu0 %550
      %v552 = vsel %vm321, %v549, %v551
      %553 = vrot.lane.b32.xlu0 %v508, 106
      %v554 = vpop.permute.xlu0 %553
      %555 = vrot.lane.b32.xlu0 %v509, 106
      %v556 = vpop.permute.xlu0 %555
      %v557 = vsel %vm327, %v554, %v556
      %v559 = vsel %vm239, %v508, %v518
      %v561 = vsel %vm241, %v559, %v525
      %v563 = vsel %vm243, %v561, %v532
      %v567 = vsel %vm239, %v537, %v542
      %v569 = vsel %vm241, %v567, %v547
      %v571 = vsel %vm243, %v569, %v552
      %v573 = vld [vmem:[%s2] sm:$0xf]
      %v574 = vld [vmem:[%s423] sm:$0xf]
      %v576 = vsel %vm425, %v574, 0
      %578 = vmatpush.bf16.msra.mxu0 0
      %579 = vmatpush.bf16.msra.mxu0 0
      %580 = vmatpush.bf16.msra.mxu0 0
      %581 = vmatpush.bf16.msra.mxu0 0
      %582 = vmatpush.bf16.msra.mxu0 0
      %583 = vmatpush.bf16.msra.mxu0 %v469
      %584 = vmatpush.bf16.msra.mxu0 %v420
      %585 = vmatpush.bf16.msra.mxu0 %v412
      %586 = vmatmul.bf16.gmra.mxu0 %v576
      %v587 = vpop.f32.mrf.mxu0
      %v588 = vadd.f32 0.0, %v587
      %v589 = vpop.f32.mrf.mxu0
      %590 = vdwg.mxu0
      %v592 = vsel %vm425, %v573, 0
      %594 = vmatpush.bf16.msra.mxu0 0
      %595 = vmatpush.bf16.msra.mxu0 0
      %596 = vmatpush.bf16.msra.mxu0 0
      %597 = vmatpush.bf16.msra.mxu0 0
      %598 = vmatpush.bf16.msra.mxu0 0
      %599 = vmatpush.bf16.msra.mxu0 %v430
      %600 = vmatpush.bf16.msra.mxu0 %v342
      %601 = vmatpush.bf16.msra.mxu0 %v334
      %602 = vmatmul.bf16.gmra.mxu0 %v592
      %v603 = vpop.f32.mrf.mxu0
      %v604 = vadd.f32 %v588, %v603
      %v605 = vpop.f32.mrf.mxu0
      %606 = vdwg.mxu0
      %v607 = vld [vmem:[%s463] sm:$0xf]
      %v609 = vsel %vm425, %v607, 0
      %v612 = vsel %vm239, %v557, 0
      %614 = vmatpush.bf16.msra.mxu0 0
      %615 = vmatpush.bf16.msra.mxu0 0
      %616 = vmatpush.bf16.msra.mxu0 0
      %617 = vmatpush.bf16.msra.mxu0 0
      %618 = vmatpush.bf16.msra.mxu0 0
      %619 = vmatpush.bf16.msra.mxu0 %v612
      %620 = vmatpush.bf16.msra.mxu0 %v571
      %621 = vmatpush.bf16.msra.mxu0 %v563
      %622 = vmatmul.bf16.gmra.mxu0 %v609
      %v623 = vpop.f32.mrf.mxu0
      %v624 = vadd.f32 0.0, %v623
      %v625 = vpop.f32.mrf.mxu0
      %626 = vdwg.mxu0
      %v627 = vadd.f32 %v604, %v624
      %v628 = vmul.f32 %v627, %v260
      %629 = vadd.xlane.f32.xlu0 %v628
      %v630 = vpop.xlane.xlu0 %629
      %v631 = vadd.f32 %v488, %v630
      %v632 = vmul.f32 %v628, %v627
      %633 = vadd.xlane.f32.xlu0 %v632
      %v634 = vpop.xlane.xlu0 %633
      %v635 = vadd.f32 %v492, %v634
      %v636 = vpack.c.bf16 %v627, %v627
      %s637 = scalar_lea.vmem %s231, 4
      %638 = vst [vmem:[%s637] sm:$0xf] %v636
      %s639 = scalar_lea.vmem %s226, 6
      %v640 = vld [vmem:[%s639] sm:$0x3]
      %v641 = vunpack.c.l.bf16 %v640
      %v642 = vsub.f32 %v641, %v251
      %v643 = vmul.f32 %v642, %v256
      %v644 = vmul.f32 %v643, %v260
      %v645 = vpack.c.bf16 %v644, %v644
      %v647 = vunpack.c.l.b16 %v645
      %v648 = vpack.c.b16 %v647, %v647
      %649 = vrot.lane.b32.xlu0 %v648, 11
      %v650 = vpop.permute.xlu0 %649
      %v652 = vsel %vm269, 0, %v650
      %v653 = vsel %vm269, %v650, 0
      %v656 = vrot.slane %v652, 6
      %v657 = vrot.slane %v653, 6
      %658 = vrot.lane.b32.xlu0 %v656, 127
      %v659 = vpop.permute.xlu0 %658
      %660 = vrot.lane.b32.xlu0 %v657, 127
      %v661 = vpop.permute.xlu0 %660
      %v662 = vsel %vm281, %v659, %v661
      %v663 = vrot.slane %v652, 4
      %v664 = vrot.slane %v653, 4
      %665 = vrot.lane.b32.xlu0 %v663, 126
      %v666 = vpop.permute.xlu0 %665
      %667 = vrot.lane.b32.xlu0 %v664, 126
      %v668 = vpop.permute.xlu0 %667
      %v669 = vsel %vm289, %v666, %v668
      %v670 = vrot.slane %v652, 2
      %v671 = vrot.slane %v653, 2
      %672 = vrot.lane.b32.xlu0 %v670, 118
      %v673 = vpop.permute.xlu0 %672
      %674 = vrot.lane.b32.xlu0 %v671, 118
      %v675 = vpop.permute.xlu0 %674
      %v676 = vsel %vm297, %v673, %v675
      %677 = vrot.lane.b32.xlu0 %v652, 117
      %v678 = vpop.permute.xlu0 %677
      %679 = vrot.lane.b32.xlu0 %v653, 117
      %v680 = vpop.permute.xlu0 %679
      %v681 = vsel %vm303, %v678, %v680
      %682 = vrot.lane.b32.xlu0 %v656, 116
      %v683 = vpop.permute.xlu0 %682
      %684 = vrot.lane.b32.xlu0 %v657, 116
      %v685 = vpop.permute.xlu0 %684
      %v686 = vsel %vm309, %v683, %v685
      %687 = vrot.lane.b32.xlu0 %v663, 108
      %v688 = vpop.permute.xlu0 %687
      %689 = vrot.lane.b32.xlu0 %v664, 108
      %v690 = vpop.permute.xlu0 %689
      %v691 = vsel %vm315, %v688, %v690
      %692 = vrot.lane.b32.xlu0 %v670, 107
      %v693 = vpop.permute.xlu0 %692
      %694 = vrot.lane.b32.xlu0 %v671, 107
      %v695 = vpop.permute.xlu0 %694
      %v696 = vsel %vm321, %v693, %v695
      %697 = vrot.lane.b32.xlu0 %v652, 106
      %v698 = vpop.permute.xlu0 %697
      %699 = vrot.lane.b32.xlu0 %v653, 106
      %v700 = vpop.permute.xlu0 %699
      %v701 = vsel %vm327, %v698, %v700
      %v703 = vsel %vm239, %v652, %v662
      %v705 = vsel %vm241, %v703, %v669
      %v707 = vsel %vm243, %v705, %v676
      %v711 = vsel %vm239, %v681, %v686
      %v713 = vsel %vm241, %v711, %v691
      %v715 = vsel %vm243, %v713, %v696
      %v717 = vld [vmem:[%s2] sm:$0xf]
      %v718 = vld [vmem:[%s423] sm:$0xf]
      %v720 = vsel %vm425, %v718, 0
      %722 = vmatpush.bf16.msra.mxu0 0
      %723 = vmatpush.bf16.msra.mxu0 0
      %724 = vmatpush.bf16.msra.mxu0 0
      %725 = vmatpush.bf16.msra.mxu0 0
      %726 = vmatpush.bf16.msra.mxu0 0
      %727 = vmatpush.bf16.msra.mxu0 %v612
      %728 = vmatpush.bf16.msra.mxu0 %v571
      %729 = vmatpush.bf16.msra.mxu0 %v563
      %730 = vmatmul.bf16.gmra.mxu0 %v720
      %v731 = vpop.f32.mrf.mxu0
      %v732 = vadd.f32 0.0, %v731
      %v733 = vpop.f32.mrf.mxu0
      %734 = vdwg.mxu0
      %v736 = vsel %vm425, %v717, 0
      %738 = vmatpush.bf16.msra.mxu0 0
      %739 = vmatpush.bf16.msra.mxu0 0
      %740 = vmatpush.bf16.msra.mxu0 0
      %741 = vmatpush.bf16.msra.mxu0 0
      %742 = vmatpush.bf16.msra.mxu0 0
      %743 = vmatpush.bf16.msra.mxu0 %v469
      %744 = vmatpush.bf16.msra.mxu0 %v420
      %745 = vmatpush.bf16.msra.mxu0 %v412
      %746 = vmatmul.bf16.gmra.mxu0 %v736
      %v747 = vpop.f32.mrf.mxu0
      %v748 = vadd.f32 %v732, %v747
      %v749 = vpop.f32.mrf.mxu0
      %750 = vdwg.mxu0
      %v751 = vld [vmem:[%s463] sm:$0xf]
      %v753 = vsel %vm425, %v751, 0
      %v756 = vsel %vm239, %v701, 0
      %758 = vmatpush.bf16.msra.mxu0 0
      %759 = vmatpush.bf16.msra.mxu0 0
      %760 = vmatpush.bf16.msra.mxu0 0
      %761 = vmatpush.bf16.msra.mxu0 0
      %762 = vmatpush.bf16.msra.mxu0 0
      %763 = vmatpush.bf16.msra.mxu0 %v756
      %764 = vmatpush.bf16.msra.mxu0 %v715
      %765 = vmatpush.bf16.msra.mxu0 %v707
      %766 = vmatmul.bf16.gmra.mxu0 %v753
      %v767 = vpop.f32.mrf.mxu0
      %v768 = vadd.f32 0.0, %v767
      %v769 = vpop.f32.mrf.mxu0
      %770 = vdwg.mxu0
      %v771 = vadd.f32 %v748, %v768
      %v772 = vmul.f32 %v771, %v260
      %773 = vadd.xlane.f32.xlu0 %v772
      %v774 = vpop.xlane.xlu0 %773
      %v775 = vadd.f32 %v631, %v774
      %v776 = vmul.f32 %v772, %v771
      %777 = vadd.xlane.f32.xlu0 %v776
      %v778 = vpop.xlane.xlu0 %777
      %v779 = vadd.f32 %v635, %v778
      %v780 = vpack.c.bf16 %v771, %v771
      %s781 = scalar_lea.vmem %s231, 8
      %782 = vst [vmem:[%s781] sm:$0xf] %v780
      %s783 = scalar_lea.vmem %s226, 8
      %v784 = vld [vmem:[%s783] sm:$0x3]
      %v785 = vunpack.c.l.bf16 %v784
      %v786 = vsub.f32 %v785, %v251
      %v787 = vmul.f32 %v786, %v256
      %v788 = vmul.f32 %v787, %v260
      %v789 = vpack.c.bf16 %v788, %v788
      %v791 = vunpack.c.l.b16 %v789
      %v792 = vpack.c.b16 %v791, %v791
      %793 = vrot.lane.b32.xlu0 %v792, 11
      %v794 = vpop.permute.xlu0 %793
      %v796 = vsel %vm269, 0, %v794
      %v797 = vsel %vm269, %v794, 0
      %v800 = vrot.slane %v796, 6
      %v801 = vrot.slane %v797, 6
      %802 = vrot.lane.b32.xlu0 %v800, 127
      %v803 = vpop.permute.xlu0 %802
      %804 = vrot.lane.b32.xlu0 %v801, 127
      %v805 = vpop.permute.xlu0 %804
      %v806 = vsel %vm281, %v803, %v805
      %v807 = vrot.slane %v796, 4
      %v808 = vrot.slane %v797, 4
      %809 = vrot.lane.b32.xlu0 %v807, 126
      %v810 = vpop.permute.xlu0 %809
      %811 = vrot.lane.b32.xlu0 %v808, 126
      %v812 = vpop.permute.xlu0 %811
      %v813 = vsel %vm289, %v810, %v812
      %v814 = vrot.slane %v796, 2
      %v815 = vrot.slane %v797, 2
      %816 = vrot.lane.b32.xlu0 %v814, 118
      %v817 = vpop.permute.xlu0 %816
      %818 = vrot.lane.b32.xlu0 %v815, 118
      %v819 = vpop.permute.xlu0 %818
      %v820 = vsel %vm297, %v817, %v819
      %821 = vrot.lane.b32.xlu0 %v796, 117
      %v822 = vpop.permute.xlu0 %821
      %823 = vrot.lane.b32.xlu0 %v797, 117
      %v824 = vpop.permute.xlu0 %823
      %v825 = vsel %vm303, %v822, %v824
      %826 = vrot.lane.b32.xlu0 %v800, 116
      %v827 = vpop.permute.xlu0 %826
      %828 = vrot.lane.b32.xlu0 %v801, 116
      %v829 = vpop.permute.xlu0 %828
      %v830 = vsel %vm309, %v827, %v829
      %831 = vrot.lane.b32.xlu0 %v807, 108
      %v832 = vpop.permute.xlu0 %831
      %833 = vrot.lane.b32.xlu0 %v808, 108
      %v834 = vpop.permute.xlu0 %833
      %v835 = vsel %vm315, %v832, %v834
      %836 = vrot.lane.b32.xlu0 %v814, 107
      %v837 = vpop.permute.xlu0 %836
      %838 = vrot.lane.b32.xlu0 %v815, 107
      %v839 = vpop.permute.xlu0 %838
      %v840 = vsel %vm321, %v837, %v839
      %841 = vrot.lane.b32.xlu0 %v796, 106
      %v842 = vpop.permute.xlu0 %841
      %843 = vrot.lane.b32.xlu0 %v797, 106
      %v844 = vpop.permute.xlu0 %843
      %v845 = vsel %vm327, %v842, %v844
      %v847 = vsel %vm239, %v796, %v806
      %v849 = vsel %vm241, %v847, %v813
      %v851 = vsel %vm243, %v849, %v820
      %v855 = vsel %vm239, %v825, %v830
      %v857 = vsel %vm241, %v855, %v835
      %v859 = vsel %vm243, %v857, %v840
      %v861 = vld [vmem:[%s2] sm:$0xf]
      %v862 = vld [vmem:[%s423] sm:$0xf]
      %v864 = vsel %vm425, %v862, 0
      %866 = vmatpush.bf16.msra.mxu0 0
      %867 = vmatpush.bf16.msra.mxu0 0
      %868 = vmatpush.bf16.msra.mxu0 0
      %869 = vmatpush.bf16.msra.mxu0 0
      %870 = vmatpush.bf16.msra.mxu0 0
      %871 = vmatpush.bf16.msra.mxu0 %v756
      %872 = vmatpush.bf16.msra.mxu0 %v715
      %873 = vmatpush.bf16.msra.mxu0 %v707
      %874 = vmatmul.bf16.gmra.mxu0 %v864
      %v875 = vpop.f32.mrf.mxu0
      %v876 = vadd.f32 0.0, %v875
      %v877 = vpop.f32.mrf.mxu0
      %878 = vdwg.mxu0
      %v880 = vsel %vm425, %v861, 0
      %882 = vmatpush.bf16.msra.mxu0 0
      %883 = vmatpush.bf16.msra.mxu0 0
      %884 = vmatpush.bf16.msra.mxu0 0
      %885 = vmatpush.bf16.msra.mxu0 0
      %886 = vmatpush.bf16.msra.mxu0 0
      %887 = vmatpush.bf16.msra.mxu0 %v612
      %888 = vmatpush.bf16.msra.mxu0 %v571
      %889 = vmatpush.bf16.msra.mxu0 %v563
      %890 = vmatmul.bf16.gmra.mxu0 %v880
      %v891 = vpop.f32.mrf.mxu0
      %v892 = vadd.f32 %v876, %v891
      %v893 = vpop.f32.mrf.mxu0
      %894 = vdwg.mxu0
      %v895 = vld [vmem:[%s463] sm:$0xf]
      %v897 = vsel %vm425, %v895, 0
      %v900 = vsel %vm239, %v845, 0
      %902 = vmatpush.bf16.msra.mxu0 0
      %903 = vmatpush.bf16.msra.mxu0 0
      %904 = vmatpush.bf16.msra.mxu0 0
      %905 = vmatpush.bf16.msra.mxu0 0
      %906 = vmatpush.bf16.msra.mxu0 0
      %907 = vmatpush.bf16.msra.mxu0 %v900
      %908 = vmatpush.bf16.msra.mxu0 %v859
      %909 = vmatpush.bf16.msra.mxu0 %v851
      %910 = vmatmul.bf16.gmra.mxu0 %v897
      %v911 = vpop.f32.mrf.mxu0
      %v912 = vadd.f32 0.0, %v911
      %v913 = vpop.f32.mrf.mxu0
      %914 = vdwg.mxu0
      %v915 = vadd.f32 %v892, %v912
      %v916 = vmul.f32 %v915, %v260
      %917 = vadd.xlane.f32.xlu0 %v916
      %v918 = vpop.xlane.xlu0 %917
      %v919 = vadd.f32 %v775, %v918
      %v920 = vmul.f32 %v916, %v915
      %921 = vadd.xlane.f32.xlu0 %v920
      %v922 = vpop.xlane.xlu0 %921
      %v923 = vadd.f32 %v779, %v922
      %v924 = vpack.c.bf16 %v915, %v915
      %s925 = scalar_lea.vmem %s231, 12
      %926 = vst [vmem:[%s925] sm:$0xf] %v924
      %s927 = scalar_lea.vmem %s226, 10
      %v928 = vld [vmem:[%s927] sm:$0x3]
      %v929 = vunpack.c.l.bf16 %v928
      %v930 = vsub.f32 %v929, %v251
      %v931 = vmul.f32 %v930, %v256
      %v932 = vmul.f32 %v931, %v260
      %v933 = vpack.c.bf16 %v932, %v932
      %v935 = vunpack.c.l.b16 %v933
      %v936 = vpack.c.b16 %v935, %v935
      %937 = vrot.lane.b32.xlu0 %v936, 11
      %v938 = vpop.permute.xlu0 %937
      %v940 = vsel %vm269, 0, %v938
      %v941 = vsel %vm269, %v938, 0
      %v944 = vrot.slane %v940, 6
      %v945 = vrot.slane %v941, 6
      %946 = vrot.lane.b32.xlu0 %v944, 127
      %v947 = vpop.permute.xlu0 %946
      %948 = vrot.lane.b32.xlu0 %v945, 127
      %v949 = vpop.permute.xlu0 %948
      %v950 = vsel %vm281, %v947, %v949
      %v951 = vrot.slane %v940, 4
      %v952 = vrot.slane %v941, 4
      %953 = vrot.lane.b32.xlu0 %v951, 126
      %v954 = vpop.permute.xlu0 %953
      %955 = vrot.lane.b32.xlu0 %v952, 126
      %v956 = vpop.permute.xlu0 %955
      %v957 = vsel %vm289, %v954, %v956
      %v958 = vrot.slane %v940, 2
      %v959 = vrot.slane %v941, 2
      %960 = vrot.lane.b32.xlu0 %v958, 118
      %v961 = vpop.permute.xlu0 %960
      %962 = vrot.lane.b32.xlu0 %v959, 118
      %v963 = vpop.permute.xlu0 %962
      %v964 = vsel %vm297, %v961, %v963
      %965 = vrot.lane.b32.xlu0 %v940, 117
      %v966 = vpop.permute.xlu0 %965
      %967 = vrot.lane.b32.xlu0 %v941, 117
      %v968 = vpop.permute.xlu0 %967
      %v969 = vsel %vm303, %v966, %v968
      %970 = vrot.lane.b32.xlu0 %v944, 116
      %v971 = vpop.permute.xlu0 %970
      %972 = vrot.lane.b32.xlu0 %v945, 116
      %v973 = vpop.permute.xlu0 %972
      %v974 = vsel %vm309, %v971, %v973
      %975 = vrot.lane.b32.xlu0 %v951, 108
      %v976 = vpop.permute.xlu0 %975
      %977 = vrot.lane.b32.xlu0 %v952, 108
      %v978 = vpop.permute.xlu0 %977
      %v979 = vsel %vm315, %v976, %v978
      %980 = vrot.lane.b32.xlu0 %v958, 107
      %v981 = vpop.permute.xlu0 %980
      %982 = vrot.lane.b32.xlu0 %v959, 107
      %v983 = vpop.permute.xlu0 %982
      %v984 = vsel %vm321, %v981, %v983
      %985 = vrot.lane.b32.xlu0 %v940, 106
      %v986 = vpop.permute.xlu0 %985
      %987 = vrot.lane.b32.xlu0 %v941, 106
      %v988 = vpop.permute.xlu0 %987
      %v989 = vsel %vm327, %v986, %v988
      %v991 = vsel %vm239, %v940, %v950
      %v993 = vsel %vm241, %v991, %v957
      %v995 = vsel %vm243, %v993, %v964
      %v999 = vsel %vm239, %v969, %v974
      %v1001 = vsel %vm241, %v999, %v979
      %v1003 = vsel %vm243, %v1001, %v984
      %v1005 = vld [vmem:[%s2] sm:$0xf]
      %v1006 = vld [vmem:[%s423] sm:$0xf]
      %v1008 = vsel %vm425, %v1006, 0
      %1010 = vmatpush.bf16.msra.mxu0 0
      %1011 = vmatpush.bf16.msra.mxu0 0
      %1012 = vmatpush.bf16.msra.mxu0 0
      %1013 = vmatpush.bf16.msra.mxu0 0
      %1014 = vmatpush.bf16.msra.mxu0 0
      %1015 = vmatpush.bf16.msra.mxu0 %v900
      %1016 = vmatpush.bf16.msra.mxu0 %v859
      %1017 = vmatpush.bf16.msra.mxu0 %v851
      %1018 = vmatmul.bf16.gmra.mxu0 %v1008
      %v1019 = vpop.f32.mrf.mxu0
      %v1020 = vadd.f32 0.0, %v1019
      %v1021 = vpop.f32.mrf.mxu0
      %1022 = vdwg.mxu0
      %v1024 = vsel %vm425, %v1005, 0
      %1026 = vmatpush.bf16.msra.mxu0 0
      %1027 = vmatpush.bf16.msra.mxu0 0
      %1028 = vmatpush.bf16.msra.mxu0 0
      %1029 = vmatpush.bf16.msra.mxu0 0
      %1030 = vmatpush.bf16.msra.mxu0 0
      %1031 = vmatpush.bf16.msra.mxu0 %v756
      %1032 = vmatpush.bf16.msra.mxu0 %v715
      %1033 = vmatpush.bf16.msra.mxu0 %v707
      %1034 = vmatmul.bf16.gmra.mxu0 %v1024
      %v1035 = vpop.f32.mrf.mxu0
      %v1036 = vadd.f32 %v1020, %v1035
      %v1037 = vpop.f32.mrf.mxu0
      %1038 = vdwg.mxu0
      %v1039 = vld [vmem:[%s463] sm:$0xf]
      %v1041 = vsel %vm425, %v1039, 0
      %v1044 = vsel %vm239, %v989, 0
      %1046 = vmatpush.bf16.msra.mxu0 0
      %1047 = vmatpush.bf16.msra.mxu0 0
      %1048 = vmatpush.bf16.msra.mxu0 0
      %1049 = vmatpush.bf16.msra.mxu0 0
      %1050 = vmatpush.bf16.msra.mxu0 0
      %1051 = vmatpush.bf16.msra.mxu0 %v1044
      %1052 = vmatpush.bf16.msra.mxu0 %v1003
      %1053 = vmatpush.bf16.msra.mxu0 %v995
      %1054 = vmatmul.bf16.gmra.mxu0 %v1041
      %v1055 = vpop.f32.mrf.mxu0
      %v1056 = vadd.f32 0.0, %v1055
      %v1057 = vpop.f32.mrf.mxu0
      %1058 = vdwg.mxu0
      %v1059 = vadd.f32 %v1036, %v1056
      %v1060 = vmul.f32 %v1059, %v260
      %1061 = vadd.xlane.f32.xlu0 %v1060
      %v1062 = vpop.xlane.xlu0 %1061
      %v1063 = vadd.f32 %v919, %v1062
      %v1064 = vmul.f32 %v1060, %v1059
      %1065 = vadd.xlane.f32.xlu0 %v1064
      %v1066 = vpop.xlane.xlu0 %1065
      %v1067 = vadd.f32 %v923, %v1066
      %v1068 = vpack.c.bf16 %v1059, %v1059
      %s1069 = scalar_lea.vmem %s231, 16
      %1070 = vst [vmem:[%s1069] sm:$0xf] %v1068
      %s1071 = scalar_lea.vmem %s226, 12
      %v1072 = vld [vmem:[%s1071] sm:$0x3]
      %v1073 = vunpack.c.l.bf16 %v1072
      %v1074 = vsub.f32 %v1073, %v251
      %v1075 = vmul.f32 %v1074, %v256
      %v1076 = vmul.f32 %v1075, %v260
      %v1077 = vpack.c.bf16 %v1076, %v1076
      %v1079 = vunpack.c.l.b16 %v1077
      %v1080 = vpack.c.b16 %v1079, %v1079
      %1081 = vrot.lane.b32.xlu0 %v1080, 11
      %v1082 = vpop.permute.xlu0 %1081
      %v1084 = vsel %vm269, 0, %v1082
      %v1085 = vsel %vm269, %v1082, 0
      %v1088 = vrot.slane %v1084, 6
      %v1089 = vrot.slane %v1085, 6
      %1090 = vrot.lane.b32.xlu0 %v1088, 127
      %v1091 = vpop.permute.xlu0 %1090
      %1092 = vrot.lane.b32.xlu0 %v1089, 127
      %v1093 = vpop.permute.xlu0 %1092
      %v1094 = vsel %vm281, %v1091, %v1093
      %v1095 = vrot.slane %v1084, 4
      %v1096 = vrot.slane %v1085, 4
      %1097 = vrot.lane.b32.xlu0 %v1095, 126
      %v1098 = vpop.permute.xlu0 %1097
      %1099 = vrot.lane.b32.xlu0 %v1096, 126
      %v1100 = vpop.permute.xlu0 %1099
      %v1101 = vsel %vm289, %v1098, %v1100
      %v1102 = vrot.slane %v1084, 2
      %v1103 = vrot.slane %v1085, 2
      %1104 = vrot.lane.b32.xlu0 %v1102, 118
      %v1105 = vpop.permute.xlu0 %1104
      %1106 = vrot.lane.b32.xlu0 %v1103, 118
      %v1107 = vpop.permute.xlu0 %1106
      %v1108 = vsel %vm297, %v1105, %v1107
      %1109 = vrot.lane.b32.xlu0 %v1084, 117
      %v1110 = vpop.permute.xlu0 %1109
      %1111 = vrot.lane.b32.xlu0 %v1085, 117
      %v1112 = vpop.permute.xlu0 %1111
      %v1113 = vsel %vm303, %v1110, %v1112
      %1114 = vrot.lane.b32.xlu0 %v1088, 116
      %v1115 = vpop.permute.xlu0 %1114
      %1116 = vrot.lane.b32.xlu0 %v1089, 116
      %v1117 = vpop.permute.xlu0 %1116
      %v1118 = vsel %vm309, %v1115, %v1117
      %1119 = vrot.lane.b32.xlu0 %v1095, 108
      %v1120 = vpop.permute.xlu0 %1119
      %1121 = vrot.lane.b32.xlu0 %v1096, 108
      %v1122 = vpop.permute.xlu0 %1121
      %v1123 = vsel %vm315, %v1120, %v1122
      %1124 = vrot.lane.b32.xlu0 %v1102, 107
      %v1125 = vpop.permute.xlu0 %1124
      %1126 = vrot.lane.b32.xlu0 %v1103, 107
      %v1127 = vpop.permute.xlu0 %1126
      %v1128 = vsel %vm321, %v1125, %v1127
      %1129 = vrot.lane.b32.xlu0 %v1084, 106
      %v1130 = vpop.permute.xlu0 %1129
      %1131 = vrot.lane.b32.xlu0 %v1085, 106
      %v1132 = vpop.permute.xlu0 %1131
      %v1133 = vsel %vm327, %v1130, %v1132
      %v1135 = vsel %vm239, %v1084, %v1094
      %v1137 = vsel %vm241, %v1135, %v1101
      %v1139 = vsel %vm243, %v1137, %v1108
      %v1143 = vsel %vm239, %v1113, %v1118
      %v1145 = vsel %vm241, %v1143, %v1123
      %v1147 = vsel %vm243, %v1145, %v1128
      %v1149 = vld [vmem:[%s2] sm:$0xf]
      %v1150 = vld [vmem:[%s423] sm:$0xf]
      %v1152 = vsel %vm425, %v1150, 0
      %1154 = vmatpush.bf16.msra.mxu0 0
      %1155 = vmatpush.bf16.msra.mxu0 0
      %1156 = vmatpush.bf16.msra.mxu0 0
      %1157 = vmatpush.bf16.msra.mxu0 0
      %1158 = vmatpush.bf16.msra.mxu0 0
      %1159 = vmatpush.bf16.msra.mxu0 %v1044
      %1160 = vmatpush.bf16.msra.mxu0 %v1003
      %1161 = vmatpush.bf16.msra.mxu0 %v995
      %1162 = vmatmul.bf16.gmra.mxu0 %v1152
      %v1163 = vpop.f32.mrf.mxu0
      %v1164 = vadd.f32 0.0, %v1163
      %v1165 = vpop.f32.mrf.mxu0
      %1166 = vdwg.mxu0
      %v1168 = vsel %vm425, %v1149, 0
      %1170 = vmatpush.bf16.msra.mxu0 0
      %1171 = vmatpush.bf16.msra.mxu0 0
      %1172 = vmatpush.bf16.msra.mxu0 0
      %1173 = vmatpush.bf16.msra.mxu0 0
      %1174 = vmatpush.bf16.msra.mxu0 0
      %1175 = vmatpush.bf16.msra.mxu0 %v900
      %1176 = vmatpush.bf16.msra.mxu0 %v859
      %1177 = vmatpush.bf16.msra.mxu0 %v851
      %1178 = vmatmul.bf16.gmra.mxu0 %v1168
      %v1179 = vpop.f32.mrf.mxu0
      %v1180 = vadd.f32 %v1164, %v1179
      %v1181 = vpop.f32.mrf.mxu0
      %1182 = vdwg.mxu0
      %v1183 = vld [vmem:[%s463] sm:$0xf]
      %v1185 = vsel %vm425, %v1183, 0
      %v1188 = vsel %vm239, %v1133, 0
      %1190 = vmatpush.bf16.msra.mxu0 0
      %1191 = vmatpush.bf16.msra.mxu0 0
      %1192 = vmatpush.bf16.msra.mxu0 0
      %1193 = vmatpush.bf16.msra.mxu0 0
      %1194 = vmatpush.bf16.msra.mxu0 0
      %1195 = vmatpush.bf16.msra.mxu0 %v1188
      %1196 = vmatpush.bf16.msra.mxu0 %v1147
      %1197 = vmatpush.bf16.msra.mxu0 %v1139
      %1198 = vmatmul.bf16.gmra.mxu0 %v1185
      %v1199 = vpop.f32.mrf.mxu0
      %v1200 = vadd.f32 0.0, %v1199
      %v1201 = vpop.f32.mrf.mxu0
      %1202 = vdwg.mxu0
      %v1203 = vadd.f32 %v1180, %v1200
      %v1204 = vmul.f32 %v1203, %v260
      %1205 = vadd.xlane.f32.xlu0 %v1204
      %v1206 = vpop.xlane.xlu0 %1205
      %v1207 = vadd.f32 %v1063, %v1206
      %v1208 = vmul.f32 %v1204, %v1203
      %1209 = vadd.xlane.f32.xlu0 %v1208
      %v1210 = vpop.xlane.xlu0 %1209
      %v1211 = vadd.f32 %v1067, %v1210
      %v1212 = vpack.c.bf16 %v1203, %v1203
      %s1213 = scalar_lea.vmem %s231, 20
      %1214 = vst [vmem:[%s1213] sm:$0xf] %v1212
      %s1215 = scalar_lea.vmem %s226, 14
      %v1216 = vld [vmem:[%s1215] sm:$0x3]
      %v1217 = vunpack.c.l.bf16 %v1216
      %v1218 = vsub.f32 %v1217, %v251
      %v1219 = vmul.f32 %v1218, %v256
      %v1220 = vmul.f32 %v1219, %v260
      %v1221 = vpack.c.bf16 %v1220, %v1220
      %v1223 = vunpack.c.l.b16 %v1221
      %v1224 = vpack.c.b16 %v1223, %v1223
      %1225 = vrot.lane.b32.xlu0 %v1224, 11
      %v1226 = vpop.permute.xlu0 %1225
      %v1228 = vsel %vm269, 0, %v1226
      %v1229 = vsel %vm269, %v1226, 0
      %v1232 = vrot.slane %v1228, 6
      %v1233 = vrot.slane %v1229, 6
      %1234 = vrot.lane.b32.xlu0 %v1232, 127
      %v1235 = vpop.permute.xlu0 %1234
      %1236 = vrot.lane.b32.xlu0 %v1233, 127
      %v1237 = vpop.permute.xlu0 %1236
      %v1238 = vsel %vm281, %v1235, %v1237
      %v1239 = vrot.slane %v1228, 4
      %v1240 = vrot.slane %v1229, 4
      %1241 = vrot.lane.b32.xlu0 %v1239, 126
      %v1242 = vpop.permute.xlu0 %1241
      %1243 = vrot.lane.b32.xlu0 %v1240, 126
      %v1244 = vpop.permute.xlu0 %1243
      %v1245 = vsel %vm289, %v1242, %v1244
      %v1246 = vrot.slane %v1228, 2
      %v1247 = vrot.slane %v1229, 2
      %1248 = vrot.lane.b32.xlu0 %v1246, 118
      %v1249 = vpop.permute.xlu0 %1248
      %1250 = vrot.lane.b32.xlu0 %v1247, 118
      %v1251 = vpop.permute.xlu0 %1250
      %v1252 = vsel %vm297, %v1249, %v1251
      %1253 = vrot.lane.b32.xlu0 %v1228, 117
      %v1254 = vpop.permute.xlu0 %1253
      %1255 = vrot.lane.b32.xlu0 %v1229, 117
      %v1256 = vpop.permute.xlu0 %1255
      %v1257 = vsel %vm303, %v1254, %v1256
      %1258 = vrot.lane.b32.xlu0 %v1232, 116
      %v1259 = vpop.permute.xlu0 %1258
      %1260 = vrot.lane.b32.xlu0 %v1233, 116
      %v1261 = vpop.permute.xlu0 %1260
      %v1262 = vsel %vm309, %v1259, %v1261
      %1263 = vrot.lane.b32.xlu0 %v1239, 108
      %v1264 = vpop.permute.xlu0 %1263
      %1265 = vrot.lane.b32.xlu0 %v1240, 108
      %v1266 = vpop.permute.xlu0 %1265
      %v1267 = vsel %vm315, %v1264, %v1266
      %1268 = vrot.lane.b32.xlu0 %v1246, 107
      %v1269 = vpop.permute.xlu0 %1268
      %1270 = vrot.lane.b32.xlu0 %v1247, 107
      %v1271 = vpop.permute.xlu0 %1270
      %v1272 = vsel %vm321, %v1269, %v1271
      %1273 = vrot.lane.b32.xlu0 %v1228, 106
      %v1274 = vpop.permute.xlu0 %1273
      %1275 = vrot.lane.b32.xlu0 %v1229, 106
      %v1276 = vpop.permute.xlu0 %1275
      %v1277 = vsel %vm327, %v1274, %v1276
      %v1279 = vsel %vm239, %v1228, %v1238
      %v1281 = vsel %vm241, %v1279, %v1245
      %v1283 = vsel %vm243, %v1281, %v1252
      %v1287 = vsel %vm239, %v1257, %v1262
      %v1289 = vsel %vm241, %v1287, %v1267
      %v1291 = vsel %vm243, %v1289, %v1272
      %v1293 = vld [vmem:[%s2] sm:$0xf]
      %v1294 = vld [vmem:[%s423] sm:$0xf]
      %v1296 = vsel %vm425, %v1294, 0
      %1298 = vmatpush.bf16.msra.mxu0 0
      %1299 = vmatpush.bf16.msra.mxu0 0
      %1300 = vmatpush.bf16.msra.mxu0 0
      %1301 = vmatpush.bf16.msra.mxu0 0
      %1302 = vmatpush.bf16.msra.mxu0 0
      %1303 = vmatpush.bf16.msra.mxu0 %v1188
      %1304 = vmatpush.bf16.msra.mxu0 %v1147
      %1305 = vmatpush.bf16.msra.mxu0 %v1139
      %1306 = vmatmul.bf16.gmra.mxu0 %v1296
      %v1307 = vpop.f32.mrf.mxu0
      %v1308 = vadd.f32 0.0, %v1307
      %v1309 = vpop.f32.mrf.mxu0
      %1310 = vdwg.mxu0
      %v1312 = vsel %vm425, %v1293, 0
      %1314 = vmatpush.bf16.msra.mxu0 0
      %1315 = vmatpush.bf16.msra.mxu0 0
      %1316 = vmatpush.bf16.msra.mxu0 0
      %1317 = vmatpush.bf16.msra.mxu0 0
      %1318 = vmatpush.bf16.msra.mxu0 0
      %1319 = vmatpush.bf16.msra.mxu0 %v1044
      %1320 = vmatpush.bf16.msra.mxu0 %v1003
      %1321 = vmatpush.bf16.msra.mxu0 %v995
      %1322 = vmatmul.bf16.gmra.mxu0 %v1312
      %v1323 = vpop.f32.mrf.mxu0
      %v1324 = vadd.f32 %v1308, %v1323
      %v1325 = vpop.f32.mrf.mxu0
      %1326 = vdwg.mxu0
      %v1327 = vld [vmem:[%s463] sm:$0xf]
      %v1329 = vsel %vm425, %v1327, 0
      %v1332 = vsel %vm239, %v1277, 0
      %1334 = vmatpush.bf16.msra.mxu0 0
      %1335 = vmatpush.bf16.msra.mxu0 0
      %1336 = vmatpush.bf16.msra.mxu0 0
      %1337 = vmatpush.bf16.msra.mxu0 0
      %1338 = vmatpush.bf16.msra.mxu0 0
      %1339 = vmatpush.bf16.msra.mxu0 %v1332
      %1340 = vmatpush.bf16.msra.mxu0 %v1291
      %1341 = vmatpush.bf16.msra.mxu0 %v1283
      %1342 = vmatmul.bf16.gmra.mxu0 %v1329
      %v1343 = vpop.f32.mrf.mxu0
      %v1344 = vadd.f32 0.0, %v1343
      %v1345 = vpop.f32.mrf.mxu0
      %1346 = vdwg.mxu0
      %v1347 = vadd.f32 %v1324, %v1344
      %v1348 = vmul.f32 %v1347, %v260
      %1349 = vadd.xlane.f32.xlu0 %v1348
      %v1350 = vpop.xlane.xlu0 %1349
      %v1351 = vadd.f32 %v1207, %v1350
      %v1352 = vmul.f32 %v1348, %v1347
      %1353 = vadd.xlane.f32.xlu0 %v1352
      %v1354 = vpop.xlane.xlu0 %1353
      %v1355 = vadd.f32 %v1211, %v1354
      %v1356 = vpack.c.bf16 %v1347, %v1347
      %s1357 = scalar_lea.vmem %s231, 24
      %1358 = vst [vmem:[%s1357] sm:$0xf] %v1356
      %v1359 = vld [vmem:[%s2] sm:$0xf]
      %v1360 = vld [vmem:[%s423] sm:$0xf]
      %v1362 = vsel %vm425, %v1360, 0
      %1364 = vmatpush.bf16.msra.mxu0 0
      %1365 = vmatpush.bf16.msra.mxu0 0
      %1366 = vmatpush.bf16.msra.mxu0 0
      %1367 = vmatpush.bf16.msra.mxu0 0
      %1368 = vmatpush.bf16.msra.mxu0 0
      %1369 = vmatpush.bf16.msra.mxu0 %v1332
      %1370 = vmatpush.bf16.msra.mxu0 %v1291
      %1371 = vmatpush.bf16.msra.mxu0 %v1283
      %1372 = vmatmul.bf16.gmra.mxu0 %v1362
      %v1373 = vpop.f32.mrf.mxu0
      %v1374 = vadd.f32 0.0, %v1373
      %v1375 = vpop.f32.mrf.mxu0
      %1376 = vdwg.mxu0
      %v1378 = vsel %vm425, %v1359, 0
      %1380 = vmatpush.bf16.msra.mxu0 0
      %1381 = vmatpush.bf16.msra.mxu0 0
      %1382 = vmatpush.bf16.msra.mxu0 0
      %1383 = vmatpush.bf16.msra.mxu0 0
      %1384 = vmatpush.bf16.msra.mxu0 0
      %1385 = vmatpush.bf16.msra.mxu0 %v1188
      %1386 = vmatpush.bf16.msra.mxu0 %v1147
      %1387 = vmatpush.bf16.msra.mxu0 %v1139
      %1388 = vmatmul.bf16.gmra.mxu0 %v1378
      %v1389 = vpop.f32.mrf.mxu0
      %v1390 = vadd.f32 %v1374, %v1389
      %v1391 = vpop.f32.mrf.mxu0
      %1392 = vdwg.mxu0
      %v1393 = vld [vmem:[%s463] sm:$0xf]
      %v1395 = vsel %vm425, %v1393, 0
      %1397 = vmatpush.bf16.msra.mxu0 0
      %1398 = vmatpush.bf16.msra.mxu0 0
      %1399 = vmatpush.bf16.msra.mxu0 0
      %1400 = vmatpush.bf16.msra.mxu0 0
      %1401 = vmatpush.bf16.msra.mxu0 0
      %1402 = vmatpush.bf16.msra.mxu0 %v448
      %1403 = vmatpush.bf16.msra.mxu0 %v244
      %1404 = vmatpush.bf16.msra.mxu0 %v244
      %1405 = vmatmul.bf16.gmra.mxu0 %v1395
      %v1406 = vpop.f32.mrf.mxu0
      %v1407 = vadd.f32 0.0, %v1406
      %v1408 = vpop.f32.mrf.mxu0
      %1409 = vdwg.mxu0
      %v1410 = vadd.f32 %v1390, %v1407
      %v1411 = vmul.f32 %v1410, %v260
      %1412 = vadd.xlane.f32.xlu0 %v1411
      %v1413 = vpop.xlane.xlu0 %1412
      %v1414 = vadd.f32 %v1351, %v1413
      %v1415 = vmul.f32 %v1411, %v1410
      %1416 = vadd.xlane.f32.xlu0 %v1415
      %v1417 = vpop.xlane.xlu0 %1416
      %v1418 = vadd.f32 %v1355, %v1417
      %v1419 = vpack.c.bf16 %v1410, %v1410
      %s1420 = scalar_lea.vmem %s231, 28
      %1421 = vst [vmem:[%s1420] sm:$0xf] %v1419
      %vm1422 = vcmask 7168
      %v1423 = vsel %vm1422, %v1414, %v1418
      %vm1424 = vcmask 15360
      %1425 = vst.msk [vmem:[%s235] sm:$0xff] %vm1424, %v1423
      %p1426 = scmp.lt.s32.totalorder %s17, 1
      %s1427 = scalar_select %p1426, %s17, 1
      %s1428 = smul.addr %s1427, 8
      %s1429 = smul.addr %s1428, 4
      %s1430 = scalar_lea.vmem %s4, %s1429
      %p1431 = scmp.lt.s32.totalorder %s17, 1
      %s1432 = scalar_select %p1431, %s17, 1
      %s1433 = smul.addr %s1432, 8
      %s1434 = scalar_lea.vmem %s5, %s1433
      // Predicated region
      $region37: #{unit_cell_double_conv.2} parent=35 // pred_check
        %p1435 = pneg %p124
      $region38: #{unit_cell_double_conv.2} parent=35 // pred_check_branch
        %1437 = sbr.rel (%p1435) target = $region40
      $region39: #{unit_cell_double_conv.2} parent=35 // pred_region
        _
      $region40: #{unit_cell_double_conv.2} parent=35 // pred_fallthru
        _
      // Predicated region
      $region41: #{unit_cell_double_conv.2} parent=35 // pred_check
        %p1438 = pneg %p150
      $region42: #{unit_cell_double_conv.2} parent=35 // pred_check_branch
        %1440 = sbr.rel (%p1438) target = $region44
      $region43: #{unit_cell_double_conv.2} parent=35 // pred_region
        _
      $region44: #{unit_cell_double_conv.2} parent=35 // pred_fallthru
        _
    $region36: #{unit_cell_double_conv.2} parent=5 // pred_fallthru
      _
    %p1441 = scmp.le.s32.totalorder 2, %s12
    // Predicated region
    $region45: #{unit_cell_double_conv.2} parent=5 // pred_check
      %p1442 = pneg %p1441
    $region46: #{unit_cell_double_conv.2} parent=5 // pred_check_branch
      %1444 = sbr.rel (%p1442) target = $region48
    $region47: #{unit_cell_double_conv.2} parent=5 // pred_region
      %s1445 = ssub.s32 %s12, 2
      // Predicated region
      $region49: #{unit_cell_double_conv.2} parent=47 // pred_check
        %p1446 = pneg %p130
      $region50: #{unit_cell_double_conv.2} parent=47 // pred_check_branch
        %1448 = sbr.rel (%p1446) target = $region52
      $region51: #{unit_cell_double_conv.2} parent=47 // pred_region
        %p1449 = scmp.lt.s32.totalorder %s18, 1
        %s1450 = scalar_select %p1449, %s18, 1
        %s1451 = smul.addr %s1450, 8
        %s1452 = smul.addr %s1451, 4
        %s1453 = scalar_lea.vmem %s4, %s1452
      $region52: #{unit_cell_double_conv.2} parent=47 // pred_fallthru
        _
      // Predicated region
      $region53: #{unit_cell_double_conv.2} parent=47 // pred_check
        %p1454 = pneg %p156
      $region54: #{unit_cell_double_conv.2} parent=47 // pred_check_branch
        %1456 = sbr.rel (%p1454) target = $region56
      $region55: #{unit_cell_double_conv.2} parent=47 // pred_region
        %p1457 = scmp.lt.s32.totalorder %s18, 1
        %s1458 = scalar_select %p1457, %s18, 1
        %s1459 = smul.addr %s1458, 8
        %s1460 = scalar_lea.vmem %s5, %s1459
      $region56: #{unit_cell_double_conv.2} parent=47 // pred_fallthru
        _
    $region48: #{unit_cell_double_conv.2} parent=5 // pred_fallthru
      _
  $region6: #{unit_cell_double_conv.2} parent=0 // loop_footer
    %s16 = sadd.s32 1, %s12
  $region7: #{unit_cell_double_conv.2} parent=0 // loop_footer_branch
    %11 = sbr.rel target = $region3
  $region8: #{unit_cell_double_conv.2} parent=0 // loop_exit
    _

</llo_original>
